<compile_context>
chip_gen: v7x
topology: tpu7x:2x2x1
jax: 0.10.0
libtpu: 0.0.40
codegen_flags: <defaults>
</compile_context>

<pallas_src>
import numpy as np
import jax
import jax.numpy as jnp
from jax.experimental import pallas as pl
from jax.experimental.pallas import tpu as pltpu


# ----------------------------- host-side glue ------------------------------- #

def _im2col(x_nhwc, kh, kw):
    """x: (N,H,W,C) -> (N, Ho*Wo, kh*kw*C); patch feature order is (ki, kj, ci)."""
    N, H, W, C = x_nhwc.shape
    Ho, Wo = H - kh + 1, W - kw + 1
    cols = []
    for ki in range(kh):
        for kj in range(kw):
            cols.append(x_nhwc[:, ki:ki + Ho, kj:kj + Wo, :])   # (N,Ho,Wo,C)
    p = jnp.stack(cols, axis=3)                                 # (N,Ho,Wo,kh*kw,C)
    return p.reshape(N, Ho * Wo, kh * kw * C)


# ------------------------------ fused Pallas kernel -------------------------- #

def _fused_cnn_kernel(p1_ref, w1_ref, b1_ref, w2_ref, b2_ref, wfc_ref, bfc_ref,
                      o_ref, f1_ref):
    # p1_ref : (1, 196*Bt, KFp)  conv1 im2col, rows ordered (i, j, sample)
    # w1_ref : (KFp, 16)   b1_ref : (1, 16)
    # w2_ref : (9, 16, 32) per-tap conv2 weights (ci -> co)   b2_ref : (1, 32)
    # wfc_ref: (32, 128) fc weight (only lane 0 used)          bfc_ref: (1, 128)
    # o_ref  : (1, Bt, 128) lane-dense logits (column 0 meaningful)
    # f1_ref : (49*Bt, 16) VMEM scratch for the pooled 7x7x16 map, rows (i', j', sample)
    bt = o_ref.shape[1]                       # samples per grid step (multiple of 8)
    w1 = w1_ref[...]
    b1 = b1_ref[...]

    # ---- conv1 (3x3, 1->16) + relu + maxpool 2x2 : 16x16 -> 14x14 -> 7x7 ----
    # Process one conv1 output-row PAIR (2i, 2i+1) at a time to keep values small.
    for i in range(7):
        rows = p1_ref[0, pl.ds((2 * i) * 14 * bt, 28 * bt), :]          # (28*Bt, KFp)
        h = jnp.dot(rows, w1, preferred_element_type=jnp.float32) + b1
        h = jnp.maximum(h, 0.0)                                          # relu
        v = jnp.maximum(h[:14 * bt, :], h[14 * bt:, :])                  # vertical max
        for j in range(7):                                               # horizontal max
            mx = jnp.maximum(v[(2 * j) * bt:(2 * j + 1) * bt, :],
                             v[(2 * j + 1) * bt:(2 * j + 2) * bt, :])    # (Bt, 16)
            f1_ref[pl.ds((i * 7 + j) * bt, bt), :] = mx

    # ---- conv2 (3x3, 16->32) + relu : 7x7 -> 5x5 ----------------------------
    # Sum over the 9 taps of shifted matmuls; each shifted LHS is gathered from the
    # f1 scratch with contiguous, tile-aligned slices (rows ordered (ii, jj, sample)).
    acc = jnp.zeros((25 * bt, 32), jnp.float32)
    for ki in range(3):
        for kj in range(3):
            parts = [f1_ref[pl.ds(((ii + ki) * 7 + kj) * bt, 5 * bt), :]
                     for ii in range(5)]
            x = jnp.concatenate(parts, axis=0)                           # (25*Bt, 16)
            acc = acc + jnp.dot(x, w2_ref[ki * 3 + kj],
                                preferred_element_type=jnp.float32)
    h2 = jnp.maximum(acc + b2_ref[...], 0.0)                             # (25*Bt, 32)

    # ---- maxpool 2x2 (5x5 -> 2x2, floor) + adaptive avg pool -----------------
    pooled_sum = jnp.zeros((bt, 32), jnp.float32)
    for oi in range(2):
        for oj in range(2):
            c = []
            for a in range(2):
                for pb in range(2):
                    idx = (2 * oi + a) * 5 + (2 * oj + pb)
                    c.append(h2[idx * bt:(idx + 1) * bt, :])
            pooled_sum = pooled_sum + jnp.maximum(jnp.maximum(c[0], c[1]),
                                                  jnp.maximum(c[2], c[3]))
    avg = pooled_sum * 0.25                                              # (Bt, 32)

    # ---- fc (zero-padded to 128 output lanes) + sigmoid ----------------------
    logit = jnp.dot(avg, wfc_ref[...], preferred_element_type=jnp.float32) + bfc_ref[...]
    o_ref[0] = 1.0 / (1.0 + jnp.exp(-logit))                             # (Bt, 128)


# ------------------------------ pallas_call wrapper -------------------------- #

def your_cnn_forward(x_nchw, params, block_batch=64):
    w1, b1, w2, b2, wfc, bfc = params
    N = x_nchw.shape[0]
    KFp = 16                                           # 3*3*1 = 9 patch features, padded to 16

    Bt = min(block_batch, ((N + 7) // 8) * 8)          # batch tile, multiple of 8
    Bt = max(8, (Bt // 8) * 8)
    G = (N + Bt - 1) // Bt
    Np = G * Bt

    x = jnp.transpose(x_nchw, (0, 2, 3, 1)).astype(jnp.float32)          # NHWC
    if Np != N:
        x = jnp.pad(x, ((0, Np - N), (0, 0), (0, 0), (0, 0)))

    p1 = _im2col(x, 3, 3)                              # (Np, 196, 9)
    p1 = jnp.pad(p1, ((0, 0), (0, 0), (0, KFp - 9)))   # (Np, 196, KFp)
    # rows inside each batch tile ordered (spatial position, sample)
    p1 = p1.reshape(G, Bt, 196, KFp).transpose(0, 2, 1, 3).reshape(G, 196 * Bt, KFp)

    w1f = jnp.transpose(w1, (2, 3, 1, 0)).reshape(9, 16)                 # (ki,kj,ci) x co
    w1f = jnp.pad(w1f, ((0, KFp - 9), (0, 0)))                           # (KFp, 16)
    w2f = jnp.transpose(w2, (2, 3, 1, 0)).reshape(9, 16, 32)             # (tap, ci, co)
    wfcp = jnp.pad(wfc.T, ((0, 0), (0, 127)))                            # (32, 128)
    bfcp = jnp.pad(bfc.reshape(1, 1), ((0, 0), (0, 127)))                # (1, 128)

    out = pl.pallas_call(
        _fused_cnn_kernel,
        out_shape=jax.ShapeDtypeStruct((G, Bt, 128), jnp.float32),
        grid=(G,),
        in_specs=[
            pl.BlockSpec((1, 196 * Bt, KFp), lambda g: (g, 0, 0)),
            pl.BlockSpec((KFp, 16), lambda g: (0, 0)),
            pl.BlockSpec((1, 16), lambda g: (0, 0)),
            pl.BlockSpec((9, 16, 32), lambda g: (0, 0, 0)),
            pl.BlockSpec((1, 32), lambda g: (0, 0)),
            pl.BlockSpec((32, 128), lambda g: (0, 0)),
            pl.BlockSpec((1, 128), lambda g: (0, 0)),
        ],
        out_specs=pl.BlockSpec((1, Bt, 128), lambda g: (g, 0, 0)),
        scratch_shapes=[pltpu.VMEM((49 * Bt, 16), jnp.float32)],
        compiler_params=pltpu.CompilerParams(dimension_semantics=("parallel",)),
    )(p1, w1f, b1.reshape(1, 16), w2f, b2.reshape(1, 32), wfcp, bfcp)

    return out.reshape(Np, 128)[:N, 0:1]               # (N, 1)


# ------------------------------ pure-JAX reference --------------------------- #

def ref_forward(x_nchw, params):
    w1, b1, w2, b2, wfc, bfc = params

    def conv(x, w, b):
        y = jax.lax.conv_general_dilated(
            x, w, (1, 1), 'VALID', dimension_numbers=('NCHW', 'OIHW', 'NCHW'))
        return y + b.reshape(1, -1, 1, 1)

    def maxpool(x):
        return jax.lax.reduce_window(x, -jnp.inf, jax.lax.max,
                                     (1, 1, 2, 2), (1, 1, 2, 2), 'VALID')

    h = maxpool(jax.nn.relu(conv(x_nchw, w1, b1)))
    h = maxpool(jax.nn.relu(conv(h, w2, b2)))
    g = jnp.mean(h, axis=(2, 3))                                # (N, 32)
    return jax.nn.sigmoid(g @ wfc.T + bfc)                      # (N, 1)


# ---------------------------------- main ------------------------------------ #

if __name__ == "__main__":
    key = jax.random.PRNGKey(0)
    kx, k1, k2, k3, k4, k5, k6 = jax.random.split(key, 7)

    # deterministic synthetic parameters (PyTorch layouts)
    w1 = jax.random.normal(k1, (16, 1, 3, 3), jnp.float32) * 0.1
    b1 = jax.random.normal(k2, (16,), jnp.float32) * 0.1
    w2 = jax.random.normal(k3, (32, 16, 3, 3), jnp.float32) * 0.1
    b2 = jax.random.normal(k4, (32,), jnp.float32) * 0.1
    wfc = jax.random.normal(k5, (1, 32), jnp.float32) * 0.1
    bfc = jax.random.normal(k6, (1,), jnp.float32) * 0.1
    params = (w1, b1, w2, b2, wfc, bfc)

    # input: NCHW, batch=2, 1 channel, 16x16
    x = jax.random.normal(kx, (2, 1, 16, 16), jnp.float32)

    out = your_cnn_forward(x, params)
    out = jax.block_until_ready(out)

    ref = jax.block_until_ready(ref_forward(x, params))
    np.testing.assert_allclose(np.asarray(out), np.asarray(ref), atol=1e-3, rtol=1e-3)

    print("KERNEL_OK")
</pallas_src>

<mosaic_0001>
module attributes {stable_mosaic.version = 11 : i64} {
  func.func @_fused_cnn_kernel(%arg0: i32, %arg1: memref<1x1568x16xf32, #tpu.memory_space<vmem>>, %arg2: memref<16x16xf32, #tpu.memory_space<vmem>>, %arg3: memref<1x16xf32, #tpu.memory_space<vmem>>, %arg4: memref<9x16x32xf32, #tpu.memory_space<vmem>>, %arg5: memref<1x32xf32, #tpu.memory_space<vmem>>, %arg6: memref<32x128xf32, #tpu.memory_space<vmem>>, %arg7: memref<1x128xf32, #tpu.memory_space<vmem>>, %arg8: memref<1x8x128xf32, #tpu.memory_space<vmem>>, %arg9: memref<392x16xf32, #tpu.memory_space<vmem>>) attributes {dimension_semantics = [#tpu.dimension_semantics<parallel>], iteration_bounds = array<i64: 1>, scalar_prefetch = 0 : i64, scratch_operands = 1 : i64, tpu.core_type = #tpu.core_type<tc>, window_params = [{transform_indices = @transform_0, window_bounds = array<i64: 1, 1568, 16>}, {pipeline_mode = #tpu.pipeline_mode<synchronous>, transform_indices = @transform_1, window_bounds = array<i64: 16, 16>}, {pipeline_mode = #tpu.pipeline_mode<synchronous>, transform_indices = @transform_2, window_bounds = array<i64: 1, 16>}, {pipeline_mode = #tpu.pipeline_mode<synchronous>, transform_indices = @transform_3, window_bounds = array<i64: 9, 16, 32>}, {pipeline_mode = #tpu.pipeline_mode<synchronous>, transform_indices = @transform_4, window_bounds = array<i64: 1, 32>}, {pipeline_mode = #tpu.pipeline_mode<synchronous>, transform_indices = @transform_5, window_bounds = array<i64: 32, 128>}, {pipeline_mode = #tpu.pipeline_mode<synchronous>, transform_indices = @transform_6, window_bounds = array<i64: 1, 128>}, {transform_indices = @transform_7, window_bounds = array<i64: 1, 8, 128>}]} {
    %c0 = arith.constant 0 : index
    %c0_0 = arith.constant 0 : index
    %0 = vector.load %arg2[%c0, %c0_0] : memref<16x16xf32, #tpu.memory_space<vmem>>, vector<16x16xf32>
    %c0_1 = arith.constant 0 : index
    %c0_2 = arith.constant 0 : index
    %1 = vector.load %arg3[%c0_1, %c0_2] : memref<1x16xf32, #tpu.memory_space<vmem>>, vector<1x16xf32>
    %c0_3 = arith.constant 0 : index
    %c0_4 = arith.constant 0 : index
    %c0_5 = arith.constant 0 : index
    %2 = vector.load %arg1[%c0_3, %c0_4, %c0_5] : memref<1x1568x16xf32, #tpu.memory_space<vmem>>, vector<1x224x16xf32>
    %3 = vector.shape_cast %2 : vector<1x224x16xf32> to vector<224x16xf32>
    %cst = arith.constant dense<0.000000e+00> : vector<224x16xf32>
    %4 = tpu.matmul %3, %0, %cst {dimension_numbers = #tpu.dot_dimension_numbers<[1], [0], [0], [1], [0, 0, 1, 1], [], []>} : vector<224x16xf32>, vector<16x16xf32>, vector<224x16xf32> -> vector<224x16xf32>
    %5 = vector.broadcast %1 : vector<1x16xf32> to vector<224x16xf32>
    %6 = arith.addf %4, %5 : vector<224x16xf32>
    %cst_6 = arith.constant 0.000000e+00 : f32
    %7 = vector.broadcast %cst_6 : f32 to vector<224x16xf32>
    %8 = arith.maximumf %6, %7 : vector<224x16xf32>
    %9 = vector.extract_strided_slice %8 {offsets = [0, 0], sizes = [112, 16], strides = [1, 1]} : vector<224x16xf32> to vector<112x16xf32>
    %10 = vector.extract_strided_slice %8 {offsets = [112, 0], sizes = [112, 16], strides = [1, 1]} : vector<224x16xf32> to vector<112x16xf32>
    %11 = arith.maximumf %9, %10 : vector<112x16xf32>
    %12 = vector.extract_strided_slice %11 {offsets = [0, 0], sizes = [8, 16], strides = [1, 1]} : vector<112x16xf32> to vector<8x16xf32>
    %13 = vector.extract_strided_slice %11 {offsets = [8, 0], sizes = [8, 16], strides = [1, 1]} : vector<112x16xf32> to vector<8x16xf32>
    %14 = arith.maximumf %12, %13 : vector<8x16xf32>
    %c0_7 = arith.constant 0 : index
    %c0_8 = arith.constant 0 : index
    %15 = vector.load %arg9[%c0_7, %c0_8] : memref<392x16xf32, #tpu.memory_space<vmem>>, vector<8x16xf32>
    tpu.vector_store %arg9[%c0_7, %c0_8], %14 {strides = array<i32>} : memref<392x16xf32, #tpu.memory_space<vmem>>, vector<8x16xf32>,
    %16 = vector.extract_strided_slice %11 {offsets = [16, 0], sizes = [8, 16], strides = [1, 1]} : vector<112x16xf32> to vector<8x16xf32>
    %17 = vector.extract_strided_slice %11 {offsets = [24, 0], sizes = [8, 16], strides = [1, 1]} : vector<112x16xf32> to vector<8x16xf32>
    %18 = arith.maximumf %16, %17 : vector<8x16xf32>
    %c8 = arith.constant 8 : index
    %c0_9 = arith.constant 0 : index
    %19 = vector.load %arg9[%c8, %c0_9] : memref<392x16xf32, #tpu.memory_space<vmem>>, vector<8x16xf32>
    tpu.vector_store %arg9[%c8, %c0_9], %18 {strides = array<i32>} : memref<392x16xf32, #tpu.memory_space<vmem>>, vector<8x16xf32>,
    %20 = vector.extract_strided_slice %11 {offsets = [32, 0], sizes = [8, 16], strides = [1, 1]} : vector<112x16xf32> to vector<8x16xf32>
    %21 = vector.extract_strided_slice %11 {offsets = [40, 0], sizes = [8, 16], strides = [1, 1]} : vector<112x16xf32> to vector<8x16xf32>
    %22 = arith.maximumf %20, %21 : vector<8x16xf32>
    %c16 = arith.constant 16 : index
    %c0_10 = arith.constant 0 : index
    %23 = vector.load %arg9[%c16, %c0_10] : memref<392x16xf32, #tpu.memory_space<vmem>>, vector<8x16xf32>
    tpu.vector_store %arg9[%c16, %c0_10], %22 {strides = array<i32>} : memref<392x16xf32, #tpu.memory_space<vmem>>, vector<8x16xf32>,
    %24 = vector.extract_strided_slice %11 {offsets = [48, 0], sizes = [8, 16], strides = [1, 1]} : vector<112x16xf32> to vector<8x16xf32>
    %25 = vector.extract_strided_slice %11 {offsets = [56, 0], sizes = [8, 16], strides = [1, 1]} : vector<112x16xf32> to vector<8x16xf32>
    %26 = arith.maximumf %24, %25 : vector<8x16xf32>
    %c24 = arith.constant 24 : index
    %c0_11 = arith.constant 0 : index
    %27 = vector.load %arg9[%c24, %c0_11] : memref<392x16xf32, #tpu.memory_space<vmem>>, vector<8x16xf32>
    tpu.vector_store %arg9[%c24, %c0_11], %26 {strides = array<i32>} : memref<392x16xf32, #tpu.memory_space<vmem>>, vector<8x16xf32>,
    %28 = vector.extract_strided_slice %11 {offsets = [64, 0], sizes = [8, 16], strides = [1, 1]} : vector<112x16xf32> to vector<8x16xf32>
    %29 = vector.extract_strided_slice %11 {offsets = [72, 0], sizes = [8, 16], strides = [1, 1]} : vector<112x16xf32> to vector<8x16xf32>
    %30 = arith.maximumf %28, %29 : vector<8x16xf32>
    %c32 = arith.constant 32 : index
    %c0_12 = arith.constant 0 : index
    %31 = vector.load %arg9[%c32, %c0_12] : memref<392x16xf32, #tpu.memory_space<vmem>>, vector<8x16xf32>
    tpu.vector_store %arg9[%c32, %c0_12], %30 {strides = array<i32>} : memref<392x16xf32, #tpu.memory_space<vmem>>, vector<8x16xf32>,
    %32 = vector.extract_strided_slice %11 {offsets = [80, 0], sizes = [8, 16], strides = [1, 1]} : vector<112x16xf32> to vector<8x16xf32>
    %33 = vector.extract_strided_slice %11 {offsets = [88, 0], sizes = [8, 16], strides = [1, 1]} : vector<112x16xf32> to vector<8x16xf32>
    %34 = arith.maximumf %32, %33 : vector<8x16xf32>
    %c40 = arith.constant 40 : index
    %c0_13 = arith.constant 0 : index
    %35 = vector.load %arg9[%c40, %c0_13] : memref<392x16xf32, #tpu.memory_space<vmem>>, vector<8x16xf32>
    tpu.vector_store %arg9[%c40, %c0_13], %34 {strides = array<i32>} : memref<392x16xf32, #tpu.memory_space<vmem>>, vector<8x16xf32>,
    %36 = vector.extract_strided_slice %11 {offsets = [96, 0], sizes = [8, 16], strides = [1, 1]} : vector<112x16xf32> to vector<8x16xf32>
    %37 = vector.extract_strided_slice %11 {offsets = [104, 0], sizes = [8, 16], strides = [1, 1]} : vector<112x16xf32> to vector<8x16xf32>
    %38 = arith.maximumf %36, %37 : vector<8x16xf32>
    %c48 = arith.constant 48 : index
    %c0_14 = arith.constant 0 : index
    %39 = vector.load %arg9[%c48, %c0_14] : memref<392x16xf32, #tpu.memory_space<vmem>>, vector<8x16xf32>
    tpu.vector_store %arg9[%c48, %c0_14], %38 {strides = array<i32>} : memref<392x16xf32, #tpu.memory_space<vmem>>, vector<8x16xf32>,
    %c0_15 = arith.constant 0 : index
    %c224 = arith.constant 224 : index
    %c0_16 = arith.constant 0 : index
    %40 = vector.load %arg1[%c0_15, %c224, %c0_16] : memref<1x1568x16xf32, #tpu.memory_space<vmem>>, vector<1x224x16xf32>
    %41 = vector.shape_cast %40 : vector<1x224x16xf32> to vector<224x16xf32>
    %cst_17 = arith.constant dense<0.000000e+00> : vector<224x16xf32>
    %42 = tpu.matmul %41, %0, %cst_17 {dimension_numbers = #tpu.dot_dimension_numbers<[1], [0], [0], [1], [0, 0, 1, 1], [], []>} : vector<224x16xf32>, vector<16x16xf32>, vector<224x16xf32> -> vector<224x16xf32>
    %43 = vector.broadcast %1 : vector<1x16xf32> to vector<224x16xf32>
    %44 = arith.addf %42, %43 : vector<224x16xf32>
    %cst_18 = arith.constant 0.000000e+00 : f32
    %45 = vector.broadcast %cst_18 : f32 to vector<224x16xf32>
    %46 = arith.maximumf %44, %45 : vector<224x16xf32>
    %47 = vector.extract_strided_slice %46 {offsets = [0, 0], sizes = [112, 16], strides = [1, 1]} : vector<224x16xf32> to vector<112x16xf32>
    %48 = vector.extract_strided_slice %46 {offsets = [112, 0], sizes = [112, 16], strides = [1, 1]} : vector<224x16xf32> to vector<112x16xf32>
    %49 = arith.maximumf %47, %48 : vector<112x16xf32>
    %50 = vector.extract_strided_slice %49 {offsets = [0, 0], sizes = [8, 16], strides = [1, 1]} : vector<112x16xf32> to vector<8x16xf32>
    %51 = vector.extract_strided_slice %49 {offsets = [8, 0], sizes = [8, 16], strides = [1, 1]} : vector<112x16xf32> to vector<8x16xf32>
    %52 = arith.maximumf %50, %51 : vector<8x16xf32>
    %c56 = arith.constant 56 : index
    %c0_19 = arith.constant 0 : index
    %53 = vector.load %arg9[%c56, %c0_19] : memref<392x16xf32, #tpu.memory_space<vmem>>, vector<8x16xf32>
    tpu.vector_store %arg9[%c56, %c0_19], %52 {strides = array<i32>} : memref<392x16xf32, #tpu.memory_space<vmem>>, vector<8x16xf32>,
    %54 = vector.extract_strided_slice %49 {offsets = [16, 0], sizes = [8, 16], strides = [1, 1]} : vector<112x16xf32> to vector<8x16xf32>
    %55 = vector.extract_strided_slice %49 {offsets = [24, 0], sizes = [8, 16], strides = [1, 1]} : vector<112x16xf32> to vector<8x16xf32>
    %56 = arith.maximumf %54, %55 : vector<8x16xf32>
    %c64 = arith.constant 64 : index
    %c0_20 = arith.constant 0 : index
    %57 = vector.load %arg9[%c64, %c0_20] : memref<392x16xf32, #tpu.memory_space<vmem>>, vector<8x16xf32>
    tpu.vector_store %arg9[%c64, %c0_20], %56 {strides = array<i32>} : memref<392x16xf32, #tpu.memory_space<vmem>>, vector<8x16xf32>,
    %58 = vector.extract_strided_slice %49 {offsets = [32, 0], sizes = [8, 16], strides = [1, 1]} : vector<112x16xf32> to vector<8x16xf32>
    %59 = vector.extract_strided_slice %49 {offsets = [40, 0], sizes = [8, 16], strides = [1, 1]} : vector<112x16xf32> to vector<8x16xf32>
    %60 = arith.maximumf %58, %59 : vector<8x16xf32>
    %c72 = arith.constant 72 : index
    %c0_21 = arith.constant 0 : index
    %61 = vector.load %arg9[%c72, %c0_21] : memref<392x16xf32, #tpu.memory_space<vmem>>, vector<8x16xf32>
    tpu.vector_store %arg9[%c72, %c0_21], %60 {strides = array<i32>} : memref<392x16xf32, #tpu.memory_space<vmem>>, vector<8x16xf32>,
    %62 = vector.extract_strided_slice %49 {offsets = [48, 0], sizes = [8, 16], strides = [1, 1]} : vector<112x16xf32> to vector<8x16xf32>
    %63 = vector.extract_strided_slice %49 {offsets = [56, 0], sizes = [8, 16], strides = [1, 1]} : vector<112x16xf32> to vector<8x16xf32>
    %64 = arith.maximumf %62, %63 : vector<8x16xf32>
    %c80 = arith.constant 80 : index
    %c0_22 = arith.constant 0 : index
    %65 = vector.load %arg9[%c80, %c0_22] : memref<392x16xf32, #tpu.memory_space<vmem>>, vector<8x16xf32>
    tpu.vector_store %arg9[%c80, %c0_22], %64 {strides = array<i32>} : memref<392x16xf32, #tpu.memory_space<vmem>>, vector<8x16xf32>,
    %66 = vector.extract_strided_slice %49 {offsets = [64, 0], sizes = [8, 16], strides = [1, 1]} : vector<112x16xf32> to vector<8x16xf32>
    %67 = vector.extract_strided_slice %49 {offsets = [72, 0], sizes = [8, 16], strides = [1, 1]} : vector<112x16xf32> to vector<8x16xf32>
    %68 = arith.maximumf %66, %67 : vector<8x16xf32>
    %c88 = arith.constant 88 : index
    %c0_23 = arith.constant 0 : index
    %69 = vector.load %arg9[%c88, %c0_23] : memref<392x16xf32, #tpu.memory_space<vmem>>, vector<8x16xf32>
    tpu.vector_store %arg9[%c88, %c0_23], %68 {strides = array<i32>} : memref<392x16xf32, #tpu.memory_space<vmem>>, vector<8x16xf32>,
    %70 = vector.extract_strided_slice %49 {offsets = [80, 0], sizes = [8, 16], strides = [1, 1]} : vector<112x16xf32> to vector<8x16xf32>
    %71 = vector.extract_strided_slice %49 {offsets = [88, 0], sizes = [8, 16], strides = [1, 1]} : vector<112x16xf32> to vector<8x16xf32>
    %72 = arith.maximumf %70, %71 : vector<8x16xf32>
    %c96 = arith.constant 96 : index
    %c0_24 = arith.constant 0 : index
    %73 = vector.load %arg9[%c96, %c0_24] : memref<392x16xf32, #tpu.memory_space<vmem>>, vector<8x16xf32>
    tpu.vector_store %arg9[%c96, %c0_24], %72 {strides = array<i32>} : memref<392x16xf32, #tpu.memory_space<vmem>>, vector<8x16xf32>,
    %74 = vector.extract_strided_slice %49 {offsets = [96, 0], sizes = [8, 16], strides = [1, 1]} : vector<112x16xf32> to vector<8x16xf32>
    %75 = vector.extract_strided_slice %49 {offsets = [104, 0], sizes = [8, 16], strides = [1, 1]} : vector<112x16xf32> to vector<8x16xf32>
    %76 = arith.maximumf %74, %75 : vector<8x16xf32>
    %c104 = arith.constant 104 : index
    %c0_25 = arith.constant 0 : index
    %77 = vector.load %arg9[%c104, %c0_25] : memref<392x16xf32, #tpu.memory_space<vmem>>, vector<8x16xf32>
    tpu.vector_store %arg9[%c104, %c0_25], %76 {strides = array<i32>} : memref<392x16xf32, #tpu.memory_space<vmem>>, vector<8x16xf32>,
    %c0_26 = arith.constant 0 : index
    %c448 = arith.constant 448 : index
    %c0_27 = arith.constant 0 : index
    %78 = vector.load %arg1[%c0_26, %c448, %c0_27] : memref<1x1568x16xf32, #tpu.memory_space<vmem>>, vector<1x224x16xf32>
    %79 = vector.shape_cast %78 : vector<1x224x16xf32> to vector<224x16xf32>
    %cst_28 = arith.constant dense<0.000000e+00> : vector<224x16xf32>
    %80 = tpu.matmul %79, %0, %cst_28 {dimension_numbers = #tpu.dot_dimension_numbers<[1], [0], [0], [1], [0, 0, 1, 1], [], []>} : vector<224x16xf32>, vector<16x16xf32>, vector<224x16xf32> -> vector<224x16xf32>
    %81 = vector.broadcast %1 : vector<1x16xf32> to vector<224x16xf32>
    %82 = arith.addf %80, %81 : vector<224x16xf32>
    %cst_29 = arith.constant 0.000000e+00 : f32
    %83 = vector.broadcast %cst_29 : f32 to vector<224x16xf32>
    %84 = arith.maximumf %82, %83 : vector<224x16xf32>
    %85 = vector.extract_strided_slice %84 {offsets = [0, 0], sizes = [112, 16], strides = [1, 1]} : vector<224x16xf32> to vector<112x16xf32>
    %86 = vector.extract_strided_slice %84 {offsets = [112, 0], sizes = [112, 16], strides = [1, 1]} : vector<224x16xf32> to vector<112x16xf32>
    %87 = arith.maximumf %85, %86 : vector<112x16xf32>
    %88 = vector.extract_strided_slice %87 {offsets = [0, 0], sizes = [8, 16], strides = [1, 1]} : vector<112x16xf32> to vector<8x16xf32>
    %89 = vector.extract_strided_slice %87 {offsets = [8, 0], sizes = [8, 16], strides = [1, 1]} : vector<112x16xf32> to vector<8x16xf32>
    %90 = arith.maximumf %88, %89 : vector<8x16xf32>
    %c112 = arith.constant 112 : index
    %c0_30 = arith.constant 0 : index
    %91 = vector.load %arg9[%c112, %c0_30] : memref<392x16xf32, #tpu.memory_space<vmem>>, vector<8x16xf32>
    tpu.vector_store %arg9[%c112, %c0_30], %90 {strides = array<i32>} : memref<392x16xf32, #tpu.memory_space<vmem>>, vector<8x16xf32>,
    %92 = vector.extract_strided_slice %87 {offsets = [16, 0], sizes = [8, 16], strides = [1, 1]} : vector<112x16xf32> to vector<8x16xf32>
    %93 = vector.extract_strided_slice %87 {offsets = [24, 0], sizes = [8, 16], strides = [1, 1]} : vector<112x16xf32> to vector<8x16xf32>
    %94 = arith.maximumf %92, %93 : vector<8x16xf32>
    %c120 = arith.constant 120 : index
    %c0_31 = arith.constant 0 : index
    %95 = vector.load %arg9[%c120, %c0_31] : memref<392x16xf32, #tpu.memory_space<vmem>>, vector<8x16xf32>
    tpu.vector_store %arg9[%c120, %c0_31], %94 {strides = array<i32>} : memref<392x16xf32, #tpu.memory_space<vmem>>, vector<8x16xf32>,
    %96 = vector.extract_strided_slice %87 {offsets = [32, 0], sizes = [8, 16], strides = [1, 1]} : vector<112x16xf32> to vector<8x16xf32>
    %97 = vector.extract_strided_slice %87 {offsets = [40, 0], sizes = [8, 16], strides = [1, 1]} : vector<112x16xf32> to vector<8x16xf32>
    %98 = arith.maximumf %96, %97 : vector<8x16xf32>
    %c128 = arith.constant 128 : index
    %c0_32 = arith.constant 0 : index
    %99 = vector.load %arg9[%c128, %c0_32] : memref<392x16xf32, #tpu.memory_space<vmem>>, vector<8x16xf32>
    tpu.vector_store %arg9[%c128, %c0_32], %98 {strides = array<i32>} : memref<392x16xf32, #tpu.memory_space<vmem>>, vector<8x16xf32>,
    %100 = vector.extract_strided_slice %87 {offsets = [48, 0], sizes = [8, 16], strides = [1, 1]} : vector<112x16xf32> to vector<8x16xf32>
    %101 = vector.extract_strided_slice %87 {offsets = [56, 0], sizes = [8, 16], strides = [1, 1]} : vector<112x16xf32> to vector<8x16xf32>
    %102 = arith.maximumf %100, %101 : vector<8x16xf32>
    %c136 = arith.constant 136 : index
    %c0_33 = arith.constant 0 : index
    %103 = vector.load %arg9[%c136, %c0_33] : memref<392x16xf32, #tpu.memory_space<vmem>>, vector<8x16xf32>
    tpu.vector_store %arg9[%c136, %c0_33], %102 {strides = array<i32>} : memref<392x16xf32, #tpu.memory_space<vmem>>, vector<8x16xf32>,
    %104 = vector.extract_strided_slice %87 {offsets = [64, 0], sizes = [8, 16], strides = [1, 1]} : vector<112x16xf32> to vector<8x16xf32>
    %105 = vector.extract_strided_slice %87 {offsets = [72, 0], sizes = [8, 16], strides = [1, 1]} : vector<112x16xf32> to vector<8x16xf32>
    %106 = arith.maximumf %104, %105 : vector<8x16xf32>
    %c144 = arith.constant 144 : index
    %c0_34 = arith.constant 0 : index
    %107 = vector.load %arg9[%c144, %c0_34] : memref<392x16xf32, #tpu.memory_space<vmem>>, vector<8x16xf32>
    tpu.vector_store %arg9[%c144, %c0_34], %106 {strides = array<i32>} : memref<392x16xf32, #tpu.memory_space<vmem>>, vector<8x16xf32>,
    %108 = vector.extract_strided_slice %87 {offsets = [80, 0], sizes = [8, 16], strides = [1, 1]} : vector<112x16xf32> to vector<8x16xf32>
    %109 = vector.extract_strided_slice %87 {offsets = [88, 0], sizes = [8, 16], strides = [1, 1]} : vector<112x16xf32> to vector<8x16xf32>
    %110 = arith.maximumf %108, %109 : vector<8x16xf32>
    %c152 = arith.constant 152 : index
    %c0_35 = arith.constant 0 : index
    %111 = vector.load %arg9[%c152, %c0_35] : memref<392x16xf32, #tpu.memory_space<vmem>>, vector<8x16xf32>
    tpu.vector_store %arg9[%c152, %c0_35], %110 {strides = array<i32>} : memref<392x16xf32, #tpu.memory_space<vmem>>, vector<8x16xf32>,
    %112 = vector.extract_strided_slice %87 {offsets = [96, 0], sizes = [8, 16], strides = [1, 1]} : vector<112x16xf32> to vector<8x16xf32>
    %113 = vector.extract_strided_slice %87 {offsets = [104, 0], sizes = [8, 16], strides = [1, 1]} : vector<112x16xf32> to vector<8x16xf32>
    %114 = arith.maximumf %112, %113 : vector<8x16xf32>
    %c160 = arith.constant 160 : index
    %c0_36 = arith.constant 0 : index
    %115 = vector.load %arg9[%c160, %c0_36] : memref<392x16xf32, #tpu.memory_space<vmem>>, vector<8x16xf32>
    tpu.vector_store %arg9[%c160, %c0_36], %114 {strides = array<i32>} : memref<392x16xf32, #tpu.memory_space<vmem>>, vector<8x16xf32>,
    %c0_37 = arith.constant 0 : index
    %c672 = arith.constant 672 : index
    %c0_38 = arith.constant 0 : index
    %116 = vector.load %arg1[%c0_37, %c672, %c0_38] : memref<1x1568x16xf32, #tpu.memory_space<vmem>>, vector<1x224x16xf32>
    %117 = vector.shape_cast %116 : vector<1x224x16xf32> to vector<224x16xf32>
    %cst_39 = arith.constant dense<0.000000e+00> : vector<224x16xf32>
    %118 = tpu.matmul %117, %0, %cst_39 {dimension_numbers = #tpu.dot_dimension_numbers<[1], [0], [0], [1], [0, 0, 1, 1], [], []>} : vector<224x16xf32>, vector<16x16xf32>, vector<224x16xf32> -> vector<224x16xf32>
    %119 = vector.broadcast %1 : vector<1x16xf32> to vector<224x16xf32>
    %120 = arith.addf %118, %119 : vector<224x16xf32>
    %cst_40 = arith.constant 0.000000e+00 : f32
    %121 = vector.broadcast %cst_40 : f32 to vector<224x16xf32>
    %122 = arith.maximumf %120, %121 : vector<224x16xf32>
    %123 = vector.extract_strided_slice %122 {offsets = [0, 0], sizes = [112, 16], strides = [1, 1]} : vector<224x16xf32> to vector<112x16xf32>
    %124 = vector.extract_strided_slice %122 {offsets = [112, 0], sizes = [112, 16], strides = [1, 1]} : vector<224x16xf32> to vector<112x16xf32>
    %125 = arith.maximumf %123, %124 : vector<112x16xf32>
    %126 = vector.extract_strided_slice %125 {offsets = [0, 0], sizes = [8, 16], strides = [1, 1]} : vector<112x16xf32> to vector<8x16xf32>
    %127 = vector.extract_strided_slice %125 {offsets = [8, 0], sizes = [8, 16], strides = [1, 1]} : vector<112x16xf32> to vector<8x16xf32>
    %128 = arith.maximumf %126, %127 : vector<8x16xf32>
    %c168 = arith.constant 168 : index
    %c0_41 = arith.constant 0 : index
    %129 = vector.load %arg9[%c168, %c0_41] : memref<392x16xf32, #tpu.memory_space<vmem>>, vector<8x16xf32>
    tpu.vector_store %arg9[%c168, %c0_41], %128 {strides = array<i32>} : memref<392x16xf32, #tpu.memory_space<vmem>>, vector<8x16xf32>,
    %130 = vector.extract_strided_slice %125 {offsets = [16, 0], sizes = [8, 16], strides = [1, 1]} : vector<112x16xf32> to vector<8x16xf32>
    %131 = vector.extract_strided_slice %125 {offsets = [24, 0], sizes = [8, 16], strides = [1, 1]} : vector<112x16xf32> to vector<8x16xf32>
    %132 = arith.maximumf %130, %131 : vector<8x16xf32>
    %c176 = arith.constant 176 : index
    %c0_42 = arith.constant 0 : index
    %133 = vector.load %arg9[%c176, %c0_42] : memref<392x16xf32, #tpu.memory_space<vmem>>, vector<8x16xf32>
    tpu.vector_store %arg9[%c176, %c0_42], %132 {strides = array<i32>} : memref<392x16xf32, #tpu.memory_space<vmem>>, vector<8x16xf32>,
    %134 = vector.extract_strided_slice %125 {offsets = [32, 0], sizes = [8, 16], strides = [1, 1]} : vector<112x16xf32> to vector<8x16xf32>
    %135 = vector.extract_strided_slice %125 {offsets = [40, 0], sizes = [8, 16], strides = [1, 1]} : vector<112x16xf32> to vector<8x16xf32>
    %136 = arith.maximumf %134, %135 : vector<8x16xf32>
    %c184 = arith.constant 184 : index
    %c0_43 = arith.constant 0 : index
    %137 = vector.load %arg9[%c184, %c0_43] : memref<392x16xf32, #tpu.memory_space<vmem>>, vector<8x16xf32>
    tpu.vector_store %arg9[%c184, %c0_43], %136 {strides = array<i32>} : memref<392x16xf32, #tpu.memory_space<vmem>>, vector<8x16xf32>,
    %138 = vector.extract_strided_slice %125 {offsets = [48, 0], sizes = [8, 16], strides = [1, 1]} : vector<112x16xf32> to vector<8x16xf32>
    %139 = vector.extract_strided_slice %125 {offsets = [56, 0], sizes = [8, 16], strides = [1, 1]} : vector<112x16xf32> to vector<8x16xf32>
    %140 = arith.maximumf %138, %139 : vector<8x16xf32>
    %c192 = arith.constant 192 : index
    %c0_44 = arith.constant 0 : index
    %141 = vector.load %arg9[%c192, %c0_44] : memref<392x16xf32, #tpu.memory_space<vmem>>, vector<8x16xf32>
    tpu.vector_store %arg9[%c192, %c0_44], %140 {strides = array<i32>} : memref<392x16xf32, #tpu.memory_space<vmem>>, vector<8x16xf32>,
    %142 = vector.extract_strided_slice %125 {offsets = [64, 0], sizes = [8, 16], strides = [1, 1]} : vector<112x16xf32> to vector<8x16xf32>
    %143 = vector.extract_strided_slice %125 {offsets = [72, 0], sizes = [8, 16], strides = [1, 1]} : vector<112x16xf32> to vector<8x16xf32>
    %144 = arith.maximumf %142, %143 : vector<8x16xf32>
    %c200 = arith.constant 200 : index
    %c0_45 = arith.constant 0 : index
    %145 = vector.load %arg9[%c200, %c0_45] : memref<392x16xf32, #tpu.memory_space<vmem>>, vector<8x16xf32>
    tpu.vector_store %arg9[%c200, %c0_45], %144 {strides = array<i32>} : memref<392x16xf32, #tpu.memory_space<vmem>>, vector<8x16xf32>,
    %146 = vector.extract_strided_slice %125 {offsets = [80, 0], sizes = [8, 16], strides = [1, 1]} : vector<112x16xf32> to vector<8x16xf32>
    %147 = vector.extract_strided_slice %125 {offsets = [88, 0], sizes = [8, 16], strides = [1, 1]} : vector<112x16xf32> to vector<8x16xf32>
    %148 = arith.maximumf %146, %147 : vector<8x16xf32>
    %c208 = arith.constant 208 : index
    %c0_46 = arith.constant 0 : index
    %149 = vector.load %arg9[%c208, %c0_46] : memref<392x16xf32, #tpu.memory_space<vmem>>, vector<8x16xf32>
    tpu.vector_store %arg9[%c208, %c0_46], %148 {strides = array<i32>} : memref<392x16xf32, #tpu.memory_space<vmem>>, vector<8x16xf32>,
    %150 = vector.extract_strided_slice %125 {offsets = [96, 0], sizes = [8, 16], strides = [1, 1]} : vector<112x16xf32> to vector<8x16xf32>
    %151 = vector.extract_strided_slice %125 {offsets = [104, 0], sizes = [8, 16], strides = [1, 1]} : vector<112x16xf32> to vector<8x16xf32>
    %152 = arith.maximumf %150, %151 : vector<8x16xf32>
    %c216 = arith.constant 216 : index
    %c0_47 = arith.constant 0 : index
    %153 = vector.load %arg9[%c216, %c0_47] : memref<392x16xf32, #tpu.memory_space<vmem>>, vector<8x16xf32>
    tpu.vector_store %arg9[%c216, %c0_47], %152 {strides = array<i32>} : memref<392x16xf32, #tpu.memory_space<vmem>>, vector<8x16xf32>,
    %c0_48 = arith.constant 0 : index
    %c896 = arith.constant 896 : index
    %c0_49 = arith.constant 0 : index
    %154 = vector.load %arg1[%c0_48, %c896, %c0_49] : memref<1x1568x16xf32, #tpu.memory_space<vmem>>, vector<1x224x16xf32>
    %155 = vector.shape_cast %154 : vector<1x224x16xf32> to vector<224x16xf32>
    %cst_50 = arith.constant dense<0.000000e+00> : vector<224x16xf32>
    %156 = tpu.matmul %155, %0, %cst_50 {dimension_numbers = #tpu.dot_dimension_numbers<[1], [0], [0], [1], [0, 0, 1, 1], [], []>} : vector<224x16xf32>, vector<16x16xf32>, vector<224x16xf32> -> vector<224x16xf32>
    %157 = vector.broadcast %1 : vector<1x16xf32> to vector<224x16xf32>
    %158 = arith.addf %156, %157 : vector<224x16xf32>
    %cst_51 = arith.constant 0.000000e+00 : f32
    %159 = vector.broadcast %cst_51 : f32 to vector<224x16xf32>
    %160 = arith.maximumf %158, %159 : vector<224x16xf32>
    %161 = vector.extract_strided_slice %160 {offsets = [0, 0], sizes = [112, 16], strides = [1, 1]} : vector<224x16xf32> to vector<112x16xf32>
    %162 = vector.extract_strided_slice %160 {offsets = [112, 0], sizes = [112, 16], strides = [1, 1]} : vector<224x16xf32> to vector<112x16xf32>
    %163 = arith.maximumf %161, %162 : vector<112x16xf32>
    %164 = vector.extract_strided_slice %163 {offsets = [0, 0], sizes = [8, 16], strides = [1, 1]} : vector<112x16xf32> to vector<8x16xf32>
    %165 = vector.extract_strided_slice %163 {offsets = [8, 0], sizes = [8, 16], strides = [1, 1]} : vector<112x16xf32> to vector<8x16xf32>
    %166 = arith.maximumf %164, %165 : vector<8x16xf32>
    %c224_52 = arith.constant 224 : index
    %c0_53 = arith.constant 0 : index
    %167 = vector.load %arg9[%c224_52, %c0_53] : memref<392x16xf32, #tpu.memory_space<vmem>>, vector<8x16xf32>
    tpu.vector_store %arg9[%c224_52, %c0_53], %166 {strides = array<i32>} : memref<392x16xf32, #tpu.memory_space<vmem>>, vector<8x16xf32>,
    %168 = vector.extract_strided_slice %163 {offsets = [16, 0], sizes = [8, 16], strides = [1, 1]} : vector<112x16xf32> to vector<8x16xf32>
    %169 = vector.extract_strided_slice %163 {offsets = [24, 0], sizes = [8, 16], strides = [1, 1]} : vector<112x16xf32> to vector<8x16xf32>
    %170 = arith.maximumf %168, %169 : vector<8x16xf32>
    %c232 = arith.constant 232 : index
    %c0_54 = arith.constant 0 : index
    %171 = vector.load %arg9[%c232, %c0_54] : memref<392x16xf32, #tpu.memory_space<vmem>>, vector<8x16xf32>
    tpu.vector_store %arg9[%c232, %c0_54], %170 {strides = array<i32>} : memref<392x16xf32, #tpu.memory_space<vmem>>, vector<8x16xf32>,
    %172 = vector.extract_strided_slice %163 {offsets = [32, 0], sizes = [8, 16], strides = [1, 1]} : vector<112x16xf32> to vector<8x16xf32>
    %173 = vector.extract_strided_slice %163 {offsets = [40, 0], sizes = [8, 16], strides = [1, 1]} : vector<112x16xf32> to vector<8x16xf32>
    %174 = arith.maximumf %172, %173 : vector<8x16xf32>
    %c240 = arith.constant 240 : index
    %c0_55 = arith.constant 0 : index
    %175 = vector.load %arg9[%c240, %c0_55] : memref<392x16xf32, #tpu.memory_space<vmem>>, vector<8x16xf32>
    tpu.vector_store %arg9[%c240, %c0_55], %174 {strides = array<i32>} : memref<392x16xf32, #tpu.memory_space<vmem>>, vector<8x16xf32>,
    %176 = vector.extract_strided_slice %163 {offsets = [48, 0], sizes = [8, 16], strides = [1, 1]} : vector<112x16xf32> to vector<8x16xf32>
    %177 = vector.extract_strided_slice %163 {offsets = [56, 0], sizes = [8, 16], strides = [1, 1]} : vector<112x16xf32> to vector<8x16xf32>
    %178 = arith.maximumf %176, %177 : vector<8x16xf32>
    %c248 = arith.constant 248 : index
    %c0_56 = arith.constant 0 : index
    %179 = vector.load %arg9[%c248, %c0_56] : memref<392x16xf32, #tpu.memory_space<vmem>>, vector<8x16xf32>
    tpu.vector_store %arg9[%c248, %c0_56], %178 {strides = array<i32>} : memref<392x16xf32, #tpu.memory_space<vmem>>, vector<8x16xf32>,
    %180 = vector.extract_strided_slice %163 {offsets = [64, 0], sizes = [8, 16], strides = [1, 1]} : vector<112x16xf32> to vector<8x16xf32>
    %181 = vector.extract_strided_slice %163 {offsets = [72, 0], sizes = [8, 16], strides = [1, 1]} : vector<112x16xf32> to vector<8x16xf32>
    %182 = arith.maximumf %180, %181 : vector<8x16xf32>
    %c256 = arith.constant 256 : index
    %c0_57 = arith.constant 0 : index
    %183 = vector.load %arg9[%c256, %c0_57] : memref<392x16xf32, #tpu.memory_space<vmem>>, vector<8x16xf32>
    tpu.vector_store %arg9[%c256, %c0_57], %182 {strides = array<i32>} : memref<392x16xf32, #tpu.memory_space<vmem>>, vector<8x16xf32>,
    %184 = vector.extract_strided_slice %163 {offsets = [80, 0], sizes = [8, 16], strides = [1, 1]} : vector<112x16xf32> to vector<8x16xf32>
    %185 = vector.extract_strided_slice %163 {offsets = [88, 0], sizes = [8, 16], strides = [1, 1]} : vector<112x16xf32> to vector<8x16xf32>
    %186 = arith.maximumf %184, %185 : vector<8x16xf32>
    %c264 = arith.constant 264 : index
    %c0_58 = arith.constant 0 : index
    %187 = vector.load %arg9[%c264, %c0_58] : memref<392x16xf32, #tpu.memory_space<vmem>>, vector<8x16xf32>
    tpu.vector_store %arg9[%c264, %c0_58], %186 {strides = array<i32>} : memref<392x16xf32, #tpu.memory_space<vmem>>, vector<8x16xf32>,
    %188 = vector.extract_strided_slice %163 {offsets = [96, 0], sizes = [8, 16], strides = [1, 1]} : vector<112x16xf32> to vector<8x16xf32>
    %189 = vector.extract_strided_slice %163 {offsets = [104, 0], sizes = [8, 16], strides = [1, 1]} : vector<112x16xf32> to vector<8x16xf32>
    %190 = arith.maximumf %188, %189 : vector<8x16xf32>
    %c272 = arith.constant 272 : index
    %c0_59 = arith.constant 0 : index
    %191 = vector.load %arg9[%c272, %c0_59] : memref<392x16xf32, #tpu.memory_space<vmem>>, vector<8x16xf32>
    tpu.vector_store %arg9[%c272, %c0_59], %190 {strides = array<i32>} : memref<392x16xf32, #tpu.memory_space<vmem>>, vector<8x16xf32>,
    %c0_60 = arith.constant 0 : index
    %c1120 = arith.constant 1120 : index
    %c0_61 = arith.constant 0 : index
    %192 = vector.load %arg1[%c0_60, %c1120, %c0_61] : memref<1x1568x16xf32, #tpu.memory_space<vmem>>, vector<1x224x16xf32>
    %193 = vector.shape_cast %192 : vector<1x224x16xf32> to vector<224x16xf32>
    %cst_62 = arith.constant dense<0.000000e+00> : vector<224x16xf32>
    %194 = tpu.matmul %193, %0, %cst_62 {dimension_numbers = #tpu.dot_dimension_numbers<[1], [0], [0], [1], [0, 0, 1, 1], [], []>} : vector<224x16xf32>, vector<16x16xf32>, vector<224x16xf32> -> vector<224x16xf32>
    %195 = vector.broadcast %1 : vector<1x16xf32> to vector<224x16xf32>
    %196 = arith.addf %194, %195 : vector<224x16xf32>
    %cst_63 = arith.constant 0.000000e+00 : f32
    %197 = vector.broadcast %cst_63 : f32 to vector<224x16xf32>
    %198 = arith.maximumf %196, %197 : vector<224x16xf32>
    %199 = vector.extract_strided_slice %198 {offsets = [0, 0], sizes = [112, 16], strides = [1, 1]} : vector<224x16xf32> to vector<112x16xf32>
    %200 = vector.extract_strided_slice %198 {offsets = [112, 0], sizes = [112, 16], strides = [1, 1]} : vector<224x16xf32> to vector<112x16xf32>
    %201 = arith.maximumf %199, %200 : vector<112x16xf32>
    %202 = vector.extract_strided_slice %201 {offsets = [0, 0], sizes = [8, 16], strides = [1, 1]} : vector<112x16xf32> to vector<8x16xf32>
    %203 = vector.extract_strided_slice %201 {offsets = [8, 0], sizes = [8, 16], strides = [1, 1]} : vector<112x16xf32> to vector<8x16xf32>
    %204 = arith.maximumf %202, %203 : vector<8x16xf32>
    %c280 = arith.constant 280 : index
    %c0_64 = arith.constant 0 : index
    %205 = vector.load %arg9[%c280, %c0_64] : memref<392x16xf32, #tpu.memory_space<vmem>>, vector<8x16xf32>
    tpu.vector_store %arg9[%c280, %c0_64], %204 {strides = array<i32>} : memref<392x16xf32, #tpu.memory_space<vmem>>, vector<8x16xf32>,
    %206 = vector.extract_strided_slice %201 {offsets = [16, 0], sizes = [8, 16], strides = [1, 1]} : vector<112x16xf32> to vector<8x16xf32>
    %207 = vector.extract_strided_slice %201 {offsets = [24, 0], sizes = [8, 16], strides = [1, 1]} : vector<112x16xf32> to vector<8x16xf32>
    %208 = arith.maximumf %206, %207 : vector<8x16xf32>
    %c288 = arith.constant 288 : index
    %c0_65 = arith.constant 0 : index
    %209 = vector.load %arg9[%c288, %c0_65] : memref<392x16xf32, #tpu.memory_space<vmem>>, vector<8x16xf32>
    tpu.vector_store %arg9[%c288, %c0_65], %208 {strides = array<i32>} : memref<392x16xf32, #tpu.memory_space<vmem>>, vector<8x16xf32>,
    %210 = vector.extract_strided_slice %201 {offsets = [32, 0], sizes = [8, 16], strides = [1, 1]} : vector<112x16xf32> to vector<8x16xf32>
    %211 = vector.extract_strided_slice %201 {offsets = [40, 0], sizes = [8, 16], strides = [1, 1]} : vector<112x16xf32> to vector<8x16xf32>
    %212 = arith.maximumf %210, %211 : vector<8x16xf32>
    %c296 = arith.constant 296 : index
    %c0_66 = arith.constant 0 : index
    %213 = vector.load %arg9[%c296, %c0_66] : memref<392x16xf32, #tpu.memory_space<vmem>>, vector<8x16xf32>
    tpu.vector_store %arg9[%c296, %c0_66], %212 {strides = array<i32>} : memref<392x16xf32, #tpu.memory_space<vmem>>, vector<8x16xf32>,
    %214 = vector.extract_strided_slice %201 {offsets = [48, 0], sizes = [8, 16], strides = [1, 1]} : vector<112x16xf32> to vector<8x16xf32>
    %215 = vector.extract_strided_slice %201 {offsets = [56, 0], sizes = [8, 16], strides = [1, 1]} : vector<112x16xf32> to vector<8x16xf32>
    %216 = arith.maximumf %214, %215 : vector<8x16xf32>
    %c304 = arith.constant 304 : index
    %c0_67 = arith.constant 0 : index
    %217 = vector.load %arg9[%c304, %c0_67] : memref<392x16xf32, #tpu.memory_space<vmem>>, vector<8x16xf32>
    tpu.vector_store %arg9[%c304, %c0_67], %216 {strides = array<i32>} : memref<392x16xf32, #tpu.memory_space<vmem>>, vector<8x16xf32>,
    %218 = vector.extract_strided_slice %201 {offsets = [64, 0], sizes = [8, 16], strides = [1, 1]} : vector<112x16xf32> to vector<8x16xf32>
    %219 = vector.extract_strided_slice %201 {offsets = [72, 0], sizes = [8, 16], strides = [1, 1]} : vector<112x16xf32> to vector<8x16xf32>
    %220 = arith.maximumf %218, %219 : vector<8x16xf32>
    %c312 = arith.constant 312 : index
    %c0_68 = arith.constant 0 : index
    %221 = vector.load %arg9[%c312, %c0_68] : memref<392x16xf32, #tpu.memory_space<vmem>>, vector<8x16xf32>
    tpu.vector_store %arg9[%c312, %c0_68], %220 {strides = array<i32>} : memref<392x16xf32, #tpu.memory_space<vmem>>, vector<8x16xf32>,
    %222 = vector.extract_strided_slice %201 {offsets = [80, 0], sizes = [8, 16], strides = [1, 1]} : vector<112x16xf32> to vector<8x16xf32>
    %223 = vector.extract_strided_slice %201 {offsets = [88, 0], sizes = [8, 16], strides = [1, 1]} : vector<112x16xf32> to vector<8x16xf32>
    %224 = arith.maximumf %222, %223 : vector<8x16xf32>
    %c320 = arith.constant 320 : index
    %c0_69 = arith.constant 0 : index
    %225 = vector.load %arg9[%c320, %c0_69] : memref<392x16xf32, #tpu.memory_space<vmem>>, vector<8x16xf32>
    tpu.vector_store %arg9[%c320, %c0_69], %224 {strides = array<i32>} : memref<392x16xf32, #tpu.memory_space<vmem>>, vector<8x16xf32>,
    %226 = vector.extract_strided_slice %201 {offsets = [96, 0], sizes = [8, 16], strides = [1, 1]} : vector<112x16xf32> to vector<8x16xf32>
    %227 = vector.extract_strided_slice %201 {offsets = [104, 0], sizes = [8, 16], strides = [1, 1]} : vector<112x16xf32> to vector<8x16xf32>
    %228 = arith.maximumf %226, %227 : vector<8x16xf32>
    %c328 = arith.constant 328 : index
    %c0_70 = arith.constant 0 : index
    %229 = vector.load %arg9[%c328, %c0_70] : memref<392x16xf32, #tpu.memory_space<vmem>>, vector<8x16xf32>
    tpu.vector_store %arg9[%c328, %c0_70], %228 {strides = array<i32>} : memref<392x16xf32, #tpu.memory_space<vmem>>, vector<8x16xf32>,
    %c0_71 = arith.constant 0 : index
    %c1344 = arith.constant 1344 : index
    %c0_72 = arith.constant 0 : index
    %230 = vector.load %arg1[%c0_71, %c1344, %c0_72] : memref<1x1568x16xf32, #tpu.memory_space<vmem>>, vector<1x224x16xf32>
    %231 = vector.shape_cast %230 : vector<1x224x16xf32> to vector<224x16xf32>
    %cst_73 = arith.constant dense<0.000000e+00> : vector<224x16xf32>
    %232 = tpu.matmul %231, %0, %cst_73 {dimension_numbers = #tpu.dot_dimension_numbers<[1], [0], [0], [1], [0, 0, 1, 1], [], []>} : vector<224x16xf32>, vector<16x16xf32>, vector<224x16xf32> -> vector<224x16xf32>
    %233 = vector.broadcast %1 : vector<1x16xf32> to vector<224x16xf32>
    %234 = arith.addf %232, %233 : vector<224x16xf32>
    %cst_74 = arith.constant 0.000000e+00 : f32
    %235 = vector.broadcast %cst_74 : f32 to vector<224x16xf32>
    %236 = arith.maximumf %234, %235 : vector<224x16xf32>
    %237 = vector.extract_strided_slice %236 {offsets = [0, 0], sizes = [112, 16], strides = [1, 1]} : vector<224x16xf32> to vector<112x16xf32>
    %238 = vector.extract_strided_slice %236 {offsets = [112, 0], sizes = [112, 16], strides = [1, 1]} : vector<224x16xf32> to vector<112x16xf32>
    %239 = arith.maximumf %237, %238 : vector<112x16xf32>
    %240 = vector.extract_strided_slice %239 {offsets = [0, 0], sizes = [8, 16], strides = [1, 1]} : vector<112x16xf32> to vector<8x16xf32>
    %241 = vector.extract_strided_slice %239 {offsets = [8, 0], sizes = [8, 16], strides = [1, 1]} : vector<112x16xf32> to vector<8x16xf32>
    %242 = arith.maximumf %240, %241 : vector<8x16xf32>
    %c336 = arith.constant 336 : index
    %c0_75 = arith.constant 0 : index
    %243 = vector.load %arg9[%c336, %c0_75] : memref<392x16xf32, #tpu.memory_space<vmem>>, vector<8x16xf32>
    tpu.vector_store %arg9[%c336, %c0_75], %242 {strides = array<i32>} : memref<392x16xf32, #tpu.memory_space<vmem>>, vector<8x16xf32>,
    %244 = vector.extract_strided_slice %239 {offsets = [16, 0], sizes = [8, 16], strides = [1, 1]} : vector<112x16xf32> to vector<8x16xf32>
    %245 = vector.extract_strided_slice %239 {offsets = [24, 0], sizes = [8, 16], strides = [1, 1]} : vector<112x16xf32> to vector<8x16xf32>
    %246 = arith.maximumf %244, %245 : vector<8x16xf32>
    %c344 = arith.constant 344 : index
    %c0_76 = arith.constant 0 : index
    %247 = vector.load %arg9[%c344, %c0_76] : memref<392x16xf32, #tpu.memory_space<vmem>>, vector<8x16xf32>
    tpu.vector_store %arg9[%c344, %c0_76], %246 {strides = array<i32>} : memref<392x16xf32, #tpu.memory_space<vmem>>, vector<8x16xf32>,
    %248 = vector.extract_strided_slice %239 {offsets = [32, 0], sizes = [8, 16], strides = [1, 1]} : vector<112x16xf32> to vector<8x16xf32>
    %249 = vector.extract_strided_slice %239 {offsets = [40, 0], sizes = [8, 16], strides = [1, 1]} : vector<112x16xf32> to vector<8x16xf32>
    %250 = arith.maximumf %248, %249 : vector<8x16xf32>
    %c352 = arith.constant 352 : index
    %c0_77 = arith.constant 0 : index
    %251 = vector.load %arg9[%c352, %c0_77] : memref<392x16xf32, #tpu.memory_space<vmem>>, vector<8x16xf32>
    tpu.vector_store %arg9[%c352, %c0_77], %250 {strides = array<i32>} : memref<392x16xf32, #tpu.memory_space<vmem>>, vector<8x16xf32>,
    %252 = vector.extract_strided_slice %239 {offsets = [48, 0], sizes = [8, 16], strides = [1, 1]} : vector<112x16xf32> to vector<8x16xf32>
    %253 = vector.extract_strided_slice %239 {offsets = [56, 0], sizes = [8, 16], strides = [1, 1]} : vector<112x16xf32> to vector<8x16xf32>
    %254 = arith.maximumf %252, %253 : vector<8x16xf32>
    %c360 = arith.constant 360 : index
    %c0_78 = arith.constant 0 : index
    %255 = vector.load %arg9[%c360, %c0_78] : memref<392x16xf32, #tpu.memory_space<vmem>>, vector<8x16xf32>
    tpu.vector_store %arg9[%c360, %c0_78], %254 {strides = array<i32>} : memref<392x16xf32, #tpu.memory_space<vmem>>, vector<8x16xf32>,
    %256 = vector.extract_strided_slice %239 {offsets = [64, 0], sizes = [8, 16], strides = [1, 1]} : vector<112x16xf32> to vector<8x16xf32>
    %257 = vector.extract_strided_slice %239 {offsets = [72, 0], sizes = [8, 16], strides = [1, 1]} : vector<112x16xf32> to vector<8x16xf32>
    %258 = arith.maximumf %256, %257 : vector<8x16xf32>
    %c368 = arith.constant 368 : index
    %c0_79 = arith.constant 0 : index
    %259 = vector.load %arg9[%c368, %c0_79] : memref<392x16xf32, #tpu.memory_space<vmem>>, vector<8x16xf32>
    tpu.vector_store %arg9[%c368, %c0_79], %258 {strides = array<i32>} : memref<392x16xf32, #tpu.memory_space<vmem>>, vector<8x16xf32>,
    %260 = vector.extract_strided_slice %239 {offsets = [80, 0], sizes = [8, 16], strides = [1, 1]} : vector<112x16xf32> to vector<8x16xf32>
    %261 = vector.extract_strided_slice %239 {offsets = [88, 0], sizes = [8, 16], strides = [1, 1]} : vector<112x16xf32> to vector<8x16xf32>
    %262 = arith.maximumf %260, %261 : vector<8x16xf32>
    %c376 = arith.constant 376 : index
    %c0_80 = arith.constant 0 : index
    %263 = vector.load %arg9[%c376, %c0_80] : memref<392x16xf32, #tpu.memory_space<vmem>>, vector<8x16xf32>
    tpu.vector_store %arg9[%c376, %c0_80], %262 {strides = array<i32>} : memref<392x16xf32, #tpu.memory_space<vmem>>, vector<8x16xf32>,
    %264 = vector.extract_strided_slice %239 {offsets = [96, 0], sizes = [8, 16], strides = [1, 1]} : vector<112x16xf32> to vector<8x16xf32>
    %265 = vector.extract_strided_slice %239 {offsets = [104, 0], sizes = [8, 16], strides = [1, 1]} : vector<112x16xf32> to vector<8x16xf32>
    %266 = arith.maximumf %264, %265 : vector<8x16xf32>
    %c384 = arith.constant 384 : index
    %c0_81 = arith.constant 0 : index
    %267 = vector.load %arg9[%c384, %c0_81] : memref<392x16xf32, #tpu.memory_space<vmem>>, vector<8x16xf32>
    tpu.vector_store %arg9[%c384, %c0_81], %266 {strides = array<i32>} : memref<392x16xf32, #tpu.memory_space<vmem>>, vector<8x16xf32>,
    %cst_82 = arith.constant 0.000000e+00 : f32
    %268 = vector.broadcast %cst_82 : f32 to vector<200x32xf32>
    %c0_83 = arith.constant 0 : index
    %c0_84 = arith.constant 0 : index
    %269 = vector.load %arg9[%c0_83, %c0_84] : memref<392x16xf32, #tpu.memory_space<vmem>>, vector<40x16xf32>
    %c56_85 = arith.constant 56 : index
    %c0_86 = arith.constant 0 : index
    %270 = vector.load %arg9[%c56_85, %c0_86] : memref<392x16xf32, #tpu.memory_space<vmem>>, vector<40x16xf32>
    %c112_87 = arith.constant 112 : index
    %c0_88 = arith.constant 0 : index
    %271 = vector.load %arg9[%c112_87, %c0_88] : memref<392x16xf32, #tpu.memory_space<vmem>>, vector<40x16xf32>
    %c168_89 = arith.constant 168 : index
    %c0_90 = arith.constant 0 : index
    %272 = vector.load %arg9[%c168_89, %c0_90] : memref<392x16xf32, #tpu.memory_space<vmem>>, vector<40x16xf32>
    %c224_91 = arith.constant 224 : index
    %c0_92 = arith.constant 0 : index
    %273 = vector.load %arg9[%c224_91, %c0_92] : memref<392x16xf32, #tpu.memory_space<vmem>>, vector<40x16xf32>
    %274 = tpu.concatenate %269, %270, %271, %272, %273 in 0 : vector<40x16xf32>, vector<40x16xf32>, vector<40x16xf32>, vector<40x16xf32>, vector<40x16xf32> -> vector<200x16xf32>
    %c0_93 = arith.constant 0 : index
    %c0_94 = arith.constant 0 : index
    %c0_95 = arith.constant 0 : index
    %275 = vector.load %arg4[%c0_93, %c0_94, %c0_95] : memref<9x16x32xf32, #tpu.memory_space<vmem>>, vector<1x16x32xf32>
    %276 = vector.shape_cast %275 : vector<1x16x32xf32> to vector<16x32xf32>
    %cst_96 = arith.constant dense<0.000000e+00> : vector<200x32xf32>
    %277 = tpu.matmul %274, %276, %cst_96 {dimension_numbers = #tpu.dot_dimension_numbers<[1], [0], [0], [1], [0, 0, 1, 1], [], []>} : vector<200x16xf32>, vector<16x32xf32>, vector<200x32xf32> -> vector<200x32xf32>
    %278 = arith.addf %268, %277 : vector<200x32xf32>
    %c8_97 = arith.constant 8 : index
    %c0_98 = arith.constant 0 : index
    %279 = vector.load %arg9[%c8_97, %c0_98] : memref<392x16xf32, #tpu.memory_space<vmem>>, vector<40x16xf32>
    %c64_99 = arith.constant 64 : index
    %c0_100 = arith.constant 0 : index
    %280 = vector.load %arg9[%c64_99, %c0_100] : memref<392x16xf32, #tpu.memory_space<vmem>>, vector<40x16xf32>
    %c120_101 = arith.constant 120 : index
    %c0_102 = arith.constant 0 : index
    %281 = vector.load %arg9[%c120_101, %c0_102] : memref<392x16xf32, #tpu.memory_space<vmem>>, vector<40x16xf32>
    %c176_103 = arith.constant 176 : index
    %c0_104 = arith.constant 0 : index
    %282 = vector.load %arg9[%c176_103, %c0_104] : memref<392x16xf32, #tpu.memory_space<vmem>>, vector<40x16xf32>
    %c232_105 = arith.constant 232 : index
    %c0_106 = arith.constant 0 : index
    %283 = vector.load %arg9[%c232_105, %c0_106] : memref<392x16xf32, #tpu.memory_space<vmem>>, vector<40x16xf32>
    %284 = tpu.concatenate %279, %280, %281, %282, %283 in 0 : vector<40x16xf32>, vector<40x16xf32>, vector<40x16xf32>, vector<40x16xf32>, vector<40x16xf32> -> vector<200x16xf32>
    %c1 = arith.constant 1 : index
    %c0_107 = arith.constant 0 : index
    %c0_108 = arith.constant 0 : index
    %285 = vector.load %arg4[%c1, %c0_107, %c0_108] : memref<9x16x32xf32, #tpu.memory_space<vmem>>, vector<1x16x32xf32>
    %286 = vector.shape_cast %285 : vector<1x16x32xf32> to vector<16x32xf32>
    %cst_109 = arith.constant dense<0.000000e+00> : vector<200x32xf32>
    %287 = tpu.matmul %284, %286, %cst_109 {dimension_numbers = #tpu.dot_dimension_numbers<[1], [0], [0], [1], [0, 0, 1, 1], [], []>} : vector<200x16xf32>, vector<16x32xf32>, vector<200x32xf32> -> vector<200x32xf32>
    %288 = arith.addf %278, %287 : vector<200x32xf32>
    %c16_110 = arith.constant 16 : index
    %c0_111 = arith.constant 0 : index
    %289 = vector.load %arg9[%c16_110, %c0_111] : memref<392x16xf32, #tpu.memory_space<vmem>>, vector<40x16xf32>
    %c72_112 = arith.constant 72 : index
    %c0_113 = arith.constant 0 : index
    %290 = vector.load %arg9[%c72_112, %c0_113] : memref<392x16xf32, #tpu.memory_space<vmem>>, vector<40x16xf32>
    %c128_114 = arith.constant 128 : index
    %c0_115 = arith.constant 0 : index
    %291 = vector.load %arg9[%c128_114, %c0_115] : memref<392x16xf32, #tpu.memory_space<vmem>>, vector<40x16xf32>
    %c184_116 = arith.constant 184 : index
    %c0_117 = arith.constant 0 : index
    %292 = vector.load %arg9[%c184_116, %c0_117] : memref<392x16xf32, #tpu.memory_space<vmem>>, vector<40x16xf32>
    %c240_118 = arith.constant 240 : index
    %c0_119 = arith.constant 0 : index
    %293 = vector.load %arg9[%c240_118, %c0_119] : memref<392x16xf32, #tpu.memory_space<vmem>>, vector<40x16xf32>
    %294 = tpu.concatenate %289, %290, %291, %292, %293 in 0 : vector<40x16xf32>, vector<40x16xf32>, vector<40x16xf32>, vector<40x16xf32>, vector<40x16xf32> -> vector<200x16xf32>
    %c2 = arith.constant 2 : index
    %c0_120 = arith.constant 0 : index
    %c0_121 = arith.constant 0 : index
    %295 = vector.load %arg4[%c2, %c0_120, %c0_121] : memref<9x16x32xf32, #tpu.memory_space<vmem>>, vector<1x16x32xf32>
    %296 = vector.shape_cast %295 : vector<1x16x32xf32> to vector<16x32xf32>
    %cst_122 = arith.constant dense<0.000000e+00> : vector<200x32xf32>
    %297 = tpu.matmul %294, %296, %cst_122 {dimension_numbers = #tpu.dot_dimension_numbers<[1], [0], [0], [1], [0, 0, 1, 1], [], []>} : vector<200x16xf32>, vector<16x32xf32>, vector<200x32xf32> -> vector<200x32xf32>
    %298 = arith.addf %288, %297 : vector<200x32xf32>
    %c56_123 = arith.constant 56 : index
    %c0_124 = arith.constant 0 : index
    %299 = vector.load %arg9[%c56_123, %c0_124] : memref<392x16xf32, #tpu.memory_space<vmem>>, vector<40x16xf32>
    %c112_125 = arith.constant 112 : index
    %c0_126 = arith.constant 0 : index
    %300 = vector.load %arg9[%c112_125, %c0_126] : memref<392x16xf32, #tpu.memory_space<vmem>>, vector<40x16xf32>
    %c168_127 = arith.constant 168 : index
    %c0_128 = arith.constant 0 : index
    %301 = vector.load %arg9[%c168_127, %c0_128] : memref<392x16xf32, #tpu.memory_space<vmem>>, vector<40x16xf32>
    %c224_129 = arith.constant 224 : index
    %c0_130 = arith.constant 0 : index
    %302 = vector.load %arg9[%c224_129, %c0_130] : memref<392x16xf32, #tpu.memory_space<vmem>>, vector<40x16xf32>
    %c280_131 = arith.constant 280 : index
    %c0_132 = arith.constant 0 : index
    %303 = vector.load %arg9[%c280_131, %c0_132] : memref<392x16xf32, #tpu.memory_space<vmem>>, vector<40x16xf32>
    %304 = tpu.concatenate %299, %300, %301, %302, %303 in 0 : vector<40x16xf32>, vector<40x16xf32>, vector<40x16xf32>, vector<40x16xf32>, vector<40x16xf32> -> vector<200x16xf32>
    %c3 = arith.constant 3 : index
    %c0_133 = arith.constant 0 : index
    %c0_134 = arith.constant 0 : index
    %305 = vector.load %arg4[%c3, %c0_133, %c0_134] : memref<9x16x32xf32, #tpu.memory_space<vmem>>, vector<1x16x32xf32>
    %306 = vector.shape_cast %305 : vector<1x16x32xf32> to vector<16x32xf32>
    %cst_135 = arith.constant dense<0.000000e+00> : vector<200x32xf32>
    %307 = tpu.matmul %304, %306, %cst_135 {dimension_numbers = #tpu.dot_dimension_numbers<[1], [0], [0], [1], [0, 0, 1, 1], [], []>} : vector<200x16xf32>, vector<16x32xf32>, vector<200x32xf32> -> vector<200x32xf32>
    %308 = arith.addf %298, %307 : vector<200x32xf32>
    %c64_136 = arith.constant 64 : index
    %c0_137 = arith.constant 0 : index
    %309 = vector.load %arg9[%c64_136, %c0_137] : memref<392x16xf32, #tpu.memory_space<vmem>>, vector<40x16xf32>
    %c120_138 = arith.constant 120 : index
    %c0_139 = arith.constant 0 : index
    %310 = vector.load %arg9[%c120_138, %c0_139] : memref<392x16xf32, #tpu.memory_space<vmem>>, vector<40x16xf32>
    %c176_140 = arith.constant 176 : index
    %c0_141 = arith.constant 0 : index
    %311 = vector.load %arg9[%c176_140, %c0_141] : memref<392x16xf32, #tpu.memory_space<vmem>>, vector<40x16xf32>
    %c232_142 = arith.constant 232 : index
    %c0_143 = arith.constant 0 : index
    %312 = vector.load %arg9[%c232_142, %c0_143] : memref<392x16xf32, #tpu.memory_space<vmem>>, vector<40x16xf32>
    %c288_144 = arith.constant 288 : index
    %c0_145 = arith.constant 0 : index
    %313 = vector.load %arg9[%c288_144, %c0_145] : memref<392x16xf32, #tpu.memory_space<vmem>>, vector<40x16xf32>
    %314 = tpu.concatenate %309, %310, %311, %312, %313 in 0 : vector<40x16xf32>, vector<40x16xf32>, vector<40x16xf32>, vector<40x16xf32>, vector<40x16xf32> -> vector<200x16xf32>
    %c4 = arith.constant 4 : index
    %c0_146 = arith.constant 0 : index
    %c0_147 = arith.constant 0 : index
    %315 = vector.load %arg4[%c4, %c0_146, %c0_147] : memref<9x16x32xf32, #tpu.memory_space<vmem>>, vector<1x16x32xf32>
    %316 = vector.shape_cast %315 : vector<1x16x32xf32> to vector<16x32xf32>
    %cst_148 = arith.constant dense<0.000000e+00> : vector<200x32xf32>
    %317 = tpu.matmul %314, %316, %cst_148 {dimension_numbers = #tpu.dot_dimension_numbers<[1], [0], [0], [1], [0, 0, 1, 1], [], []>} : vector<200x16xf32>, vector<16x32xf32>, vector<200x32xf32> -> vector<200x32xf32>
    %318 = arith.addf %308, %317 : vector<200x32xf32>
    %c72_149 = arith.constant 72 : index
    %c0_150 = arith.constant 0 : index
    %319 = vector.load %arg9[%c72_149, %c0_150] : memref<392x16xf32, #tpu.memory_space<vmem>>, vector<40x16xf32>
    %c128_151 = arith.constant 128 : index
    %c0_152 = arith.constant 0 : index
    %320 = vector.load %arg9[%c128_151, %c0_152] : memref<392x16xf32, #tpu.memory_space<vmem>>, vector<40x16xf32>
    %c184_153 = arith.constant 184 : index
    %c0_154 = arith.constant 0 : index
    %321 = vector.load %arg9[%c184_153, %c0_154] : memref<392x16xf32, #tpu.memory_space<vmem>>, vector<40x16xf32>
    %c240_155 = arith.constant 240 : index
    %c0_156 = arith.constant 0 : index
    %322 = vector.load %arg9[%c240_155, %c0_156] : memref<392x16xf32, #tpu.memory_space<vmem>>, vector<40x16xf32>
    %c296_157 = arith.constant 296 : index
    %c0_158 = arith.constant 0 : index
    %323 = vector.load %arg9[%c296_157, %c0_158] : memref<392x16xf32, #tpu.memory_space<vmem>>, vector<40x16xf32>
    %324 = tpu.concatenate %319, %320, %321, %322, %323 in 0 : vector<40x16xf32>, vector<40x16xf32>, vector<40x16xf32>, vector<40x16xf32>, vector<40x16xf32> -> vector<200x16xf32>
    %c5 = arith.constant 5 : index
    %c0_159 = arith.constant 0 : index
    %c0_160 = arith.constant 0 : index
    %325 = vector.load %arg4[%c5, %c0_159, %c0_160] : memref<9x16x32xf32, #tpu.memory_space<vmem>>, vector<1x16x32xf32>
    %326 = vector.shape_cast %325 : vector<1x16x32xf32> to vector<16x32xf32>
    %cst_161 = arith.constant dense<0.000000e+00> : vector<200x32xf32>
    %327 = tpu.matmul %324, %326, %cst_161 {dimension_numbers = #tpu.dot_dimension_numbers<[1], [0], [0], [1], [0, 0, 1, 1], [], []>} : vector<200x16xf32>, vector<16x32xf32>, vector<200x32xf32> -> vector<200x32xf32>
    %328 = arith.addf %318, %327 : vector<200x32xf32>
    %c112_162 = arith.constant 112 : index
    %c0_163 = arith.constant 0 : index
    %329 = vector.load %arg9[%c112_162, %c0_163] : memref<392x16xf32, #tpu.memory_space<vmem>>, vector<40x16xf32>
    %c168_164 = arith.constant 168 : index
    %c0_165 = arith.constant 0 : index
    %330 = vector.load %arg9[%c168_164, %c0_165] : memref<392x16xf32, #tpu.memory_space<vmem>>, vector<40x16xf32>
    %c224_166 = arith.constant 224 : index
    %c0_167 = arith.constant 0 : index
    %331 = vector.load %arg9[%c224_166, %c0_167] : memref<392x16xf32, #tpu.memory_space<vmem>>, vector<40x16xf32>
    %c280_168 = arith.constant 280 : index
    %c0_169 = arith.constant 0 : index
    %332 = vector.load %arg9[%c280_168, %c0_169] : memref<392x16xf32, #tpu.memory_space<vmem>>, vector<40x16xf32>
    %c336_170 = arith.constant 336 : index
    %c0_171 = arith.constant 0 : index
    %333 = vector.load %arg9[%c336_170, %c0_171] : memref<392x16xf32, #tpu.memory_space<vmem>>, vector<40x16xf32>
    %334 = tpu.concatenate %329, %330, %331, %332, %333 in 0 : vector<40x16xf32>, vector<40x16xf32>, vector<40x16xf32>, vector<40x16xf32>, vector<40x16xf32> -> vector<200x16xf32>
    %c6 = arith.constant 6 : index
    %c0_172 = arith.constant 0 : index
    %c0_173 = arith.constant 0 : index
    %335 = vector.load %arg4[%c6, %c0_172, %c0_173] : memref<9x16x32xf32, #tpu.memory_space<vmem>>, vector<1x16x32xf32>
    %336 = vector.shape_cast %335 : vector<1x16x32xf32> to vector<16x32xf32>
    %cst_174 = arith.constant dense<0.000000e+00> : vector<200x32xf32>
    %337 = tpu.matmul %334, %336, %cst_174 {dimension_numbers = #tpu.dot_dimension_numbers<[1], [0], [0], [1], [0, 0, 1, 1], [], []>} : vector<200x16xf32>, vector<16x32xf32>, vector<200x32xf32> -> vector<200x32xf32>
    %338 = arith.addf %328, %337 : vector<200x32xf32>
    %c120_175 = arith.constant 120 : index
    %c0_176 = arith.constant 0 : index
    %339 = vector.load %arg9[%c120_175, %c0_176] : memref<392x16xf32, #tpu.memory_space<vmem>>, vector<40x16xf32>
    %c176_177 = arith.constant 176 : index
    %c0_178 = arith.constant 0 : index
    %340 = vector.load %arg9[%c176_177, %c0_178] : memref<392x16xf32, #tpu.memory_space<vmem>>, vector<40x16xf32>
    %c232_179 = arith.constant 232 : index
    %c0_180 = arith.constant 0 : index
    %341 = vector.load %arg9[%c232_179, %c0_180] : memref<392x16xf32, #tpu.memory_space<vmem>>, vector<40x16xf32>
    %c288_181 = arith.constant 288 : index
    %c0_182 = arith.constant 0 : index
    %342 = vector.load %arg9[%c288_181, %c0_182] : memref<392x16xf32, #tpu.memory_space<vmem>>, vector<40x16xf32>
    %c344_183 = arith.constant 344 : index
    %c0_184 = arith.constant 0 : index
    %343 = vector.load %arg9[%c344_183, %c0_184] : memref<392x16xf32, #tpu.memory_space<vmem>>, vector<40x16xf32>
    %344 = tpu.concatenate %339, %340, %341, %342, %343 in 0 : vector<40x16xf32>, vector<40x16xf32>, vector<40x16xf32>, vector<40x16xf32>, vector<40x16xf32> -> vector<200x16xf32>
    %c7 = arith.constant 7 : index
    %c0_185 = arith.constant 0 : index
    %c0_186 = arith.constant 0 : index
    %345 = vector.load %arg4[%c7, %c0_185, %c0_186] : memref<9x16x32xf32, #tpu.memory_space<vmem>>, vector<1x16x32xf32>
    %346 = vector.shape_cast %345 : vector<1x16x32xf32> to vector<16x32xf32>
    %cst_187 = arith.constant dense<0.000000e+00> : vector<200x32xf32>
    %347 = tpu.matmul %344, %346, %cst_187 {dimension_numbers = #tpu.dot_dimension_numbers<[1], [0], [0], [1], [0, 0, 1, 1], [], []>} : vector<200x16xf32>, vector<16x32xf32>, vector<200x32xf32> -> vector<200x32xf32>
    %348 = arith.addf %338, %347 : vector<200x32xf32>
    %c128_188 = arith.constant 128 : index
    %c0_189 = arith.constant 0 : index
    %349 = vector.load %arg9[%c128_188, %c0_189] : memref<392x16xf32, #tpu.memory_space<vmem>>, vector<40x16xf32>
    %c184_190 = arith.constant 184 : index
    %c0_191 = arith.constant 0 : index
    %350 = vector.load %arg9[%c184_190, %c0_191] : memref<392x16xf32, #tpu.memory_space<vmem>>, vector<40x16xf32>
    %c240_192 = arith.constant 240 : index
    %c0_193 = arith.constant 0 : index
    %351 = vector.load %arg9[%c240_192, %c0_193] : memref<392x16xf32, #tpu.memory_space<vmem>>, vector<40x16xf32>
    %c296_194 = arith.constant 296 : index
    %c0_195 = arith.constant 0 : index
    %352 = vector.load %arg9[%c296_194, %c0_195] : memref<392x16xf32, #tpu.memory_space<vmem>>, vector<40x16xf32>
    %c352_196 = arith.constant 352 : index
    %c0_197 = arith.constant 0 : index
    %353 = vector.load %arg9[%c352_196, %c0_197] : memref<392x16xf32, #tpu.memory_space<vmem>>, vector<40x16xf32>
    %354 = tpu.concatenate %349, %350, %351, %352, %353 in 0 : vector<40x16xf32>, vector<40x16xf32>, vector<40x16xf32>, vector<40x16xf32>, vector<40x16xf32> -> vector<200x16xf32>
    %c8_198 = arith.constant 8 : index
    %c0_199 = arith.constant 0 : index
    %c0_200 = arith.constant 0 : index
    %355 = vector.load %arg4[%c8_198, %c0_199, %c0_200] : memref<9x16x32xf32, #tpu.memory_space<vmem>>, vector<1x16x32xf32>
    %356 = vector.shape_cast %355 : vector<1x16x32xf32> to vector<16x32xf32>
    %cst_201 = arith.constant dense<0.000000e+00> : vector<200x32xf32>
    %357 = tpu.matmul %354, %356, %cst_201 {dimension_numbers = #tpu.dot_dimension_numbers<[1], [0], [0], [1], [0, 0, 1, 1], [], []>} : vector<200x16xf32>, vector<16x32xf32>, vector<200x32xf32> -> vector<200x32xf32>
    %358 = arith.addf %348, %357 : vector<200x32xf32>
    %c0_202 = arith.constant 0 : index
    %c0_203 = arith.constant 0 : index
    %359 = vector.load %arg5[%c0_202, %c0_203] : memref<1x32xf32, #tpu.memory_space<vmem>>, vector<1x32xf32>
    %360 = vector.broadcast %359 : vector<1x32xf32> to vector<200x32xf32>
    %361 = arith.addf %358, %360 : vector<200x32xf32>
    %cst_204 = arith.constant 0.000000e+00 : f32
    %362 = vector.broadcast %cst_204 : f32 to vector<200x32xf32>
    %363 = arith.maximumf %361, %362 : vector<200x32xf32>
    %cst_205 = arith.constant 0.000000e+00 : f32
    %364 = vector.broadcast %cst_205 : f32 to vector<8x32xf32>
    %365 = vector.extract_strided_slice %363 {offsets = [0, 0], sizes = [8, 32], strides = [1, 1]} : vector<200x32xf32> to vector<8x32xf32>
    %366 = vector.extract_strided_slice %363 {offsets = [8, 0], sizes = [8, 32], strides = [1, 1]} : vector<200x32xf32> to vector<8x32xf32>
    %367 = vector.extract_strided_slice %363 {offsets = [40, 0], sizes = [8, 32], strides = [1, 1]} : vector<200x32xf32> to vector<8x32xf32>
    %368 = vector.extract_strided_slice %363 {offsets = [48, 0], sizes = [8, 32], strides = [1, 1]} : vector<200x32xf32> to vector<8x32xf32>
    %369 = arith.maximumf %365, %366 : vector<8x32xf32>
    %370 = arith.maximumf %367, %368 : vector<8x32xf32>
    %371 = arith.maximumf %369, %370 : vector<8x32xf32>
    %372 = arith.addf %364, %371 : vector<8x32xf32>
    %373 = vector.extract_strided_slice %363 {offsets = [16, 0], sizes = [8, 32], strides = [1, 1]} : vector<200x32xf32> to vector<8x32xf32>
    %374 = vector.extract_strided_slice %363 {offsets = [24, 0], sizes = [8, 32], strides = [1, 1]} : vector<200x32xf32> to vector<8x32xf32>
    %375 = vector.extract_strided_slice %363 {offsets = [56, 0], sizes = [8, 32], strides = [1, 1]} : vector<200x32xf32> to vector<8x32xf32>
    %376 = vector.extract_strided_slice %363 {offsets = [64, 0], sizes = [8, 32], strides = [1, 1]} : vector<200x32xf32> to vector<8x32xf32>
    %377 = arith.maximumf %373, %374 : vector<8x32xf32>
    %378 = arith.maximumf %375, %376 : vector<8x32xf32>
    %379 = arith.maximumf %377, %378 : vector<8x32xf32>
    %380 = arith.addf %372, %379 : vector<8x32xf32>
    %381 = vector.extract_strided_slice %363 {offsets = [80, 0], sizes = [8, 32], strides = [1, 1]} : vector<200x32xf32> to vector<8x32xf32>
    %382 = vector.extract_strided_slice %363 {offsets = [88, 0], sizes = [8, 32], strides = [1, 1]} : vector<200x32xf32> to vector<8x32xf32>
    %383 = vector.extract_strided_slice %363 {offsets = [120, 0], sizes = [8, 32], strides = [1, 1]} : vector<200x32xf32> to vector<8x32xf32>
    %384 = vector.extract_strided_slice %363 {offsets = [128, 0], sizes = [8, 32], strides = [1, 1]} : vector<200x32xf32> to vector<8x32xf32>
    %385 = arith.maximumf %381, %382 : vector<8x32xf32>
    %386 = arith.maximumf %383, %384 : vector<8x32xf32>
    %387 = arith.maximumf %385, %386 : vector<8x32xf32>
    %388 = arith.addf %380, %387 : vector<8x32xf32>
    %389 = vector.extract_strided_slice %363 {offsets = [96, 0], sizes = [8, 32], strides = [1, 1]} : vector<200x32xf32> to vector<8x32xf32>
    %390 = vector.extract_strided_slice %363 {offsets = [104, 0], sizes = [8, 32], strides = [1, 1]} : vector<200x32xf32> to vector<8x32xf32>
    %391 = vector.extract_strided_slice %363 {offsets = [136, 0], sizes = [8, 32], strides = [1, 1]} : vector<200x32xf32> to vector<8x32xf32>
    %392 = vector.extract_strided_slice %363 {offsets = [144, 0], sizes = [8, 32], strides = [1, 1]} : vector<200x32xf32> to vector<8x32xf32>
    %393 = arith.maximumf %389, %390 : vector<8x32xf32>
    %394 = arith.maximumf %391, %392 : vector<8x32xf32>
    %395 = arith.maximumf %393, %394 : vector<8x32xf32>
    %396 = arith.addf %388, %395 : vector<8x32xf32>
    %cst_206 = arith.constant 2.500000e-01 : f32
    %397 = vector.broadcast %cst_206 : f32 to vector<8x32xf32>
    %398 = arith.mulf %396, %397 : vector<8x32xf32>
    %c0_207 = arith.constant 0 : index
    %c0_208 = arith.constant 0 : index
    %399 = vector.load %arg6[%c0_207, %c0_208] : memref<32x128xf32, #tpu.memory_space<vmem>>, vector<32x128xf32>
    %cst_209 = arith.constant dense<0.000000e+00> : vector<8x128xf32>
    %400 = tpu.matmul %398, %399, %cst_209 {dimension_numbers = #tpu.dot_dimension_numbers<[1], [0], [0], [1], [0, 0, 1, 1], [], []>} : vector<8x32xf32>, vector<32x128xf32>, vector<8x128xf32> -> vector<8x128xf32>
    %c0_210 = arith.constant 0 : index
    %c0_211 = arith.constant 0 : index
    %401 = vector.load %arg7[%c0_210, %c0_211] : memref<1x128xf32, #tpu.memory_space<vmem>>, vector<1x128xf32>
    %402 = vector.broadcast %401 : vector<1x128xf32> to vector<8x128xf32>
    %403 = arith.addf %400, %402 : vector<8x128xf32>
    %cst_212 = arith.constant 0.000000e+00 : f32
    %404 = vector.broadcast %cst_212 : f32 to vector<8x128xf32>
    %405 = arith.subf %404, %403 : vector<8x128xf32>
    %406 = math.exp %405 : vector<8x128xf32>
    %cst_213 = arith.constant 1.000000e+00 : f32
    %407 = vector.broadcast %cst_213 : f32 to vector<8x128xf32>
    %408 = arith.addf %407, %406 : vector<8x128xf32>
    %cst_214 = arith.constant 1.000000e+00 : f32
    %409 = vector.broadcast %cst_214 : f32 to vector<8x128xf32>
    %410 = arith.divf %409, %408 : vector<8x128xf32>
    %c0_215 = arith.constant 0 : index
    %c0_216 = arith.constant 0 : index
    %c0_217 = arith.constant 0 : index
    %411 = vector.load %arg8[%c0_215, %c0_216, %c0_217] : memref<1x8x128xf32, #tpu.memory_space<vmem>>, vector<1x8x128xf32>
    %412 = vector.shape_cast %411 : vector<1x8x128xf32> to vector<8x128xf32>
    %413 = vector.shape_cast %410 : vector<8x128xf32> to vector<1x8x128xf32>
    tpu.vector_store %arg8[%c0_215, %c0_216, %c0_217], %413 {strides = array<i32>} : memref<1x8x128xf32, #tpu.memory_space<vmem>>, vector<1x8x128xf32>,
    return
  }
  func.func @transform_0(%arg0: i32) -> (i32, i32, i32) {
    %c0_i32 = arith.constant 0 : i32
    %c0_i32_0 = arith.constant 0 : i32
    %c0_i32_1 = arith.constant 0 : i32
    return %arg0, %c0_i32, %c0_i32_0 : i32, i32, i32
  }
  func.func @transform_1(%arg0: i32) -> (i32, i32) {
    %c0_i32 = arith.constant 0 : i32
    %c0_i32_0 = arith.constant 0 : i32
    %c0_i32_1 = arith.constant 0 : i32
    return %c0_i32, %c0_i32_0 : i32, i32
  }
  func.func @transform_2(%arg0: i32) -> (i32, i32) {
    %c0_i32 = arith.constant 0 : i32
    %c0_i32_0 = arith.constant 0 : i32
    %c0_i32_1 = arith.constant 0 : i32
    return %c0_i32, %c0_i32_0 : i32, i32
  }
  func.func @transform_3(%arg0: i32) -> (i32, i32, i32) {
    %c0_i32 = arith.constant 0 : i32
    %c0_i32_0 = arith.constant 0 : i32
    %c0_i32_1 = arith.constant 0 : i32
    %c0_i32_2 = arith.constant 0 : i32
    return %c0_i32, %c0_i32_0, %c0_i32_1 : i32, i32, i32
  }
  func.func @transform_4(%arg0: i32) -> (i32, i32) {
    %c0_i32 = arith.constant 0 : i32
    %c0_i32_0 = arith.constant 0 : i32
    %c0_i32_1 = arith.constant 0 : i32
    return %c0_i32, %c0_i32_0 : i32, i32
  }
  func.func @transform_5(%arg0: i32) -> (i32, i32) {
    %c0_i32 = arith.constant 0 : i32
    %c0_i32_0 = arith.constant 0 : i32
    %c0_i32_1 = arith.constant 0 : i32
    return %c0_i32, %c0_i32_0 : i32, i32
  }
  func.func @transform_6(%arg0: i32) -> (i32, i32) {
    %c0_i32 = arith.constant 0 : i32
    %c0_i32_0 = arith.constant 0 : i32
    %c0_i32_1 = arith.constant 0 : i32
    return %c0_i32, %c0_i32_0 : i32, i32
  }
  func.func @transform_7(%arg0: i32) -> (i32, i32, i32) {
    %c0_i32 = arith.constant 0 : i32
    %c0_i32_0 = arith.constant 0 : i32
    %c0_i32_1 = arith.constant 0 : i32
    return %arg0, %c0_i32, %c0_i32_0 : i32, i32, i32
  }
}

</mosaic_0001>

<llo_original>
// kernel: tpu_custom_call.1
$region0: #{tpu_custom_call.1}
  #allocation0 [shape = 'u32[]', space=smem, size = 0x4, offset = 0x4, fixed_abs, tag = 'smem constant byte address 0x4 - core index']
  #allocation1 [shape = 'u32[144,128]{1,0:T(1,128)}', space=vmem, size = 0x12000, scoped, tag = 'internal scratch']
  #allocation2 [shape = 'f32[392,16]{1,0:T(8,128)}', space=vmem, size = 0x31000, scoped, tag = 'scratch operand']
  %s0 = inlined_call_operand.vmem [shape: f32[1,1568,16], index: 0, kind: input, shape index: {}]
  %s1 = inlined_call_operand.vmem [shape: f32[16,16], index: 1, kind: input, shape index: {}]
  %s2 = inlined_call_operand.vmem [shape: f32[1,16], index: 2, kind: input, shape index: {}]
  %s3 = inlined_call_operand.vmem [shape: f32[9,16,32], index: 3, kind: input, shape index: {}]
  %s4 = inlined_call_operand.vmem [shape: f32[1,32], index: 4, kind: input, shape index: {}]
  %s5 = inlined_call_operand.vmem [shape: f32[32,128], index: 5, kind: input, shape index: {}]
  %s6 = inlined_call_operand.vmem [shape: f32[1,128], index: 6, kind: input, shape index: {}]
  %s7 = inlined_call_operand.hbm [shape: f32[1,8,128], index: 7, kind: output, shape index: {}]
  %s8 = sld [smem:[#allocation0]]
  $region38: #{tpu_custom_call.1} parent=0
    _
  %s10 = ssub.s32 1, %s8
  %s11 = scalar_select 0, %s10, %s8
  $region1: #{tpu_custom_call.1} parent=0
    #allocation3 [shape = 'u8[4096]{0}', space=vmem, size = 0x1000, scoped, tag = 'output window, operand 0, single buffered']
    #allocation4 [shape = 's32[1]{0}', space=sflag, size = 0x4, scoped, tag = 'scoped memory for tpu_custom_call.1']
    %12 = vsyncpa [#allocation4], 0
    // Predicated region
    $region2: #{tpu_custom_call.1} parent=1 // pred_check
      _
    $region3: #{tpu_custom_call.1} parent=1 // pred_check_branch
      %14 = sbr.rel (0) target = $region5
    $region4: #{tpu_custom_call.1} parent=1 // pred_region
      _
    $region5: #{tpu_custom_call.1} parent=1 // pred_fallthru
      _
    // Predicated region
    $region6: #{tpu_custom_call.1} parent=1 // pred_check
      _
    $region7: #{tpu_custom_call.1} parent=1 // pred_check_branch
      %16 = sbr.rel (0) target = $region9
    $region8: #{tpu_custom_call.1} parent=1 // pred_region
      _
    $region9: #{tpu_custom_call.1} parent=1 // pred_fallthru
      _
    // Predicated region
    $region10: #{tpu_custom_call.1} parent=1 // pred_check
      _
    $region11: #{tpu_custom_call.1} parent=1 // pred_check_branch
      %18 = sbr.rel (0) target = $region13
    $region12: #{tpu_custom_call.1} parent=1 // pred_region
      _
    $region13: #{tpu_custom_call.1} parent=1 // pred_fallthru
      _
    // Predicated region
    $region14: #{tpu_custom_call.1} parent=1 // pred_check
      _
    $region15: #{tpu_custom_call.1} parent=1 // pred_check_branch
      %20 = sbr.rel (0) target = $region17
    $region16: #{tpu_custom_call.1} parent=1 // pred_region
      _
    $region17: #{tpu_custom_call.1} parent=1 // pred_fallthru
      _
    // Predicated region
    $region18: #{tpu_custom_call.1} parent=1 // pred_check
      _
    $region19: #{tpu_custom_call.1} parent=1 // pred_check_branch
      %22 = sbr.rel (0) target = $region21
    $region20: #{tpu_custom_call.1} parent=1 // pred_region
      _
    $region21: #{tpu_custom_call.1} parent=1 // pred_fallthru
      _
    // Predicated region
    $region22: #{tpu_custom_call.1} parent=1 // pred_check
      _
    $region23: #{tpu_custom_call.1} parent=1 // pred_check_branch
      %24 = sbr.rel (0) target = $region25
    $region24: #{tpu_custom_call.1} parent=1 // pred_region
      _
    $region25: #{tpu_custom_call.1} parent=1 // pred_fallthru
      _
    // Predicated region
    $region26: #{tpu_custom_call.1} parent=1 // pred_check
      _
    $region27: #{tpu_custom_call.1} parent=1 // pred_check_branch
      %26 = sbr.rel (0) target = $region29
    $region28: #{tpu_custom_call.1} parent=1 // pred_region
      _
    $region29: #{tpu_custom_call.1} parent=1 // pred_fallthru
      _
    %v27 = vld [vmem:[%s1] sm:$0xff]
    %v28 = vld [vmem:[%s1 + $0x8] sm:$0xff]
    %v29 = vld [vmem:[%s2] sm:$0x1]
    %v30 = vld [vmem:[%s0] sm:$0xff]
    %v31 = vld [vmem:[%s0 + $0x8] sm:$0xff]
    %v32 = vld [vmem:[%s0 + $0x10] sm:$0xff]
    %v33 = vld [vmem:[%s0 + $0x18] sm:$0xff]
    %v34 = vld [vmem:[%s0 + $0x20] sm:$0xff]
    %v35 = vld [vmem:[%s0 + $0x28] sm:$0xff]
    %v36 = vld [vmem:[%s0 + $0x30] sm:$0xff]
    %v37 = vld [vmem:[%s0 + $0x38] sm:$0xff]
    %v38 = vld [vmem:[%s0 + $0x40] sm:$0xff]
    %v39 = vld [vmem:[%s0 + $0x48] sm:$0xff]
    %v40 = vld [vmem:[%s0 + $0x50] sm:$0xff]
    %v41 = vld [vmem:[%s0 + $0x58] sm:$0xff]
    %v42 = vld [vmem:[%s0 + $0x60] sm:$0xff]
    %v43 = vld [vmem:[%s0 + $0x68] sm:$0xff]
    %v44 = vld [vmem:[%s0 + $0x70] sm:$0xff]
    %v45 = vld [vmem:[%s0 + $0x78] sm:$0xff]
    %v46 = vld [vmem:[%s0 + $0x80] sm:$0xff]
    %v47 = vld [vmem:[%s0 + $0x88] sm:$0xff]
    %v48 = vld [vmem:[%s0 + $0x90] sm:$0xff]
    %v49 = vld [vmem:[%s0 + $0x98] sm:$0xff]
    %v50 = vld [vmem:[%s0 + $0xa0] sm:$0xff]
    %v51 = vld [vmem:[%s0 + $0xa8] sm:$0xff]
    %v52 = vld [vmem:[%s0 + $0xb0] sm:$0xff]
    %v53 = vld [vmem:[%s0 + $0xb8] sm:$0xff]
    %v54 = vld [vmem:[%s0 + $0xc0] sm:$0xff]
    %v55 = vld [vmem:[%s0 + $0xc8] sm:$0xff]
    %v56 = vld [vmem:[%s0 + $0xd0] sm:$0xff]
    %v57 = vld [vmem:[%s0 + $0xd8] sm:$0xff]
    %v59 = vlaneseq
    %v60 = vshrl.u32 %v59, 7
    %v61 = vsub.s32 0, %v60
    %v62 = vrot.slane %v29, %v61
    %vm64 = vcmask 130048
    %v66 = vsel %vm64, %v30, 0
    %v69 = vsel %vm64, %v31, 0
    %v72 = vsel %vm64, %v32, 0
    %v75 = vsel %vm64, %v33, 0
    %v78 = vsel %vm64, %v34, 0
    %v81 = vsel %vm64, %v35, 0
    %v84 = vsel %vm64, %v36, 0
    %v87 = vsel %vm64, %v37, 0
    %v90 = vsel %vm64, %v38, 0
    %v93 = vsel %vm64, %v39, 0
    %v96 = vsel %vm64, %v40, 0
    %v99 = vsel %vm64, %v41, 0
    %v102 = vsel %vm64, %v42, 0
    %v105 = vsel %vm64, %v43, 0
    %v108 = vsel %vm64, %v44, 0
    %v111 = vsel %vm64, %v45, 0
    %v114 = vsel %vm64, %v46, 0
    %v117 = vsel %vm64, %v47, 0
    %v120 = vsel %vm64, %v48, 0
    %v123 = vsel %vm64, %v49, 0
    %v126 = vsel %vm64, %v50, 0
    %v129 = vsel %vm64, %v51, 0
    %v132 = vsel %vm64, %v52, 0
    %v135 = vsel %vm64, %v53, 0
    %v138 = vsel %vm64, %v54, 0
    %v141 = vsel %vm64, %v55, 0
    %v144 = vsel %vm64, %v56, 0
    %v147 = vsel %vm64, %v57, 0
    %149 = vmatprep.subr.mxu0 0.0
    %150 = vmatpush1.msra.mxu0 %v27
    %151 = vmatprep.subr.mxu0 0.0
    %152 = vmatpush1.msra.mxu0 %v28
    %153 = vmatprep.subr.mxu0 0.0
    %154 = vmatpush1.msra.mxu0 0.0
    %155 = vmatprep.subr.mxu0 0.0
    %156 = vmatpush1.msra.mxu0 0.0
    %157 = vmatprep.subr.mxu0 0.0
    %158 = vmatpush1.msra.mxu0 0.0
    %159 = vmatprep.subr.mxu0 0.0
    %160 = vmatpush1.msra.mxu0 0.0
    %161 = vmatprep.subr.mxu0 0.0
    %162 = vmatpush1.msra.mxu0 0.0
    %163 = vmatprep.subr.mxu0 0.0
    %164 = vmatpush1.msra.mxu0 0.0
    %165 = vmatprep.subr.mxu0 0.0
    %166 = vmatpush1.msra.mxu0 0.0
    %167 = vmatprep.subr.mxu0 0.0
    %168 = vmatpush1.msra.mxu0 0.0
    %169 = vmatprep.subr.mxu0 0.0
    %170 = vmatpush1.msra.mxu0 0.0
    %171 = vmatprep.subr.mxu0 0.0
    %172 = vmatpush1.msra.mxu0 0.0
    %173 = vmatprep.subr.mxu0 0.0
    %174 = vmatpush1.msra.mxu0 0.0
    %175 = vmatprep.subr.mxu0 0.0
    %176 = vmatpush1.msra.mxu0 0.0
    %177 = vmatprep.subr.mxu0 0.0
    %178 = vmatpush1.msra.mxu0 0.0
    %179 = vmatprep.subr.mxu0 0.0
    %180 = vmatpush1.msra.mxu0 0.0
    %181 = vmatprep.subr.mxu0 0.0
    %182 = vmatpush1.msra.mxu0 0.0
    %183 = vmatprep.subr.mxu0 0.0
    %184 = vmatpush1.msra.mxu0 0.0
    %185 = vmatprep.subr.mxu0 0.0
    %186 = vmatpush1.msra.mxu0 0.0
    %187 = vmatprep.subr.mxu0 0.0
    %188 = vmatpush1.msra.mxu0 0.0
    %189 = vmatprep.subr.mxu0 0.0
    %190 = vmatpush1.msra.mxu0 0.0
    %191 = vmatprep.subr.mxu0 0.0
    %192 = vmatpush1.msra.mxu0 0.0
    %193 = vmatprep.subr.mxu0 0.0
    %194 = vmatpush1.msra.mxu0 0.0
    %195 = vmatprep.subr.mxu0 0.0
    %196 = vmatpush1.msra.mxu0 0.0
    %197 = vmatprep.subr.mxu0 0.0
    %198 = vmatpush1.msra.mxu0 0.0
    %199 = vmatprep.subr.mxu0 0.0
    %200 = vmatpush1.msra.mxu0 0.0
    %201 = vmatprep.subr.mxu0 0.0
    %202 = vmatpush1.msra.mxu0 0.0
    %203 = vmatprep.subr.mxu0 0.0
    %204 = vmatpush1.msra.mxu0 0.0
    %205 = vmatprep.subr.mxu0 0.0
    %206 = vmatpush1.msra.mxu0 0.0
    %207 = vmatprep.subr.mxu0 0.0
    %208 = vmatpush1.msra.mxu0 0.0
    %209 = vmatprep.subr.mxu0 0.0
    %210 = vmatpush1.msra.mxu0 0.0
    %211 = vmatprep.subr.mxu0 0.0
    %212 = vmatpush1.msra.mxu0 0.0
    %213 = vmatprep.mubr.f32.mxu0 0.0
    %214 = vmatmul.mubr.f32.gmra.mrb[0].mxu0 %v66
    %v215 = vpop.f32.mrb[0].mxu0
    %v216 = vadd.f32 %v62, %v215
    %v217 = vpop.f32.mrb[0].mxu0
    %218 = vmatprep.mubr.f32.mxu0 0.0
    %219 = vmatmul.mubr.f32.gmra.mrb[0].mxu0 %v69
    %v220 = vpop.f32.mrb[0].mxu0
    %v221 = vadd.f32 %v62, %v220
    %v222 = vpop.f32.mrb[0].mxu0
    %223 = vmatprep.mubr.f32.mxu0 0.0
    %224 = vmatmul.mubr.f32.gmra.mrb[0].mxu0 %v72
    %v225 = vpop.f32.mrb[0].mxu0
    %v226 = vadd.f32 %v62, %v225
    %v227 = vpop.f32.mrb[0].mxu0
    %228 = vmatprep.mubr.f32.mxu0 0.0
    %229 = vmatmul.mubr.f32.gmra.mrb[0].mxu0 %v75
    %v230 = vpop.f32.mrb[0].mxu0
    %v231 = vadd.f32 %v62, %v230
    %v232 = vpop.f32.mrb[0].mxu0
    %233 = vmatprep.mubr.f32.mxu0 0.0
    %234 = vmatmul.mubr.f32.gmra.mrb[0].mxu0 %v78
    %v235 = vpop.f32.mrb[0].mxu0
    %v236 = vadd.f32 %v62, %v235
    %v237 = vpop.f32.mrb[0].mxu0
    %238 = vmatprep.mubr.f32.mxu0 0.0
    %239 = vmatmul.mubr.f32.gmra.mrb[0].mxu0 %v81
    %v240 = vpop.f32.mrb[0].mxu0
    %v241 = vadd.f32 %v62, %v240
    %v242 = vpop.f32.mrb[0].mxu0
    %243 = vmatprep.mubr.f32.mxu0 0.0
    %244 = vmatmul.mubr.f32.gmra.mrb[0].mxu0 %v84
    %v245 = vpop.f32.mrb[0].mxu0
    %v246 = vadd.f32 %v62, %v245
    %v247 = vpop.f32.mrb[0].mxu0
    %248 = vmatprep.mubr.f32.mxu0 0.0
    %249 = vmatmul.mubr.f32.gmra.mrb[0].mxu0 %v87
    %v250 = vpop.f32.mrb[0].mxu0
    %v251 = vadd.f32 %v62, %v250
    %v252 = vpop.f32.mrb[0].mxu0
    %253 = vmatprep.mubr.f32.mxu0 0.0
    %254 = vmatmul.mubr.f32.gmra.mrb[0].mxu0 %v90
    %v255 = vpop.f32.mrb[0].mxu0
    %v256 = vadd.f32 %v62, %v255
    %v257 = vpop.f32.mrb[0].mxu0
    %258 = vmatprep.mubr.f32.mxu0 0.0
    %259 = vmatmul.mubr.f32.gmra.mrb[0].mxu0 %v93
    %v260 = vpop.f32.mrb[0].mxu0
    %v261 = vadd.f32 %v62, %v260
    %v262 = vpop.f32.mrb[0].mxu0
    %263 = vmatprep.mubr.f32.mxu0 0.0
    %264 = vmatmul.mubr.f32.gmra.mrb[0].mxu0 %v96
    %v265 = vpop.f32.mrb[0].mxu0
    %v266 = vadd.f32 %v62, %v265
    %v267 = vpop.f32.mrb[0].mxu0
    %268 = vmatprep.mubr.f32.mxu0 0.0
    %269 = vmatmul.mubr.f32.gmra.mrb[0].mxu0 %v99
    %v270 = vpop.f32.mrb[0].mxu0
    %v271 = vadd.f32 %v62, %v270
    %v272 = vpop.f32.mrb[0].mxu0
    %273 = vmatprep.mubr.f32.mxu0 0.0
    %274 = vmatmul.mubr.f32.gmra.mrb[0].mxu0 %v102
    %v275 = vpop.f32.mrb[0].mxu0
    %v276 = vadd.f32 %v62, %v275
    %v277 = vpop.f32.mrb[0].mxu0
    %278 = vmatprep.mubr.f32.mxu0 0.0
    %279 = vmatmul.mubr.f32.gmra.mrb[0].mxu0 %v105
    %v280 = vpop.f32.mrb[0].mxu0
    %v281 = vadd.f32 %v62, %v280
    %v282 = vpop.f32.mrb[0].mxu0
    %283 = vmatprep.mubr.f32.mxu0 0.0
    %284 = vmatmul.mubr.f32.gmra.mrb[0].mxu0 %v108
    %v285 = vpop.f32.mrb[0].mxu0
    %v286 = vadd.f32 %v62, %v285
    %v287 = vpop.f32.mrb[0].mxu0
    %288 = vmatprep.mubr.f32.mxu0 0.0
    %289 = vmatmul.mubr.f32.gmra.mrb[0].mxu0 %v111
    %v290 = vpop.f32.mrb[0].mxu0
    %v291 = vadd.f32 %v62, %v290
    %v292 = vpop.f32.mrb[0].mxu0
    %293 = vmatprep.mubr.f32.mxu0 0.0
    %294 = vmatmul.mubr.f32.gmra.mrb[0].mxu0 %v114
    %v295 = vpop.f32.mrb[0].mxu0
    %v296 = vadd.f32 %v62, %v295
    %v297 = vpop.f32.mrb[0].mxu0
    %298 = vmatprep.mubr.f32.mxu0 0.0
    %299 = vmatmul.mubr.f32.gmra.mrb[0].mxu0 %v117
    %v300 = vpop.f32.mrb[0].mxu0
    %v301 = vadd.f32 %v62, %v300
    %v302 = vpop.f32.mrb[0].mxu0
    %303 = vmatprep.mubr.f32.mxu0 0.0
    %304 = vmatmul.mubr.f32.gmra.mrb[0].mxu0 %v120
    %v305 = vpop.f32.mrb[0].mxu0
    %v306 = vadd.f32 %v62, %v305
    %v307 = vpop.f32.mrb[0].mxu0
    %308 = vmatprep.mubr.f32.mxu0 0.0
    %309 = vmatmul.mubr.f32.gmra.mrb[0].mxu0 %v123
    %v310 = vpop.f32.mrb[0].mxu0
    %v311 = vadd.f32 %v62, %v310
    %v312 = vpop.f32.mrb[0].mxu0
    %313 = vmatprep.mubr.f32.mxu0 0.0
    %314 = vmatmul.mubr.f32.gmra.mrb[0].mxu0 %v126
    %v315 = vpop.f32.mrb[0].mxu0
    %v316 = vadd.f32 %v62, %v315
    %v317 = vpop.f32.mrb[0].mxu0
    %318 = vmatprep.mubr.f32.mxu0 0.0
    %319 = vmatmul.mubr.f32.gmra.mrb[0].mxu0 %v129
    %v320 = vpop.f32.mrb[0].mxu0
    %v321 = vadd.f32 %v62, %v320
    %v322 = vpop.f32.mrb[0].mxu0
    %323 = vmatprep.mubr.f32.mxu0 0.0
    %324 = vmatmul.mubr.f32.gmra.mrb[0].mxu0 %v132
    %v325 = vpop.f32.mrb[0].mxu0
    %v326 = vadd.f32 %v62, %v325
    %v327 = vpop.f32.mrb[0].mxu0
    %328 = vmatprep.mubr.f32.mxu0 0.0
    %329 = vmatmul.mubr.f32.gmra.mrb[0].mxu0 %v135
    %v330 = vpop.f32.mrb[0].mxu0
    %v331 = vadd.f32 %v62, %v330
    %v332 = vpop.f32.mrb[0].mxu0
    %333 = vmatprep.mubr.f32.mxu0 0.0
    %334 = vmatmul.mubr.f32.gmra.mrb[0].mxu0 %v138
    %v335 = vpop.f32.mrb[0].mxu0
    %v336 = vadd.f32 %v62, %v335
    %v337 = vpop.f32.mrb[0].mxu0
    %338 = vmatprep.mubr.f32.mxu0 0.0
    %339 = vmatmul.mubr.f32.gmra.mrb[0].mxu0 %v141
    %v340 = vpop.f32.mrb[0].mxu0
    %v341 = vadd.f32 %v62, %v340
    %v342 = vpop.f32.mrb[0].mxu0
    %343 = vmatprep.mubr.f32.mxu0 0.0
    %344 = vmatmul.mubr.f32.gmra.mrb[0].mxu0 %v144
    %v345 = vpop.f32.mrb[0].mxu0
    %v346 = vadd.f32 %v62, %v345
    %v347 = vpop.f32.mrb[0].mxu0
    %348 = vmatprep.mubr.f32.mxu0 0.0
    %349 = vmatmul.mubr.f32.gmra.mrb[0].mxu0 %v147
    %v350 = vpop.f32.mrb[0].mxu0
    %v351 = vadd.f32 %v62, %v350
    %v352 = vpop.f32.mrb[0].mxu0
    %353 = vdwg.mxu0
    %v354 = vmax.f32 %v216, 0.0
    %v355 = vmax.f32 %v221, 0.0
    %v356 = vmax.f32 %v226, 0.0
    %v357 = vmax.f32 %v231, 0.0
    %v358 = vmax.f32 %v236, 0.0
    %v359 = vmax.f32 %v241, 0.0
    %v360 = vmax.f32 %v246, 0.0
    %v361 = vmax.f32 %v251, 0.0
    %v362 = vmax.f32 %v256, 0.0
    %v363 = vmax.f32 %v261, 0.0
    %v364 = vmax.f32 %v266, 0.0
    %v365 = vmax.f32 %v271, 0.0
    %v366 = vmax.f32 %v276, 0.0
    %v367 = vmax.f32 %v281, 0.0
    %v368 = vmax.f32 %v286, 0.0
    %v369 = vmax.f32 %v291, 0.0
    %v370 = vmax.f32 %v296, 0.0
    %v371 = vmax.f32 %v301, 0.0
    %v372 = vmax.f32 %v306, 0.0
    %v373 = vmax.f32 %v311, 0.0
    %v374 = vmax.f32 %v316, 0.0
    %v375 = vmax.f32 %v321, 0.0
    %v376 = vmax.f32 %v326, 0.0
    %v377 = vmax.f32 %v331, 0.0
    %v378 = vmax.f32 %v336, 0.0
    %v379 = vmax.f32 %v341, 0.0
    %v380 = vmax.f32 %v346, 0.0
    %v381 = vmax.f32 %v351, 0.0
    %v382 = vmax.f32 %v354, %v368
    %v383 = vmax.f32 %v355, %v369
    %v384 = vmax.f32 %v356, %v370
    %v385 = vmax.f32 %v357, %v371
    %v386 = vmax.f32 %v358, %v372
    %v387 = vmax.f32 %v359, %v373
    %v388 = vmax.f32 %v360, %v374
    %v389 = vmax.f32 %v361, %v375
    %v390 = vmax.f32 %v362, %v376
    %v391 = vmax.f32 %v363, %v377
    %v392 = vmax.f32 %v364, %v378
    %v393 = vmax.f32 %v365, %v379
    %v394 = vmax.f32 %v366, %v380
    %v395 = vmax.f32 %v367, %v381
    %v396 = vmax.f32 %v382, %v383
    %397 = vst.msk [vmem:[#allocation2] sm:$0xff] %vm64, %v396
    %v398 = vmax.f32 %v384, %v385
    %399 = vst.msk [vmem:[#allocation2 + $0x8] sm:$0xff] %vm64, %v398
    %v400 = vmax.f32 %v386, %v387
    %401 = vst.msk [vmem:[#allocation2 + $0x10] sm:$0xff] %vm64, %v400
    %v402 = vmax.f32 %v388, %v389
    %403 = vst.msk [vmem:[#allocation2 + $0x18] sm:$0xff] %vm64, %v402
    %v404 = vmax.f32 %v390, %v391
    %405 = vst.msk [vmem:[#allocation2 + $0x20] sm:$0xff] %vm64, %v404
    %v406 = vmax.f32 %v392, %v393
    %407 = vst.msk [vmem:[#allocation2 + $0x28] sm:$0xff] %vm64, %v406
    %v408 = vmax.f32 %v394, %v395
    %409 = vst.msk [vmem:[#allocation2 + $0x30] sm:$0xff] %vm64, %v408
    %v410 = vld [vmem:[%s0 + $0xe0] sm:$0xff]
    %v411 = vld [vmem:[%s0 + $0xe8] sm:$0xff]
    %v412 = vld [vmem:[%s0 + $0xf0] sm:$0xff]
    %v413 = vld [vmem:[%s0 + $0xf8] sm:$0xff]
    %v414 = vld [vmem:[%s0 + $0x100] sm:$0xff]
    %v415 = vld [vmem:[%s0 + $0x108] sm:$0xff]
    %v416 = vld [vmem:[%s0 + $0x110] sm:$0xff]
    %v417 = vld [vmem:[%s0 + $0x118] sm:$0xff]
    %v418 = vld [vmem:[%s0 + $0x120] sm:$0xff]
    %v419 = vld [vmem:[%s0 + $0x128] sm:$0xff]
    %v420 = vld [vmem:[%s0 + $0x130] sm:$0xff]
    %v421 = vld [vmem:[%s0 + $0x138] sm:$0xff]
    %v422 = vld [vmem:[%s0 + $0x140] sm:$0xff]
    %v423 = vld [vmem:[%s0 + $0x148] sm:$0xff]
    %v424 = vld [vmem:[%s0 + $0x150] sm:$0xff]
    %v425 = vld [vmem:[%s0 + $0x158] sm:$0xff]
    %v426 = vld [vmem:[%s0 + $0x160] sm:$0xff]
    %v427 = vld [vmem:[%s0 + $0x168] sm:$0xff]
    %v428 = vld [vmem:[%s0 + $0x170] sm:$0xff]
    %v429 = vld [vmem:[%s0 + $0x178] sm:$0xff]
    %v430 = vld [vmem:[%s0 + $0x180] sm:$0xff]
    %v431 = vld [vmem:[%s0 + $0x188] sm:$0xff]
    %v432 = vld [vmem:[%s0 + $0x190] sm:$0xff]
    %v433 = vld [vmem:[%s0 + $0x198] sm:$0xff]
    %v434 = vld [vmem:[%s0 + $0x1a0] sm:$0xff]
    %v435 = vld [vmem:[%s0 + $0x1a8] sm:$0xff]
    %v436 = vld [vmem:[%s0 + $0x1b0] sm:$0xff]
    %v437 = vld [vmem:[%s0 + $0x1b8] sm:$0xff]
    %v439 = vsel %vm64, %v410, 0
    %v442 = vsel %vm64, %v411, 0
    %v445 = vsel %vm64, %v412, 0
    %v448 = vsel %vm64, %v413, 0
    %v451 = vsel %vm64, %v414, 0
    %v454 = vsel %vm64, %v415, 0
    %v457 = vsel %vm64, %v416, 0
    %v460 = vsel %vm64, %v417, 0
    %v463 = vsel %vm64, %v418, 0
    %v466 = vsel %vm64, %v419, 0
    %v469 = vsel %vm64, %v420, 0
    %v472 = vsel %vm64, %v421, 0
    %v475 = vsel %vm64, %v422, 0
    %v478 = vsel %vm64, %v423, 0
    %v481 = vsel %vm64, %v424, 0
    %v484 = vsel %vm64, %v425, 0
    %v487 = vsel %vm64, %v426, 0
    %v490 = vsel %vm64, %v427, 0
    %v493 = vsel %vm64, %v428, 0
    %v496 = vsel %vm64, %v429, 0
    %v499 = vsel %vm64, %v430, 0
    %v502 = vsel %vm64, %v431, 0
    %v505 = vsel %vm64, %v432, 0
    %v508 = vsel %vm64, %v433, 0
    %v511 = vsel %vm64, %v434, 0
    %v514 = vsel %vm64, %v435, 0
    %v517 = vsel %vm64, %v436, 0
    %v520 = vsel %vm64, %v437, 0
    %522 = vmatprep.subr.mxu0 0.0
    %523 = vmatpush1.msra.mxu0 %v27
    %524 = vmatprep.subr.mxu0 0.0
    %525 = vmatpush1.msra.mxu0 %v28
    %526 = vmatprep.subr.mxu0 0.0
    %527 = vmatpush1.msra.mxu0 0.0
    %528 = vmatprep.subr.mxu0 0.0
    %529 = vmatpush1.msra.mxu0 0.0
    %530 = vmatprep.subr.mxu0 0.0
    %531 = vmatpush1.msra.mxu0 0.0
    %532 = vmatprep.subr.mxu0 0.0
    %533 = vmatpush1.msra.mxu0 0.0
    %534 = vmatprep.subr.mxu0 0.0
    %535 = vmatpush1.msra.mxu0 0.0
    %536 = vmatprep.subr.mxu0 0.0
    %537 = vmatpush1.msra.mxu0 0.0
    %538 = vmatprep.subr.mxu0 0.0
    %539 = vmatpush1.msra.mxu0 0.0
    %540 = vmatprep.subr.mxu0 0.0
    %541 = vmatpush1.msra.mxu0 0.0
    %542 = vmatprep.subr.mxu0 0.0
    %543 = vmatpush1.msra.mxu0 0.0
    %544 = vmatprep.subr.mxu0 0.0
    %545 = vmatpush1.msra.mxu0 0.0
    %546 = vmatprep.subr.mxu0 0.0
    %547 = vmatpush1.msra.mxu0 0.0
    %548 = vmatprep.subr.mxu0 0.0
    %549 = vmatpush1.msra.mxu0 0.0
    %550 = vmatprep.subr.mxu0 0.0
    %551 = vmatpush1.msra.mxu0 0.0
    %552 = vmatprep.subr.mxu0 0.0
    %553 = vmatpush1.msra.mxu0 0.0
    %554 = vmatprep.subr.mxu0 0.0
    %555 = vmatpush1.msra.mxu0 0.0
    %556 = vmatprep.subr.mxu0 0.0
    %557 = vmatpush1.msra.mxu0 0.0
    %558 = vmatprep.subr.mxu0 0.0
    %559 = vmatpush1.msra.mxu0 0.0
    %560 = vmatprep.subr.mxu0 0.0
    %561 = vmatpush1.msra.mxu0 0.0
    %562 = vmatprep.subr.mxu0 0.0
    %563 = vmatpush1.msra.mxu0 0.0
    %564 = vmatprep.subr.mxu0 0.0
    %565 = vmatpush1.msra.mxu0 0.0
    %566 = vmatprep.subr.mxu0 0.0
    %567 = vmatpush1.msra.mxu0 0.0
    %568 = vmatprep.subr.mxu0 0.0
    %569 = vmatpush1.msra.mxu0 0.0
    %570 = vmatprep.subr.mxu0 0.0
    %571 = vmatpush1.msra.mxu0 0.0
    %572 = vmatprep.subr.mxu0 0.0
    %573 = vmatpush1.msra.mxu0 0.0
    %574 = vmatprep.subr.mxu0 0.0
    %575 = vmatpush1.msra.mxu0 0.0
    %576 = vmatprep.subr.mxu0 0.0
    %577 = vmatpush1.msra.mxu0 0.0
    %578 = vmatprep.subr.mxu0 0.0
    %579 = vmatpush1.msra.mxu0 0.0
    %580 = vmatprep.subr.mxu0 0.0
    %581 = vmatpush1.msra.mxu0 0.0
    %582 = vmatprep.subr.mxu0 0.0
    %583 = vmatpush1.msra.mxu0 0.0
    %584 = vmatprep.subr.mxu0 0.0
    %585 = vmatpush1.msra.mxu0 0.0
    %586 = vmatprep.mubr.f32.mxu0 0.0
    %587 = vmatmul.mubr.f32.gmra.mrb[0].mxu0 %v439
    %v588 = vpop.f32.mrb[0].mxu0
    %v589 = vadd.f32 %v62, %v588
    %v590 = vpop.f32.mrb[0].mxu0
    %591 = vmatprep.mubr.f32.mxu0 0.0
    %592 = vmatmul.mubr.f32.gmra.mrb[0].mxu0 %v442
    %v593 = vpop.f32.mrb[0].mxu0
    %v594 = vadd.f32 %v62, %v593
    %v595 = vpop.f32.mrb[0].mxu0
    %596 = vmatprep.mubr.f32.mxu0 0.0
    %597 = vmatmul.mubr.f32.gmra.mrb[0].mxu0 %v445
    %v598 = vpop.f32.mrb[0].mxu0
    %v599 = vadd.f32 %v62, %v598
    %v600 = vpop.f32.mrb[0].mxu0
    %601 = vmatprep.mubr.f32.mxu0 0.0
    %602 = vmatmul.mubr.f32.gmra.mrb[0].mxu0 %v448
    %v603 = vpop.f32.mrb[0].mxu0
    %v604 = vadd.f32 %v62, %v603
    %v605 = vpop.f32.mrb[0].mxu0
    %606 = vmatprep.mubr.f32.mxu0 0.0
    %607 = vmatmul.mubr.f32.gmra.mrb[0].mxu0 %v451
    %v608 = vpop.f32.mrb[0].mxu0
    %v609 = vadd.f32 %v62, %v608
    %v610 = vpop.f32.mrb[0].mxu0
    %611 = vmatprep.mubr.f32.mxu0 0.0
    %612 = vmatmul.mubr.f32.gmra.mrb[0].mxu0 %v454
    %v613 = vpop.f32.mrb[0].mxu0
    %v614 = vadd.f32 %v62, %v613
    %v615 = vpop.f32.mrb[0].mxu0
    %616 = vmatprep.mubr.f32.mxu0 0.0
    %617 = vmatmul.mubr.f32.gmra.mrb[0].mxu0 %v457
    %v618 = vpop.f32.mrb[0].mxu0
    %v619 = vadd.f32 %v62, %v618
    %v620 = vpop.f32.mrb[0].mxu0
    %621 = vmatprep.mubr.f32.mxu0 0.0
    %622 = vmatmul.mubr.f32.gmra.mrb[0].mxu0 %v460
    %v623 = vpop.f32.mrb[0].mxu0
    %v624 = vadd.f32 %v62, %v623
    %v625 = vpop.f32.mrb[0].mxu0
    %626 = vmatprep.mubr.f32.mxu0 0.0
    %627 = vmatmul.mubr.f32.gmra.mrb[0].mxu0 %v463
    %v628 = vpop.f32.mrb[0].mxu0
    %v629 = vadd.f32 %v62, %v628
    %v630 = vpop.f32.mrb[0].mxu0
    %631 = vmatprep.mubr.f32.mxu0 0.0
    %632 = vmatmul.mubr.f32.gmra.mrb[0].mxu0 %v466
    %v633 = vpop.f32.mrb[0].mxu0
    %v634 = vadd.f32 %v62, %v633
    %v635 = vpop.f32.mrb[0].mxu0
    %636 = vmatprep.mubr.f32.mxu0 0.0
    %637 = vmatmul.mubr.f32.gmra.mrb[0].mxu0 %v469
    %v638 = vpop.f32.mrb[0].mxu0
    %v639 = vadd.f32 %v62, %v638
    %v640 = vpop.f32.mrb[0].mxu0
    %641 = vmatprep.mubr.f32.mxu0 0.0
    %642 = vmatmul.mubr.f32.gmra.mrb[0].mxu0 %v472
    %v643 = vpop.f32.mrb[0].mxu0
    %v644 = vadd.f32 %v62, %v643
    %v645 = vpop.f32.mrb[0].mxu0
    %646 = vmatprep.mubr.f32.mxu0 0.0
    %647 = vmatmul.mubr.f32.gmra.mrb[0].mxu0 %v475
    %v648 = vpop.f32.mrb[0].mxu0
    %v649 = vadd.f32 %v62, %v648
    %v650 = vpop.f32.mrb[0].mxu0
    %651 = vmatprep.mubr.f32.mxu0 0.0
    %652 = vmatmul.mubr.f32.gmra.mrb[0].mxu0 %v478
    %v653 = vpop.f32.mrb[0].mxu0
    %v654 = vadd.f32 %v62, %v653
    %v655 = vpop.f32.mrb[0].mxu0
    %656 = vmatprep.mubr.f32.mxu0 0.0
    %657 = vmatmul.mubr.f32.gmra.mrb[0].mxu0 %v481
    %v658 = vpop.f32.mrb[0].mxu0
    %v659 = vadd.f32 %v62, %v658
    %v660 = vpop.f32.mrb[0].mxu0
    %661 = vmatprep.mubr.f32.mxu0 0.0
    %662 = vmatmul.mubr.f32.gmra.mrb[0].mxu0 %v484
    %v663 = vpop.f32.mrb[0].mxu0
    %v664 = vadd.f32 %v62, %v663
    %v665 = vpop.f32.mrb[0].mxu0
    %666 = vmatprep.mubr.f32.mxu0 0.0
    %667 = vmatmul.mubr.f32.gmra.mrb[0].mxu0 %v487
    %v668 = vpop.f32.mrb[0].mxu0
    %v669 = vadd.f32 %v62, %v668
    %v670 = vpop.f32.mrb[0].mxu0
    %671 = vmatprep.mubr.f32.mxu0 0.0
    %672 = vmatmul.mubr.f32.gmra.mrb[0].mxu0 %v490
    %v673 = vpop.f32.mrb[0].mxu0
    %v674 = vadd.f32 %v62, %v673
    %v675 = vpop.f32.mrb[0].mxu0
    %676 = vmatprep.mubr.f32.mxu0 0.0
    %677 = vmatmul.mubr.f32.gmra.mrb[0].mxu0 %v493
    %v678 = vpop.f32.mrb[0].mxu0
    %v679 = vadd.f32 %v62, %v678
    %v680 = vpop.f32.mrb[0].mxu0
    %681 = vmatprep.mubr.f32.mxu0 0.0
    %682 = vmatmul.mubr.f32.gmra.mrb[0].mxu0 %v496
    %v683 = vpop.f32.mrb[0].mxu0
    %v684 = vadd.f32 %v62, %v683
    %v685 = vpop.f32.mrb[0].mxu0
    %686 = vmatprep.mubr.f32.mxu0 0.0
    %687 = vmatmul.mubr.f32.gmra.mrb[0].mxu0 %v499
    %v688 = vpop.f32.mrb[0].mxu0
    %v689 = vadd.f32 %v62, %v688
    %v690 = vpop.f32.mrb[0].mxu0
    %691 = vmatprep.mubr.f32.mxu0 0.0
    %692 = vmatmul.mubr.f32.gmra.mrb[0].mxu0 %v502
    %v693 = vpop.f32.mrb[0].mxu0
    %v694 = vadd.f32 %v62, %v693
    %v695 = vpop.f32.mrb[0].mxu0
    %696 = vmatprep.mubr.f32.mxu0 0.0
    %697 = vmatmul.mubr.f32.gmra.mrb[0].mxu0 %v505
    %v698 = vpop.f32.mrb[0].mxu0
    %v699 = vadd.f32 %v62, %v698
    %v700 = vpop.f32.mrb[0].mxu0
    %701 = vmatprep.mubr.f32.mxu0 0.0
    %702 = vmatmul.mubr.f32.gmra.mrb[0].mxu0 %v508
    %v703 = vpop.f32.mrb[0].mxu0
    %v704 = vadd.f32 %v62, %v703
    %v705 = vpop.f32.mrb[0].mxu0
    %706 = vmatprep.mubr.f32.mxu0 0.0
    %707 = vmatmul.mubr.f32.gmra.mrb[0].mxu0 %v511
    %v708 = vpop.f32.mrb[0].mxu0
    %v709 = vadd.f32 %v62, %v708
    %v710 = vpop.f32.mrb[0].mxu0
    %711 = vmatprep.mubr.f32.mxu0 0.0
    %712 = vmatmul.mubr.f32.gmra.mrb[0].mxu0 %v514
    %v713 = vpop.f32.mrb[0].mxu0
    %v714 = vadd.f32 %v62, %v713
    %v715 = vpop.f32.mrb[0].mxu0
    %716 = vmatprep.mubr.f32.mxu0 0.0
    %717 = vmatmul.mubr.f32.gmra.mrb[0].mxu0 %v517
    %v718 = vpop.f32.mrb[0].mxu0
    %v719 = vadd.f32 %v62, %v718
    %v720 = vpop.f32.mrb[0].mxu0
    %721 = vmatprep.mubr.f32.mxu0 0.0
    %722 = vmatmul.mubr.f32.gmra.mrb[0].mxu0 %v520
    %v723 = vpop.f32.mrb[0].mxu0
    %v724 = vadd.f32 %v62, %v723
    %v725 = vpop.f32.mrb[0].mxu0
    %726 = vdwg.mxu0
    %v727 = vmax.f32 %v589, 0.0
    %v728 = vmax.f32 %v594, 0.0
    %v729 = vmax.f32 %v599, 0.0
    %v730 = vmax.f32 %v604, 0.0
    %v731 = vmax.f32 %v609, 0.0
    %v732 = vmax.f32 %v614, 0.0
    %v733 = vmax.f32 %v619, 0.0
    %v734 = vmax.f32 %v624, 0.0
    %v735 = vmax.f32 %v629, 0.0
    %v736 = vmax.f32 %v634, 0.0
    %v737 = vmax.f32 %v639, 0.0
    %v738 = vmax.f32 %v644, 0.0
    %v739 = vmax.f32 %v649, 0.0
    %v740 = vmax.f32 %v654, 0.0
    %v741 = vmax.f32 %v659, 0.0
    %v742 = vmax.f32 %v664, 0.0
    %v743 = vmax.f32 %v669, 0.0
    %v744 = vmax.f32 %v674, 0.0
    %v745 = vmax.f32 %v679, 0.0
    %v746 = vmax.f32 %v684, 0.0
    %v747 = vmax.f32 %v689, 0.0
    %v748 = vmax.f32 %v694, 0.0
    %v749 = vmax.f32 %v699, 0.0
    %v750 = vmax.f32 %v704, 0.0
    %v751 = vmax.f32 %v709, 0.0
    %v752 = vmax.f32 %v714, 0.0
    %v753 = vmax.f32 %v719, 0.0
    %v754 = vmax.f32 %v724, 0.0
    %v755 = vmax.f32 %v727, %v741
    %v756 = vmax.f32 %v728, %v742
    %v757 = vmax.f32 %v729, %v743
    %v758 = vmax.f32 %v730, %v744
    %v759 = vmax.f32 %v731, %v745
    %v760 = vmax.f32 %v732, %v746
    %v761 = vmax.f32 %v733, %v747
    %v762 = vmax.f32 %v734, %v748
    %v763 = vmax.f32 %v735, %v749
    %v764 = vmax.f32 %v736, %v750
    %v765 = vmax.f32 %v737, %v751
    %v766 = vmax.f32 %v738, %v752
    %v767 = vmax.f32 %v739, %v753
    %v768 = vmax.f32 %v740, %v754
    %v769 = vmax.f32 %v755, %v756
    %770 = vst.msk [vmem:[#allocation2 + $0x38] sm:$0xff] %vm64, %v769
    %v771 = vmax.f32 %v757, %v758
    %772 = vst.msk [vmem:[#allocation2 + $0x40] sm:$0xff] %vm64, %v771
    %v773 = vmax.f32 %v759, %v760
    %774 = vst.msk [vmem:[#allocation2 + $0x48] sm:$0xff] %vm64, %v773
    %v775 = vmax.f32 %v761, %v762
    %776 = vst.msk [vmem:[#allocation2 + $0x50] sm:$0xff] %vm64, %v775
    %v777 = vmax.f32 %v763, %v764
    %778 = vst.msk [vmem:[#allocation2 + $0x58] sm:$0xff] %vm64, %v777
    %v779 = vmax.f32 %v765, %v766
    %780 = vst.msk [vmem:[#allocation2 + $0x60] sm:$0xff] %vm64, %v779
    %v781 = vmax.f32 %v767, %v768
    %782 = vst.msk [vmem:[#allocation2 + $0x68] sm:$0xff] %vm64, %v781
    %v783 = vld [vmem:[%s0 + $0x1c0] sm:$0xff]
    %v784 = vld [vmem:[%s0 + $0x1c8] sm:$0xff]
    %v785 = vld [vmem:[%s0 + $0x1d0] sm:$0xff]
    %v786 = vld [vmem:[%s0 + $0x1d8] sm:$0xff]
    %v787 = vld [vmem:[%s0 + $0x1e0] sm:$0xff]
    %v788 = vld [vmem:[%s0 + $0x1e8] sm:$0xff]
    %v789 = vld [vmem:[%s0 + $0x1f0] sm:$0xff]
    %v790 = vld [vmem:[%s0 + $0x1f8] sm:$0xff]
    %v791 = vld [vmem:[%s0 + $0x200] sm:$0xff]
    %v792 = vld [vmem:[%s0 + $0x208] sm:$0xff]
    %v793 = vld [vmem:[%s0 + $0x210] sm:$0xff]
    %v794 = vld [vmem:[%s0 + $0x218] sm:$0xff]
    %v795 = vld [vmem:[%s0 + $0x220] sm:$0xff]
    %v796 = vld [vmem:[%s0 + $0x228] sm:$0xff]
    %v797 = vld [vmem:[%s0 + $0x230] sm:$0xff]
    %v798 = vld [vmem:[%s0 + $0x238] sm:$0xff]
    %v799 = vld [vmem:[%s0 + $0x240] sm:$0xff]
    %v800 = vld [vmem:[%s0 + $0x248] sm:$0xff]
    %v801 = vld [vmem:[%s0 + $0x250] sm:$0xff]
    %v802 = vld [vmem:[%s0 + $0x258] sm:$0xff]
    %v803 = vld [vmem:[%s0 + $0x260] sm:$0xff]
    %v804 = vld [vmem:[%s0 + $0x268] sm:$0xff]
    %v805 = vld [vmem:[%s0 + $0x270] sm:$0xff]
    %v806 = vld [vmem:[%s0 + $0x278] sm:$0xff]
    %v807 = vld [vmem:[%s0 + $0x280] sm:$0xff]
    %v808 = vld [vmem:[%s0 + $0x288] sm:$0xff]
    %v809 = vld [vmem:[%s0 + $0x290] sm:$0xff]
    %v810 = vld [vmem:[%s0 + $0x298] sm:$0xff]
    %v812 = vsel %vm64, %v783, 0
    %v815 = vsel %vm64, %v784, 0
    %v818 = vsel %vm64, %v785, 0
    %v821 = vsel %vm64, %v786, 0
    %v824 = vsel %vm64, %v787, 0
    %v827 = vsel %vm64, %v788, 0
    %v830 = vsel %vm64, %v789, 0
    %v833 = vsel %vm64, %v790, 0
    %v836 = vsel %vm64, %v791, 0
    %v839 = vsel %vm64, %v792, 0
    %v842 = vsel %vm64, %v793, 0
    %v845 = vsel %vm64, %v794, 0
    %v848 = vsel %vm64, %v795, 0
    %v851 = vsel %vm64, %v796, 0
    %v854 = vsel %vm64, %v797, 0
    %v857 = vsel %vm64, %v798, 0
    %v860 = vsel %vm64, %v799, 0
    %v863 = vsel %vm64, %v800, 0
    %v866 = vsel %vm64, %v801, 0
    %v869 = vsel %vm64, %v802, 0
    %v872 = vsel %vm64, %v803, 0
    %v875 = vsel %vm64, %v804, 0
    %v878 = vsel %vm64, %v805, 0
    %v881 = vsel %vm64, %v806, 0
    %v884 = vsel %vm64, %v807, 0
    %v887 = vsel %vm64, %v808, 0
    %v890 = vsel %vm64, %v809, 0
    %v893 = vsel %vm64, %v810, 0
    %895 = vmatprep.subr.mxu0 0.0
    %896 = vmatpush1.msra.mxu0 %v27
    %897 = vmatprep.subr.mxu0 0.0
    %898 = vmatpush1.msra.mxu0 %v28
    %899 = vmatprep.subr.mxu0 0.0
    %900 = vmatpush1.msra.mxu0 0.0
    %901 = vmatprep.subr.mxu0 0.0
    %902 = vmatpush1.msra.mxu0 0.0
    %903 = vmatprep.subr.mxu0 0.0
    %904 = vmatpush1.msra.mxu0 0.0
    %905 = vmatprep.subr.mxu0 0.0
    %906 = vmatpush1.msra.mxu0 0.0
    %907 = vmatprep.subr.mxu0 0.0
    %908 = vmatpush1.msra.mxu0 0.0
    %909 = vmatprep.subr.mxu0 0.0
    %910 = vmatpush1.msra.mxu0 0.0
    %911 = vmatprep.subr.mxu0 0.0
    %912 = vmatpush1.msra.mxu0 0.0
    %913 = vmatprep.subr.mxu0 0.0
    %914 = vmatpush1.msra.mxu0 0.0
    %915 = vmatprep.subr.mxu0 0.0
    %916 = vmatpush1.msra.mxu0 0.0
    %917 = vmatprep.subr.mxu0 0.0
    %918 = vmatpush1.msra.mxu0 0.0
    %919 = vmatprep.subr.mxu0 0.0
    %920 = vmatpush1.msra.mxu0 0.0
    %921 = vmatprep.subr.mxu0 0.0
    %922 = vmatpush1.msra.mxu0 0.0
    %923 = vmatprep.subr.mxu0 0.0
    %924 = vmatpush1.msra.mxu0 0.0
    %925 = vmatprep.subr.mxu0 0.0
    %926 = vmatpush1.msra.mxu0 0.0
    %927 = vmatprep.subr.mxu0 0.0
    %928 = vmatpush1.msra.mxu0 0.0
    %929 = vmatprep.subr.mxu0 0.0
    %930 = vmatpush1.msra.mxu0 0.0
    %931 = vmatprep.subr.mxu0 0.0
    %932 = vmatpush1.msra.mxu0 0.0
    %933 = vmatprep.subr.mxu0 0.0
    %934 = vmatpush1.msra.mxu0 0.0
    %935 = vmatprep.subr.mxu0 0.0
    %936 = vmatpush1.msra.mxu0 0.0
    %937 = vmatprep.subr.mxu0 0.0
    %938 = vmatpush1.msra.mxu0 0.0
    %939 = vmatprep.subr.mxu0 0.0
    %940 = vmatpush1.msra.mxu0 0.0
    %941 = vmatprep.subr.mxu0 0.0
    %942 = vmatpush1.msra.mxu0 0.0
    %943 = vmatprep.subr.mxu0 0.0
    %944 = vmatpush1.msra.mxu0 0.0
    %945 = vmatprep.subr.mxu0 0.0
    %946 = vmatpush1.msra.mxu0 0.0
    %947 = vmatprep.subr.mxu0 0.0
    %948 = vmatpush1.msra.mxu0 0.0
    %949 = vmatprep.subr.mxu0 0.0
    %950 = vmatpush1.msra.mxu0 0.0
    %951 = vmatprep.subr.mxu0 0.0
    %952 = vmatpush1.msra.mxu0 0.0
    %953 = vmatprep.subr.mxu0 0.0
    %954 = vmatpush1.msra.mxu0 0.0
    %955 = vmatprep.subr.mxu0 0.0
    %956 = vmatpush1.msra.mxu0 0.0
    %957 = vmatprep.subr.mxu0 0.0
    %958 = vmatpush1.msra.mxu0 0.0
    %959 = vmatprep.mubr.f32.mxu0 0.0
    %960 = vmatmul.mubr.f32.gmra.mrb[0].mxu0 %v812
    %v961 = vpop.f32.mrb[0].mxu0
    %v962 = vadd.f32 %v62, %v961
    %v963 = vpop.f32.mrb[0].mxu0
    %964 = vmatprep.mubr.f32.mxu0 0.0
    %965 = vmatmul.mubr.f32.gmra.mrb[0].mxu0 %v815
    %v966 = vpop.f32.mrb[0].mxu0
    %v967 = vadd.f32 %v62, %v966
    %v968 = vpop.f32.mrb[0].mxu0
    %969 = vmatprep.mubr.f32.mxu0 0.0
    %970 = vmatmul.mubr.f32.gmra.mrb[0].mxu0 %v818
    %v971 = vpop.f32.mrb[0].mxu0
    %v972 = vadd.f32 %v62, %v971
    %v973 = vpop.f32.mrb[0].mxu0
    %974 = vmatprep.mubr.f32.mxu0 0.0
    %975 = vmatmul.mubr.f32.gmra.mrb[0].mxu0 %v821
    %v976 = vpop.f32.mrb[0].mxu0
    %v977 = vadd.f32 %v62, %v976
    %v978 = vpop.f32.mrb[0].mxu0
    %979 = vmatprep.mubr.f32.mxu0 0.0
    %980 = vmatmul.mubr.f32.gmra.mrb[0].mxu0 %v824
    %v981 = vpop.f32.mrb[0].mxu0
    %v982 = vadd.f32 %v62, %v981
    %v983 = vpop.f32.mrb[0].mxu0
    %984 = vmatprep.mubr.f32.mxu0 0.0
    %985 = vmatmul.mubr.f32.gmra.mrb[0].mxu0 %v827
    %v986 = vpop.f32.mrb[0].mxu0
    %v987 = vadd.f32 %v62, %v986
    %v988 = vpop.f32.mrb[0].mxu0
    %989 = vmatprep.mubr.f32.mxu0 0.0
    %990 = vmatmul.mubr.f32.gmra.mrb[0].mxu0 %v830
    %v991 = vpop.f32.mrb[0].mxu0
    %v992 = vadd.f32 %v62, %v991
    %v993 = vpop.f32.mrb[0].mxu0
    %994 = vmatprep.mubr.f32.mxu0 0.0
    %995 = vmatmul.mubr.f32.gmra.mrb[0].mxu0 %v833
    %v996 = vpop.f32.mrb[0].mxu0
    %v997 = vadd.f32 %v62, %v996
    %v998 = vpop.f32.mrb[0].mxu0
    %999 = vmatprep.mubr.f32.mxu0 0.0
    %1000 = vmatmul.mubr.f32.gmra.mrb[0].mxu0 %v836
    %v1001 = vpop.f32.mrb[0].mxu0
    %v1002 = vadd.f32 %v62, %v1001
    %v1003 = vpop.f32.mrb[0].mxu0
    %1004 = vmatprep.mubr.f32.mxu0 0.0
    %1005 = vmatmul.mubr.f32.gmra.mrb[0].mxu0 %v839
    %v1006 = vpop.f32.mrb[0].mxu0
    %v1007 = vadd.f32 %v62, %v1006
    %v1008 = vpop.f32.mrb[0].mxu0
    %1009 = vmatprep.mubr.f32.mxu0 0.0
    %1010 = vmatmul.mubr.f32.gmra.mrb[0].mxu0 %v842
    %v1011 = vpop.f32.mrb[0].mxu0
    %v1012 = vadd.f32 %v62, %v1011
    %v1013 = vpop.f32.mrb[0].mxu0
    %1014 = vmatprep.mubr.f32.mxu0 0.0
    %1015 = vmatmul.mubr.f32.gmra.mrb[0].mxu0 %v845
    %v1016 = vpop.f32.mrb[0].mxu0
    %v1017 = vadd.f32 %v62, %v1016
    %v1018 = vpop.f32.mrb[0].mxu0
    %1019 = vmatprep.mubr.f32.mxu0 0.0
    %1020 = vmatmul.mubr.f32.gmra.mrb[0].mxu0 %v848
    %v1021 = vpop.f32.mrb[0].mxu0
    %v1022 = vadd.f32 %v62, %v1021
    %v1023 = vpop.f32.mrb[0].mxu0
    %1024 = vmatprep.mubr.f32.mxu0 0.0
    %1025 = vmatmul.mubr.f32.gmra.mrb[0].mxu0 %v851
    %v1026 = vpop.f32.mrb[0].mxu0
    %v1027 = vadd.f32 %v62, %v1026
    %v1028 = vpop.f32.mrb[0].mxu0
    %1029 = vmatprep.mubr.f32.mxu0 0.0
    %1030 = vmatmul.mubr.f32.gmra.mrb[0].mxu0 %v854
    %v1031 = vpop.f32.mrb[0].mxu0
    %v1032 = vadd.f32 %v62, %v1031
    %v1033 = vpop.f32.mrb[0].mxu0
    %1034 = vmatprep.mubr.f32.mxu0 0.0
    %1035 = vmatmul.mubr.f32.gmra.mrb[0].mxu0 %v857
    %v1036 = vpop.f32.mrb[0].mxu0
    %v1037 = vadd.f32 %v62, %v1036
    %v1038 = vpop.f32.mrb[0].mxu0
    %1039 = vmatprep.mubr.f32.mxu0 0.0
    %1040 = vmatmul.mubr.f32.gmra.mrb[0].mxu0 %v860
    %v1041 = vpop.f32.mrb[0].mxu0
    %v1042 = vadd.f32 %v62, %v1041
    %v1043 = vpop.f32.mrb[0].mxu0
    %1044 = vmatprep.mubr.f32.mxu0 0.0
    %1045 = vmatmul.mubr.f32.gmra.mrb[0].mxu0 %v863
    %v1046 = vpop.f32.mrb[0].mxu0
    %v1047 = vadd.f32 %v62, %v1046
    %v1048 = vpop.f32.mrb[0].mxu0
    %1049 = vmatprep.mubr.f32.mxu0 0.0
    %1050 = vmatmul.mubr.f32.gmra.mrb[0].mxu0 %v866
    %v1051 = vpop.f32.mrb[0].mxu0
    %v1052 = vadd.f32 %v62, %v1051
    %v1053 = vpop.f32.mrb[0].mxu0
    %1054 = vmatprep.mubr.f32.mxu0 0.0
    %1055 = vmatmul.mubr.f32.gmra.mrb[0].mxu0 %v869
    %v1056 = vpop.f32.mrb[0].mxu0
    %v1057 = vadd.f32 %v62, %v1056
    %v1058 = vpop.f32.mrb[0].mxu0
    %1059 = vmatprep.mubr.f32.mxu0 0.0
    %1060 = vmatmul.mubr.f32.gmra.mrb[0].mxu0 %v872
    %v1061 = vpop.f32.mrb[0].mxu0
    %v1062 = vadd.f32 %v62, %v1061
    %v1063 = vpop.f32.mrb[0].mxu0
    %1064 = vmatprep.mubr.f32.mxu0 0.0
    %1065 = vmatmul.mubr.f32.gmra.mrb[0].mxu0 %v875
    %v1066 = vpop.f32.mrb[0].mxu0
    %v1067 = vadd.f32 %v62, %v1066
    %v1068 = vpop.f32.mrb[0].mxu0
    %1069 = vmatprep.mubr.f32.mxu0 0.0
    %1070 = vmatmul.mubr.f32.gmra.mrb[0].mxu0 %v878
    %v1071 = vpop.f32.mrb[0].mxu0
    %v1072 = vadd.f32 %v62, %v1071
    %v1073 = vpop.f32.mrb[0].mxu0
    %1074 = vmatprep.mubr.f32.mxu0 0.0
    %1075 = vmatmul.mubr.f32.gmra.mrb[0].mxu0 %v881
    %v1076 = vpop.f32.mrb[0].mxu0
    %v1077 = vadd.f32 %v62, %v1076
    %v1078 = vpop.f32.mrb[0].mxu0
    %1079 = vmatprep.mubr.f32.mxu0 0.0
    %1080 = vmatmul.mubr.f32.gmra.mrb[0].mxu0 %v884
    %v1081 = vpop.f32.mrb[0].mxu0
    %v1082 = vadd.f32 %v62, %v1081
    %v1083 = vpop.f32.mrb[0].mxu0
    %1084 = vmatprep.mubr.f32.mxu0 0.0
    %1085 = vmatmul.mubr.f32.gmra.mrb[0].mxu0 %v887
    %v1086 = vpop.f32.mrb[0].mxu0
    %v1087 = vadd.f32 %v62, %v1086
    %v1088 = vpop.f32.mrb[0].mxu0
    %1089 = vmatprep.mubr.f32.mxu0 0.0
    %1090 = vmatmul.mubr.f32.gmra.mrb[0].mxu0 %v890
    %v1091 = vpop.f32.mrb[0].mxu0
    %v1092 = vadd.f32 %v62, %v1091
    %v1093 = vpop.f32.mrb[0].mxu0
    %1094 = vmatprep.mubr.f32.mxu0 0.0
    %1095 = vmatmul.mubr.f32.gmra.mrb[0].mxu0 %v893
    %v1096 = vpop.f32.mrb[0].mxu0
    %v1097 = vadd.f32 %v62, %v1096
    %v1098 = vpop.f32.mrb[0].mxu0
    %1099 = vdwg.mxu0
    %v1100 = vmax.f32 %v962, 0.0
    %v1101 = vmax.f32 %v967, 0.0
    %v1102 = vmax.f32 %v972, 0.0
    %v1103 = vmax.f32 %v977, 0.0
    %v1104 = vmax.f32 %v982, 0.0
    %v1105 = vmax.f32 %v987, 0.0
    %v1106 = vmax.f32 %v992, 0.0
    %v1107 = vmax.f32 %v997, 0.0
    %v1108 = vmax.f32 %v1002, 0.0
    %v1109 = vmax.f32 %v1007, 0.0
    %v1110 = vmax.f32 %v1012, 0.0
    %v1111 = vmax.f32 %v1017, 0.0
    %v1112 = vmax.f32 %v1022, 0.0
    %v1113 = vmax.f32 %v1027, 0.0
    %v1114 = vmax.f32 %v1032, 0.0
    %v1115 = vmax.f32 %v1037, 0.0
    %v1116 = vmax.f32 %v1042, 0.0
    %v1117 = vmax.f32 %v1047, 0.0
    %v1118 = vmax.f32 %v1052, 0.0
    %v1119 = vmax.f32 %v1057, 0.0
    %v1120 = vmax.f32 %v1062, 0.0
    %v1121 = vmax.f32 %v1067, 0.0
    %v1122 = vmax.f32 %v1072, 0.0
    %v1123 = vmax.f32 %v1077, 0.0
    %v1124 = vmax.f32 %v1082, 0.0
    %v1125 = vmax.f32 %v1087, 0.0
    %v1126 = vmax.f32 %v1092, 0.0
    %v1127 = vmax.f32 %v1097, 0.0
    %v1128 = vmax.f32 %v1100, %v1114
    %v1129 = vmax.f32 %v1101, %v1115
    %v1130 = vmax.f32 %v1102, %v1116
    %v1131 = vmax.f32 %v1103, %v1117
    %v1132 = vmax.f32 %v1104, %v1118
    %v1133 = vmax.f32 %v1105, %v1119
    %v1134 = vmax.f32 %v1106, %v1120
    %v1135 = vmax.f32 %v1107, %v1121
    %v1136 = vmax.f32 %v1108, %v1122
    %v1137 = vmax.f32 %v1109, %v1123
    %v1138 = vmax.f32 %v1110, %v1124
    %v1139 = vmax.f32 %v1111, %v1125
    %v1140 = vmax.f32 %v1112, %v1126
    %v1141 = vmax.f32 %v1113, %v1127
    %v1142 = vmax.f32 %v1128, %v1129
    %1143 = vst.msk [vmem:[#allocation2 + $0x70] sm:$0xff] %vm64, %v1142
    %v1144 = vmax.f32 %v1130, %v1131
    %1145 = vst.msk [vmem:[#allocation2 + $0x78] sm:$0xff] %vm64, %v1144
    %v1146 = vmax.f32 %v1132, %v1133
    %1147 = vst.msk [vmem:[#allocation2 + $0x80] sm:$0xff] %vm64, %v1146
    %v1148 = vmax.f32 %v1134, %v1135
    %1149 = vst.msk [vmem:[#allocation2 + $0x88] sm:$0xff] %vm64, %v1148
    %v1150 = vmax.f32 %v1136, %v1137
    %1151 = vst.msk [vmem:[#allocation2 + $0x90] sm:$0xff] %vm64, %v1150
    %v1152 = vmax.f32 %v1138, %v1139
    %1153 = vst.msk [vmem:[#allocation2 + $0x98] sm:$0xff] %vm64, %v1152
    %v1154 = vmax.f32 %v1140, %v1141
    %1155 = vst.msk [vmem:[#allocation2 + $0xa0] sm:$0xff] %vm64, %v1154
    %v1156 = vld [vmem:[%s0 + $0x2a0] sm:$0xff]
    %v1157 = vld [vmem:[%s0 + $0x2a8] sm:$0xff]
    %v1158 = vld [vmem:[%s0 + $0x2b0] sm:$0xff]
    %v1159 = vld [vmem:[%s0 + $0x2b8] sm:$0xff]
    %v1160 = vld [vmem:[%s0 + $0x2c0] sm:$0xff]
    %v1161 = vld [vmem:[%s0 + $0x2c8] sm:$0xff]
    %v1162 = vld [vmem:[%s0 + $0x2d0] sm:$0xff]
    %v1163 = vld [vmem:[%s0 + $0x2d8] sm:$0xff]
    %v1164 = vld [vmem:[%s0 + $0x2e0] sm:$0xff]
    %v1165 = vld [vmem:[%s0 + $0x2e8] sm:$0xff]
    %v1166 = vld [vmem:[%s0 + $0x2f0] sm:$0xff]
    %v1167 = vld [vmem:[%s0 + $0x2f8] sm:$0xff]
    %v1168 = vld [vmem:[%s0 + $0x300] sm:$0xff]
    %v1169 = vld [vmem:[%s0 + $0x308] sm:$0xff]
    %v1170 = vld [vmem:[%s0 + $0x310] sm:$0xff]
    %v1171 = vld [vmem:[%s0 + $0x318] sm:$0xff]
    %v1172 = vld [vmem:[%s0 + $0x320] sm:$0xff]
    %v1173 = vld [vmem:[%s0 + $0x328] sm:$0xff]
    %v1174 = vld [vmem:[%s0 + $0x330] sm:$0xff]
    %v1175 = vld [vmem:[%s0 + $0x338] sm:$0xff]
    %v1176 = vld [vmem:[%s0 + $0x340] sm:$0xff]
    %v1177 = vld [vmem:[%s0 + $0x348] sm:$0xff]
    %v1178 = vld [vmem:[%s0 + $0x350] sm:$0xff]
    %v1179 = vld [vmem:[%s0 + $0x358] sm:$0xff]
    %v1180 = vld [vmem:[%s0 + $0x360] sm:$0xff]
    %v1181 = vld [vmem:[%s0 + $0x368] sm:$0xff]
    %v1182 = vld [vmem:[%s0 + $0x370] sm:$0xff]
    %v1183 = vld [vmem:[%s0 + $0x378] sm:$0xff]
    %v1185 = vsel %vm64, %v1156, 0
    %v1188 = vsel %vm64, %v1157, 0
    %v1191 = vsel %vm64, %v1158, 0
    %v1194 = vsel %vm64, %v1159, 0
    %v1197 = vsel %vm64, %v1160, 0
    %v1200 = vsel %vm64, %v1161, 0
    %v1203 = vsel %vm64, %v1162, 0
    %v1206 = vsel %vm64, %v1163, 0
    %v1209 = vsel %vm64, %v1164, 0
    %v1212 = vsel %vm64, %v1165, 0
    %v1215 = vsel %vm64, %v1166, 0
    %v1218 = vsel %vm64, %v1167, 0
    %v1221 = vsel %vm64, %v1168, 0
    %v1224 = vsel %vm64, %v1169, 0
    %v1227 = vsel %vm64, %v1170, 0
    %v1230 = vsel %vm64, %v1171, 0
    %v1233 = vsel %vm64, %v1172, 0
    %v1236 = vsel %vm64, %v1173, 0
    %v1239 = vsel %vm64, %v1174, 0
    %v1242 = vsel %vm64, %v1175, 0
    %v1245 = vsel %vm64, %v1176, 0
    %v1248 = vsel %vm64, %v1177, 0
    %v1251 = vsel %vm64, %v1178, 0
    %v1254 = vsel %vm64, %v1179, 0
    %v1257 = vsel %vm64, %v1180, 0
    %v1260 = vsel %vm64, %v1181, 0
    %v1263 = vsel %vm64, %v1182, 0
    %v1266 = vsel %vm64, %v1183, 0
    %1268 = vmatprep.subr.mxu0 0.0
    %1269 = vmatpush1.msra.mxu0 %v27
    %1270 = vmatprep.subr.mxu0 0.0
    %1271 = vmatpush1.msra.mxu0 %v28
    %1272 = vmatprep.subr.mxu0 0.0
    %1273 = vmatpush1.msra.mxu0 0.0
    %1274 = vmatprep.subr.mxu0 0.0
    %1275 = vmatpush1.msra.mxu0 0.0
    %1276 = vmatprep.subr.mxu0 0.0
    %1277 = vmatpush1.msra.mxu0 0.0
    %1278 = vmatprep.subr.mxu0 0.0
    %1279 = vmatpush1.msra.mxu0 0.0
    %1280 = vmatprep.subr.mxu0 0.0
    %1281 = vmatpush1.msra.mxu0 0.0
    %1282 = vmatprep.subr.mxu0 0.0
    %1283 = vmatpush1.msra.mxu0 0.0
    %1284 = vmatprep.subr.mxu0 0.0
    %1285 = vmatpush1.msra.mxu0 0.0
    %1286 = vmatprep.subr.mxu0 0.0
    %1287 = vmatpush1.msra.mxu0 0.0
    %1288 = vmatprep.subr.mxu0 0.0
    %1289 = vmatpush1.msra.mxu0 0.0
    %1290 = vmatprep.subr.mxu0 0.0
    %1291 = vmatpush1.msra.mxu0 0.0
    %1292 = vmatprep.subr.mxu0 0.0
    %1293 = vmatpush1.msra.mxu0 0.0
    %1294 = vmatprep.subr.mxu0 0.0
    %1295 = vmatpush1.msra.mxu0 0.0
    %1296 = vmatprep.subr.mxu0 0.0
    %1297 = vmatpush1.msra.mxu0 0.0
    %1298 = vmatprep.subr.mxu0 0.0
    %1299 = vmatpush1.msra.mxu0 0.0
    %1300 = vmatprep.subr.mxu0 0.0
    %1301 = vmatpush1.msra.mxu0 0.0
    %1302 = vmatprep.subr.mxu0 0.0
    %1303 = vmatpush1.msra.mxu0 0.0
    %1304 = vmatprep.subr.mxu0 0.0
    %1305 = vmatpush1.msra.mxu0 0.0
    %1306 = vmatprep.subr.mxu0 0.0
    %1307 = vmatpush1.msra.mxu0 0.0
    %1308 = vmatprep.subr.mxu0 0.0
    %1309 = vmatpush1.msra.mxu0 0.0
    %1310 = vmatprep.subr.mxu0 0.0
    %1311 = vmatpush1.msra.mxu0 0.0
    %1312 = vmatprep.subr.mxu0 0.0
    %1313 = vmatpush1.msra.mxu0 0.0
    %1314 = vmatprep.subr.mxu0 0.0
    %1315 = vmatpush1.msra.mxu0 0.0
    %1316 = vmatprep.subr.mxu0 0.0
    %1317 = vmatpush1.msra.mxu0 0.0
    %1318 = vmatprep.subr.mxu0 0.0
    %1319 = vmatpush1.msra.mxu0 0.0
    %1320 = vmatprep.subr.mxu0 0.0
    %1321 = vmatpush1.msra.mxu0 0.0
    %1322 = vmatprep.subr.mxu0 0.0
    %1323 = vmatpush1.msra.mxu0 0.0
    %1324 = vmatprep.subr.mxu0 0.0
    %1325 = vmatpush1.msra.mxu0 0.0
    %1326 = vmatprep.subr.mxu0 0.0
    %1327 = vmatpush1.msra.mxu0 0.0
    %1328 = vmatprep.subr.mxu0 0.0
    %1329 = vmatpush1.msra.mxu0 0.0
    %1330 = vmatprep.subr.mxu0 0.0
    %1331 = vmatpush1.msra.mxu0 0.0
    %1332 = vmatprep.mubr.f32.mxu0 0.0
    %1333 = vmatmul.mubr.f32.gmra.mrb[0].mxu0 %v1185
    %v1334 = vpop.f32.mrb[0].mxu0
    %v1335 = vadd.f32 %v62, %v1334
    %v1336 = vpop.f32.mrb[0].mxu0
    %1337 = vmatprep.mubr.f32.mxu0 0.0
    %1338 = vmatmul.mubr.f32.gmra.mrb[0].mxu0 %v1188
    %v1339 = vpop.f32.mrb[0].mxu0
    %v1340 = vadd.f32 %v62, %v1339
    %v1341 = vpop.f32.mrb[0].mxu0
    %1342 = vmatprep.mubr.f32.mxu0 0.0
    %1343 = vmatmul.mubr.f32.gmra.mrb[0].mxu0 %v1191
    %v1344 = vpop.f32.mrb[0].mxu0
    %v1345 = vadd.f32 %v62, %v1344
    %v1346 = vpop.f32.mrb[0].mxu0
    %1347 = vmatprep.mubr.f32.mxu0 0.0
    %1348 = vmatmul.mubr.f32.gmra.mrb[0].mxu0 %v1194
    %v1349 = vpop.f32.mrb[0].mxu0
    %v1350 = vadd.f32 %v62, %v1349
    %v1351 = vpop.f32.mrb[0].mxu0
    %1352 = vmatprep.mubr.f32.mxu0 0.0
    %1353 = vmatmul.mubr.f32.gmra.mrb[0].mxu0 %v1197
    %v1354 = vpop.f32.mrb[0].mxu0
    %v1355 = vadd.f32 %v62, %v1354
    %v1356 = vpop.f32.mrb[0].mxu0
    %1357 = vmatprep.mubr.f32.mxu0 0.0
    %1358 = vmatmul.mubr.f32.gmra.mrb[0].mxu0 %v1200
    %v1359 = vpop.f32.mrb[0].mxu0
    %v1360 = vadd.f32 %v62, %v1359
    %v1361 = vpop.f32.mrb[0].mxu0
    %1362 = vmatprep.mubr.f32.mxu0 0.0
    %1363 = vmatmul.mubr.f32.gmra.mrb[0].mxu0 %v1203
    %v1364 = vpop.f32.mrb[0].mxu0
    %v1365 = vadd.f32 %v62, %v1364
    %v1366 = vpop.f32.mrb[0].mxu0
    %1367 = vmatprep.mubr.f32.mxu0 0.0
    %1368 = vmatmul.mubr.f32.gmra.mrb[0].mxu0 %v1206
    %v1369 = vpop.f32.mrb[0].mxu0
    %v1370 = vadd.f32 %v62, %v1369
    %v1371 = vpop.f32.mrb[0].mxu0
    %1372 = vmatprep.mubr.f32.mxu0 0.0
    %1373 = vmatmul.mubr.f32.gmra.mrb[0].mxu0 %v1209
    %v1374 = vpop.f32.mrb[0].mxu0
    %v1375 = vadd.f32 %v62, %v1374
    %v1376 = vpop.f32.mrb[0].mxu0
    %1377 = vmatprep.mubr.f32.mxu0 0.0
    %1378 = vmatmul.mubr.f32.gmra.mrb[0].mxu0 %v1212
    %v1379 = vpop.f32.mrb[0].mxu0
    %v1380 = vadd.f32 %v62, %v1379
    %v1381 = vpop.f32.mrb[0].mxu0
    %1382 = vmatprep.mubr.f32.mxu0 0.0
    %1383 = vmatmul.mubr.f32.gmra.mrb[0].mxu0 %v1215
    %v1384 = vpop.f32.mrb[0].mxu0
    %v1385 = vadd.f32 %v62, %v1384
    %v1386 = vpop.f32.mrb[0].mxu0
    %1387 = vmatprep.mubr.f32.mxu0 0.0
    %1388 = vmatmul.mubr.f32.gmra.mrb[0].mxu0 %v1218
    %v1389 = vpop.f32.mrb[0].mxu0
    %v1390 = vadd.f32 %v62, %v1389
    %v1391 = vpop.f32.mrb[0].mxu0
    %1392 = vmatprep.mubr.f32.mxu0 0.0
    %1393 = vmatmul.mubr.f32.gmra.mrb[0].mxu0 %v1221
    %v1394 = vpop.f32.mrb[0].mxu0
    %v1395 = vadd.f32 %v62, %v1394
    %v1396 = vpop.f32.mrb[0].mxu0
    %1397 = vmatprep.mubr.f32.mxu0 0.0
    %1398 = vmatmul.mubr.f32.gmra.mrb[0].mxu0 %v1224
    %v1399 = vpop.f32.mrb[0].mxu0
    %v1400 = vadd.f32 %v62, %v1399
    %v1401 = vpop.f32.mrb[0].mxu0
    %1402 = vmatprep.mubr.f32.mxu0 0.0
    %1403 = vmatmul.mubr.f32.gmra.mrb[0].mxu0 %v1227
    %v1404 = vpop.f32.mrb[0].mxu0
    %v1405 = vadd.f32 %v62, %v1404
    %v1406 = vpop.f32.mrb[0].mxu0
    %1407 = vmatprep.mubr.f32.mxu0 0.0
    %1408 = vmatmul.mubr.f32.gmra.mrb[0].mxu0 %v1230
    %v1409 = vpop.f32.mrb[0].mxu0
    %v1410 = vadd.f32 %v62, %v1409
    %v1411 = vpop.f32.mrb[0].mxu0
    %1412 = vmatprep.mubr.f32.mxu0 0.0
    %1413 = vmatmul.mubr.f32.gmra.mrb[0].mxu0 %v1233
    %v1414 = vpop.f32.mrb[0].mxu0
    %v1415 = vadd.f32 %v62, %v1414
    %v1416 = vpop.f32.mrb[0].mxu0
    %1417 = vmatprep.mubr.f32.mxu0 0.0
    %1418 = vmatmul.mubr.f32.gmra.mrb[0].mxu0 %v1236
    %v1419 = vpop.f32.mrb[0].mxu0
    %v1420 = vadd.f32 %v62, %v1419
    %v1421 = vpop.f32.mrb[0].mxu0
    %1422 = vmatprep.mubr.f32.mxu0 0.0
    %1423 = vmatmul.mubr.f32.gmra.mrb[0].mxu0 %v1239
    %v1424 = vpop.f32.mrb[0].mxu0
    %v1425 = vadd.f32 %v62, %v1424
    %v1426 = vpop.f32.mrb[0].mxu0
    %1427 = vmatprep.mubr.f32.mxu0 0.0
    %1428 = vmatmul.mubr.f32.gmra.mrb[0].mxu0 %v1242
    %v1429 = vpop.f32.mrb[0].mxu0
    %v1430 = vadd.f32 %v62, %v1429
    %v1431 = vpop.f32.mrb[0].mxu0
    %1432 = vmatprep.mubr.f32.mxu0 0.0
    %1433 = vmatmul.mubr.f32.gmra.mrb[0].mxu0 %v1245
    %v1434 = vpop.f32.mrb[0].mxu0
    %v1435 = vadd.f32 %v62, %v1434
    %v1436 = vpop.f32.mrb[0].mxu0
    %1437 = vmatprep.mubr.f32.mxu0 0.0
    %1438 = vmatmul.mubr.f32.gmra.mrb[0].mxu0 %v1248
    %v1439 = vpop.f32.mrb[0].mxu0
    %v1440 = vadd.f32 %v62, %v1439
    %v1441 = vpop.f32.mrb[0].mxu0
    %1442 = vmatprep.mubr.f32.mxu0 0.0
    %1443 = vmatmul.mubr.f32.gmra.mrb[0].mxu0 %v1251
    %v1444 = vpop.f32.mrb[0].mxu0
    %v1445 = vadd.f32 %v62, %v1444
    %v1446 = vpop.f32.mrb[0].mxu0
    %1447 = vmatprep.mubr.f32.mxu0 0.0
    %1448 = vmatmul.mubr.f32.gmra.mrb[0].mxu0 %v1254
    %v1449 = vpop.f32.mrb[0].mxu0
    %v1450 = vadd.f32 %v62, %v1449
    %v1451 = vpop.f32.mrb[0].mxu0
    %1452 = vmatprep.mubr.f32.mxu0 0.0
    %1453 = vmatmul.mubr.f32.gmra.mrb[0].mxu0 %v1257
    %v1454 = vpop.f32.mrb[0].mxu0
    %v1455 = vadd.f32 %v62, %v1454
    %v1456 = vpop.f32.mrb[0].mxu0
    %1457 = vmatprep.mubr.f32.mxu0 0.0
    %1458 = vmatmul.mubr.f32.gmra.mrb[0].mxu0 %v1260
    %v1459 = vpop.f32.mrb[0].mxu0
    %v1460 = vadd.f32 %v62, %v1459
    %v1461 = vpop.f32.mrb[0].mxu0
    %1462 = vmatprep.mubr.f32.mxu0 0.0
    %1463 = vmatmul.mubr.f32.gmra.mrb[0].mxu0 %v1263
    %v1464 = vpop.f32.mrb[0].mxu0
    %v1465 = vadd.f32 %v62, %v1464
    %v1466 = vpop.f32.mrb[0].mxu0
    %1467 = vmatprep.mubr.f32.mxu0 0.0
    %1468 = vmatmul.mubr.f32.gmra.mrb[0].mxu0 %v1266
    %v1469 = vpop.f32.mrb[0].mxu0
    %v1470 = vadd.f32 %v62, %v1469
    %v1471 = vpop.f32.mrb[0].mxu0
    %1472 = vdwg.mxu0
    %v1473 = vmax.f32 %v1335, 0.0
    %v1474 = vmax.f32 %v1340, 0.0
    %v1475 = vmax.f32 %v1345, 0.0
    %v1476 = vmax.f32 %v1350, 0.0
    %v1477 = vmax.f32 %v1355, 0.0
    %v1478 = vmax.f32 %v1360, 0.0
    %v1479 = vmax.f32 %v1365, 0.0
    %v1480 = vmax.f32 %v1370, 0.0
    %v1481 = vmax.f32 %v1375, 0.0
    %v1482 = vmax.f32 %v1380, 0.0
    %v1483 = vmax.f32 %v1385, 0.0
    %v1484 = vmax.f32 %v1390, 0.0
    %v1485 = vmax.f32 %v1395, 0.0
    %v1486 = vmax.f32 %v1400, 0.0
    %v1487 = vmax.f32 %v1405, 0.0
    %v1488 = vmax.f32 %v1410, 0.0
    %v1489 = vmax.f32 %v1415, 0.0
    %v1490 = vmax.f32 %v1420, 0.0
    %v1491 = vmax.f32 %v1425, 0.0
    %v1492 = vmax.f32 %v1430, 0.0
    %v1493 = vmax.f32 %v1435, 0.0
    %v1494 = vmax.f32 %v1440, 0.0
    %v1495 = vmax.f32 %v1445, 0.0
    %v1496 = vmax.f32 %v1450, 0.0
    %v1497 = vmax.f32 %v1455, 0.0
    %v1498 = vmax.f32 %v1460, 0.0
    %v1499 = vmax.f32 %v1465, 0.0
    %v1500 = vmax.f32 %v1470, 0.0
    %v1501 = vmax.f32 %v1473, %v1487
    %v1502 = vmax.f32 %v1474, %v1488
    %v1503 = vmax.f32 %v1475, %v1489
    %v1504 = vmax.f32 %v1476, %v1490
    %v1505 = vmax.f32 %v1477, %v1491
    %v1506 = vmax.f32 %v1478, %v1492
    %v1507 = vmax.f32 %v1479, %v1493
    %v1508 = vmax.f32 %v1480, %v1494
    %v1509 = vmax.f32 %v1481, %v1495
    %v1510 = vmax.f32 %v1482, %v1496
    %v1511 = vmax.f32 %v1483, %v1497
    %v1512 = vmax.f32 %v1484, %v1498
    %v1513 = vmax.f32 %v1485, %v1499
    %v1514 = vmax.f32 %v1486, %v1500
    %v1515 = vmax.f32 %v1501, %v1502
    %1516 = vst.msk [vmem:[#allocation2 + $0xa8] sm:$0xff] %vm64, %v1515
    %v1517 = vmax.f32 %v1503, %v1504
    %1518 = vst.msk [vmem:[#allocation2 + $0xb0] sm:$0xff] %vm64, %v1517
    %v1519 = vmax.f32 %v1505, %v1506
    %1520 = vst.msk [vmem:[#allocation2 + $0xb8] sm:$0xff] %vm64, %v1519
    %v1521 = vmax.f32 %v1507, %v1508
    %1522 = vst.msk [vmem:[#allocation2 + $0xc0] sm:$0xff] %vm64, %v1521
    %v1523 = vmax.f32 %v1509, %v1510
    %1524 = vst.msk [vmem:[#allocation2 + $0xc8] sm:$0xff] %vm64, %v1523
    %v1525 = vmax.f32 %v1511, %v1512
    %1526 = vst.msk [vmem:[#allocation2 + $0xd0] sm:$0xff] %vm64, %v1525
    %v1527 = vmax.f32 %v1513, %v1514
    %1528 = vst.msk [vmem:[#allocation2 + $0xd8] sm:$0xff] %vm64, %v1527
    %v1529 = vld [vmem:[%s0 + $0x380] sm:$0xff]
    %v1530 = vld [vmem:[%s0 + $0x388] sm:$0xff]
    %v1531 = vld [vmem:[%s0 + $0x390] sm:$0xff]
    %v1532 = vld [vmem:[%s0 + $0x398] sm:$0xff]
    %v1533 = vld [vmem:[%s0 + $0x3a0] sm:$0xff]
    %v1534 = vld [vmem:[%s0 + $0x3a8] sm:$0xff]
    %v1535 = vld [vmem:[%s0 + $0x3b0] sm:$0xff]
    %v1536 = vld [vmem:[%s0 + $0x3b8] sm:$0xff]
    %v1537 = vld [vmem:[%s0 + $0x3c0] sm:$0xff]
    %v1538 = vld [vmem:[%s0 + $0x3c8] sm:$0xff]
    %v1539 = vld [vmem:[%s0 + $0x3d0] sm:$0xff]
    %v1540 = vld [vmem:[%s0 + $0x3d8] sm:$0xff]
    %v1541 = vld [vmem:[%s0 + $0x3e0] sm:$0xff]
    %v1542 = vld [vmem:[%s0 + $0x3e8] sm:$0xff]
    %v1543 = vld [vmem:[%s0 + $0x3f0] sm:$0xff]
    %v1544 = vld [vmem:[%s0 + $0x3f8] sm:$0xff]
    %v1545 = vld [vmem:[%s0 + $0x400] sm:$0xff]
    %v1546 = vld [vmem:[%s0 + $0x408] sm:$0xff]
    %v1547 = vld [vmem:[%s0 + $0x410] sm:$0xff]
    %v1548 = vld [vmem:[%s0 + $0x418] sm:$0xff]
    %v1549 = vld [vmem:[%s0 + $0x420] sm:$0xff]
    %v1550 = vld [vmem:[%s0 + $0x428] sm:$0xff]
    %v1551 = vld [vmem:[%s0 + $0x430] sm:$0xff]
    %v1552 = vld [vmem:[%s0 + $0x438] sm:$0xff]
    %v1553 = vld [vmem:[%s0 + $0x440] sm:$0xff]
    %v1554 = vld [vmem:[%s0 + $0x448] sm:$0xff]
    %v1555 = vld [vmem:[%s0 + $0x450] sm:$0xff]
    %v1556 = vld [vmem:[%s0 + $0x458] sm:$0xff]
    %v1558 = vsel %vm64, %v1529, 0
    %v1561 = vsel %vm64, %v1530, 0
    %v1564 = vsel %vm64, %v1531, 0
    %v1567 = vsel %vm64, %v1532, 0
    %v1570 = vsel %vm64, %v1533, 0
    %v1573 = vsel %vm64, %v1534, 0
    %v1576 = vsel %vm64, %v1535, 0
    %v1579 = vsel %vm64, %v1536, 0
    %v1582 = vsel %vm64, %v1537, 0
    %v1585 = vsel %vm64, %v1538, 0
    %v1588 = vsel %vm64, %v1539, 0
    %v1591 = vsel %vm64, %v1540, 0
    %v1594 = vsel %vm64, %v1541, 0
    %v1597 = vsel %vm64, %v1542, 0
    %v1600 = vsel %vm64, %v1543, 0
    %v1603 = vsel %vm64, %v1544, 0
    %v1606 = vsel %vm64, %v1545, 0
    %v1609 = vsel %vm64, %v1546, 0
    %v1612 = vsel %vm64, %v1547, 0
    %v1615 = vsel %vm64, %v1548, 0
    %v1618 = vsel %vm64, %v1549, 0
    %v1621 = vsel %vm64, %v1550, 0
    %v1624 = vsel %vm64, %v1551, 0
    %v1627 = vsel %vm64, %v1552, 0
    %v1630 = vsel %vm64, %v1553, 0
    %v1633 = vsel %vm64, %v1554, 0
    %v1636 = vsel %vm64, %v1555, 0
    %v1639 = vsel %vm64, %v1556, 0
    %1641 = vmatprep.subr.mxu0 0.0
    %1642 = vmatpush1.msra.mxu0 %v27
    %1643 = vmatprep.subr.mxu0 0.0
    %1644 = vmatpush1.msra.mxu0 %v28
    %1645 = vmatprep.subr.mxu0 0.0
    %1646 = vmatpush1.msra.mxu0 0.0
    %1647 = vmatprep.subr.mxu0 0.0
    %1648 = vmatpush1.msra.mxu0 0.0
    %1649 = vmatprep.subr.mxu0 0.0
    %1650 = vmatpush1.msra.mxu0 0.0
    %1651 = vmatprep.subr.mxu0 0.0
    %1652 = vmatpush1.msra.mxu0 0.0
    %1653 = vmatprep.subr.mxu0 0.0
    %1654 = vmatpush1.msra.mxu0 0.0
    %1655 = vmatprep.subr.mxu0 0.0
    %1656 = vmatpush1.msra.mxu0 0.0
    %1657 = vmatprep.subr.mxu0 0.0
    %1658 = vmatpush1.msra.mxu0 0.0
    %1659 = vmatprep.subr.mxu0 0.0
    %1660 = vmatpush1.msra.mxu0 0.0
    %1661 = vmatprep.subr.mxu0 0.0
    %1662 = vmatpush1.msra.mxu0 0.0
    %1663 = vmatprep.subr.mxu0 0.0
    %1664 = vmatpush1.msra.mxu0 0.0
    %1665 = vmatprep.subr.mxu0 0.0
    %1666 = vmatpush1.msra.mxu0 0.0
    %1667 = vmatprep.subr.mxu0 0.0
    %1668 = vmatpush1.msra.mxu0 0.0
    %1669 = vmatprep.subr.mxu0 0.0
    %1670 = vmatpush1.msra.mxu0 0.0
    %1671 = vmatprep.subr.mxu0 0.0
    %1672 = vmatpush1.msra.mxu0 0.0
    %1673 = vmatprep.subr.mxu0 0.0
    %1674 = vmatpush1.msra.mxu0 0.0
    %1675 = vmatprep.subr.mxu0 0.0
    %1676 = vmatpush1.msra.mxu0 0.0
    %1677 = vmatprep.subr.mxu0 0.0
    %1678 = vmatpush1.msra.mxu0 0.0
    %1679 = vmatprep.subr.mxu0 0.0
    %1680 = vmatpush1.msra.mxu0 0.0
    %1681 = vmatprep.subr.mxu0 0.0
    %1682 = vmatpush1.msra.mxu0 0.0
    %1683 = vmatprep.subr.mxu0 0.0
    %1684 = vmatpush1.msra.mxu0 0.0
    %1685 = vmatprep.subr.mxu0 0.0
    %1686 = vmatpush1.msra.mxu0 0.0
    %1687 = vmatprep.subr.mxu0 0.0
    %1688 = vmatpush1.msra.mxu0 0.0
    %1689 = vmatprep.subr.mxu0 0.0
    %1690 = vmatpush1.msra.mxu0 0.0
    %1691 = vmatprep.subr.mxu0 0.0
    %1692 = vmatpush1.msra.mxu0 0.0
    %1693 = vmatprep.subr.mxu0 0.0
    %1694 = vmatpush1.msra.mxu0 0.0
    %1695 = vmatprep.subr.mxu0 0.0
    %1696 = vmatpush1.msra.mxu0 0.0
    %1697 = vmatprep.subr.mxu0 0.0
    %1698 = vmatpush1.msra.mxu0 0.0
    %1699 = vmatprep.subr.mxu0 0.0
    %1700 = vmatpush1.msra.mxu0 0.0
    %1701 = vmatprep.subr.mxu0 0.0
    %1702 = vmatpush1.msra.mxu0 0.0
    %1703 = vmatprep.subr.mxu0 0.0
    %1704 = vmatpush1.msra.mxu0 0.0
    %1705 = vmatprep.mubr.f32.mxu0 0.0
    %1706 = vmatmul.mubr.f32.gmra.mrb[0].mxu0 %v1558
    %v1707 = vpop.f32.mrb[0].mxu0
    %v1708 = vadd.f32 %v62, %v1707
    %v1709 = vpop.f32.mrb[0].mxu0
    %1710 = vmatprep.mubr.f32.mxu0 0.0
    %1711 = vmatmul.mubr.f32.gmra.mrb[0].mxu0 %v1561
    %v1712 = vpop.f32.mrb[0].mxu0
    %v1713 = vadd.f32 %v62, %v1712
    %v1714 = vpop.f32.mrb[0].mxu0
    %1715 = vmatprep.mubr.f32.mxu0 0.0
    %1716 = vmatmul.mubr.f32.gmra.mrb[0].mxu0 %v1564
    %v1717 = vpop.f32.mrb[0].mxu0
    %v1718 = vadd.f32 %v62, %v1717
    %v1719 = vpop.f32.mrb[0].mxu0
    %1720 = vmatprep.mubr.f32.mxu0 0.0
    %1721 = vmatmul.mubr.f32.gmra.mrb[0].mxu0 %v1567
    %v1722 = vpop.f32.mrb[0].mxu0
    %v1723 = vadd.f32 %v62, %v1722
    %v1724 = vpop.f32.mrb[0].mxu0
    %1725 = vmatprep.mubr.f32.mxu0 0.0
    %1726 = vmatmul.mubr.f32.gmra.mrb[0].mxu0 %v1570
    %v1727 = vpop.f32.mrb[0].mxu0
    %v1728 = vadd.f32 %v62, %v1727
    %v1729 = vpop.f32.mrb[0].mxu0
    %1730 = vmatprep.mubr.f32.mxu0 0.0
    %1731 = vmatmul.mubr.f32.gmra.mrb[0].mxu0 %v1573
    %v1732 = vpop.f32.mrb[0].mxu0
    %v1733 = vadd.f32 %v62, %v1732
    %v1734 = vpop.f32.mrb[0].mxu0
    %1735 = vmatprep.mubr.f32.mxu0 0.0
    %1736 = vmatmul.mubr.f32.gmra.mrb[0].mxu0 %v1576
    %v1737 = vpop.f32.mrb[0].mxu0
    %v1738 = vadd.f32 %v62, %v1737
    %v1739 = vpop.f32.mrb[0].mxu0
    %1740 = vmatprep.mubr.f32.mxu0 0.0
    %1741 = vmatmul.mubr.f32.gmra.mrb[0].mxu0 %v1579
    %v1742 = vpop.f32.mrb[0].mxu0
    %v1743 = vadd.f32 %v62, %v1742
    %v1744 = vpop.f32.mrb[0].mxu0
    %1745 = vmatprep.mubr.f32.mxu0 0.0
    %1746 = vmatmul.mubr.f32.gmra.mrb[0].mxu0 %v1582
    %v1747 = vpop.f32.mrb[0].mxu0
    %v1748 = vadd.f32 %v62, %v1747
    %v1749 = vpop.f32.mrb[0].mxu0
    %1750 = vmatprep.mubr.f32.mxu0 0.0
    %1751 = vmatmul.mubr.f32.gmra.mrb[0].mxu0 %v1585
    %v1752 = vpop.f32.mrb[0].mxu0
    %v1753 = vadd.f32 %v62, %v1752
    %v1754 = vpop.f32.mrb[0].mxu0
    %1755 = vmatprep.mubr.f32.mxu0 0.0
    %1756 = vmatmul.mubr.f32.gmra.mrb[0].mxu0 %v1588
    %v1757 = vpop.f32.mrb[0].mxu0
    %v1758 = vadd.f32 %v62, %v1757
    %v1759 = vpop.f32.mrb[0].mxu0
    %1760 = vmatprep.mubr.f32.mxu0 0.0
    %1761 = vmatmul.mubr.f32.gmra.mrb[0].mxu0 %v1591
    %v1762 = vpop.f32.mrb[0].mxu0
    %v1763 = vadd.f32 %v62, %v1762
    %v1764 = vpop.f32.mrb[0].mxu0
    %1765 = vmatprep.mubr.f32.mxu0 0.0
    %1766 = vmatmul.mubr.f32.gmra.mrb[0].mxu0 %v1594
    %v1767 = vpop.f32.mrb[0].mxu0
    %v1768 = vadd.f32 %v62, %v1767
    %v1769 = vpop.f32.mrb[0].mxu0
    %1770 = vmatprep.mubr.f32.mxu0 0.0
    %1771 = vmatmul.mubr.f32.gmra.mrb[0].mxu0 %v1597
    %v1772 = vpop.f32.mrb[0].mxu0
    %v1773 = vadd.f32 %v62, %v1772
    %v1774 = vpop.f32.mrb[0].mxu0
    %1775 = vmatprep.mubr.f32.mxu0 0.0
    %1776 = vmatmul.mubr.f32.gmra.mrb[0].mxu0 %v1600
    %v1777 = vpop.f32.mrb[0].mxu0
    %v1778 = vadd.f32 %v62, %v1777
    %v1779 = vpop.f32.mrb[0].mxu0
    %1780 = vmatprep.mubr.f32.mxu0 0.0
    %1781 = vmatmul.mubr.f32.gmra.mrb[0].mxu0 %v1603
    %v1782 = vpop.f32.mrb[0].mxu0
    %v1783 = vadd.f32 %v62, %v1782
    %v1784 = vpop.f32.mrb[0].mxu0
    %1785 = vmatprep.mubr.f32.mxu0 0.0
    %1786 = vmatmul.mubr.f32.gmra.mrb[0].mxu0 %v1606
    %v1787 = vpop.f32.mrb[0].mxu0
    %v1788 = vadd.f32 %v62, %v1787
    %v1789 = vpop.f32.mrb[0].mxu0
    %1790 = vmatprep.mubr.f32.mxu0 0.0
    %1791 = vmatmul.mubr.f32.gmra.mrb[0].mxu0 %v1609
    %v1792 = vpop.f32.mrb[0].mxu0
    %v1793 = vadd.f32 %v62, %v1792
    %v1794 = vpop.f32.mrb[0].mxu0
    %1795 = vmatprep.mubr.f32.mxu0 0.0
    %1796 = vmatmul.mubr.f32.gmra.mrb[0].mxu0 %v1612
    %v1797 = vpop.f32.mrb[0].mxu0
    %v1798 = vadd.f32 %v62, %v1797
    %v1799 = vpop.f32.mrb[0].mxu0
    %1800 = vmatprep.mubr.f32.mxu0 0.0
    %1801 = vmatmul.mubr.f32.gmra.mrb[0].mxu0 %v1615
    %v1802 = vpop.f32.mrb[0].mxu0
    %v1803 = vadd.f32 %v62, %v1802
    %v1804 = vpop.f32.mrb[0].mxu0
    %1805 = vmatprep.mubr.f32.mxu0 0.0
    %1806 = vmatmul.mubr.f32.gmra.mrb[0].mxu0 %v1618
    %v1807 = vpop.f32.mrb[0].mxu0
    %v1808 = vadd.f32 %v62, %v1807
    %v1809 = vpop.f32.mrb[0].mxu0
    %1810 = vmatprep.mubr.f32.mxu0 0.0
    %1811 = vmatmul.mubr.f32.gmra.mrb[0].mxu0 %v1621
    %v1812 = vpop.f32.mrb[0].mxu0
    %v1813 = vadd.f32 %v62, %v1812
    %v1814 = vpop.f32.mrb[0].mxu0
    %1815 = vmatprep.mubr.f32.mxu0 0.0
    %1816 = vmatmul.mubr.f32.gmra.mrb[0].mxu0 %v1624
    %v1817 = vpop.f32.mrb[0].mxu0
    %v1818 = vadd.f32 %v62, %v1817
    %v1819 = vpop.f32.mrb[0].mxu0
    %1820 = vmatprep.mubr.f32.mxu0 0.0
    %1821 = vmatmul.mubr.f32.gmra.mrb[0].mxu0 %v1627
    %v1822 = vpop.f32.mrb[0].mxu0
    %v1823 = vadd.f32 %v62, %v1822
    %v1824 = vpop.f32.mrb[0].mxu0
    %1825 = vmatprep.mubr.f32.mxu0 0.0
    %1826 = vmatmul.mubr.f32.gmra.mrb[0].mxu0 %v1630
    %v1827 = vpop.f32.mrb[0].mxu0
    %v1828 = vadd.f32 %v62, %v1827
    %v1829 = vpop.f32.mrb[0].mxu0
    %1830 = vmatprep.mubr.f32.mxu0 0.0
    %1831 = vmatmul.mubr.f32.gmra.mrb[0].mxu0 %v1633
    %v1832 = vpop.f32.mrb[0].mxu0
    %v1833 = vadd.f32 %v62, %v1832
    %v1834 = vpop.f32.mrb[0].mxu0
    %1835 = vmatprep.mubr.f32.mxu0 0.0
    %1836 = vmatmul.mubr.f32.gmra.mrb[0].mxu0 %v1636
    %v1837 = vpop.f32.mrb[0].mxu0
    %v1838 = vadd.f32 %v62, %v1837
    %v1839 = vpop.f32.mrb[0].mxu0
    %1840 = vmatprep.mubr.f32.mxu0 0.0
    %1841 = vmatmul.mubr.f32.gmra.mrb[0].mxu0 %v1639
    %v1842 = vpop.f32.mrb[0].mxu0
    %v1843 = vadd.f32 %v62, %v1842
    %v1844 = vpop.f32.mrb[0].mxu0
    %1845 = vdwg.mxu0
    %v1846 = vmax.f32 %v1708, 0.0
    %v1847 = vmax.f32 %v1713, 0.0
    %v1848 = vmax.f32 %v1718, 0.0
    %v1849 = vmax.f32 %v1723, 0.0
    %v1850 = vmax.f32 %v1728, 0.0
    %v1851 = vmax.f32 %v1733, 0.0
    %v1852 = vmax.f32 %v1738, 0.0
    %v1853 = vmax.f32 %v1743, 0.0
    %v1854 = vmax.f32 %v1748, 0.0
    %v1855 = vmax.f32 %v1753, 0.0
    %v1856 = vmax.f32 %v1758, 0.0
    %v1857 = vmax.f32 %v1763, 0.0
    %v1858 = vmax.f32 %v1768, 0.0
    %v1859 = vmax.f32 %v1773, 0.0
    %v1860 = vmax.f32 %v1778, 0.0
    %v1861 = vmax.f32 %v1783, 0.0
    %v1862 = vmax.f32 %v1788, 0.0
    %v1863 = vmax.f32 %v1793, 0.0
    %v1864 = vmax.f32 %v1798, 0.0
    %v1865 = vmax.f32 %v1803, 0.0
    %v1866 = vmax.f32 %v1808, 0.0
    %v1867 = vmax.f32 %v1813, 0.0
    %v1868 = vmax.f32 %v1818, 0.0
    %v1869 = vmax.f32 %v1823, 0.0
    %v1870 = vmax.f32 %v1828, 0.0
    %v1871 = vmax.f32 %v1833, 0.0
    %v1872 = vmax.f32 %v1838, 0.0
    %v1873 = vmax.f32 %v1843, 0.0
    %v1874 = vmax.f32 %v1846, %v1860
    %v1875 = vmax.f32 %v1847, %v1861
    %v1876 = vmax.f32 %v1848, %v1862
    %v1877 = vmax.f32 %v1849, %v1863
    %v1878 = vmax.f32 %v1850, %v1864
    %v1879 = vmax.f32 %v1851, %v1865
    %v1880 = vmax.f32 %v1852, %v1866
    %v1881 = vmax.f32 %v1853, %v1867
    %v1882 = vmax.f32 %v1854, %v1868
    %v1883 = vmax.f32 %v1855, %v1869
    %v1884 = vmax.f32 %v1856, %v1870
    %v1885 = vmax.f32 %v1857, %v1871
    %v1886 = vmax.f32 %v1858, %v1872
    %v1887 = vmax.f32 %v1859, %v1873
    %v1888 = vmax.f32 %v1874, %v1875
    %1889 = vst.msk [vmem:[#allocation2 + $0xe0] sm:$0xff] %vm64, %v1888
    %v1890 = vmax.f32 %v1876, %v1877
    %1891 = vst.msk [vmem:[#allocation2 + $0xe8] sm:$0xff] %vm64, %v1890
    %v1892 = vmax.f32 %v1878, %v1879
    %1893 = vst.msk [vmem:[#allocation2 + $0xf0] sm:$0xff] %vm64, %v1892
    %v1894 = vmax.f32 %v1880, %v1881
    %1895 = vst.msk [vmem:[#allocation2 + $0xf8] sm:$0xff] %vm64, %v1894
    %v1896 = vmax.f32 %v1882, %v1883
    %1897 = vst.msk [vmem:[#allocation2 + $0x100] sm:$0xff] %vm64, %v1896
    %v1898 = vmax.f32 %v1884, %v1885
    %1899 = vst.msk [vmem:[#allocation2 + $0x108] sm:$0xff] %vm64, %v1898
    %v1900 = vmax.f32 %v1886, %v1887
    %1901 = vst.msk [vmem:[#allocation2 + $0x110] sm:$0xff] %vm64, %v1900
    %v1902 = vld [vmem:[%s0 + $0x460] sm:$0xff]
    %v1903 = vld [vmem:[%s0 + $0x468] sm:$0xff]
    %v1904 = vld [vmem:[%s0 + $0x470] sm:$0xff]
    %v1905 = vld [vmem:[%s0 + $0x478] sm:$0xff]
    %v1906 = vld [vmem:[%s0 + $0x480] sm:$0xff]
    %v1907 = vld [vmem:[%s0 + $0x488] sm:$0xff]
    %v1908 = vld [vmem:[%s0 + $0x490] sm:$0xff]
    %v1909 = vld [vmem:[%s0 + $0x498] sm:$0xff]
    %v1910 = vld [vmem:[%s0 + $0x4a0] sm:$0xff]
    %v1911 = vld [vmem:[%s0 + $0x4a8] sm:$0xff]
    %v1912 = vld [vmem:[%s0 + $0x4b0] sm:$0xff]
    %v1913 = vld [vmem:[%s0 + $0x4b8] sm:$0xff]
    %v1914 = vld [vmem:[%s0 + $0x4c0] sm:$0xff]
    %v1915 = vld [vmem:[%s0 + $0x4c8] sm:$0xff]
    %v1916 = vld [vmem:[%s0 + $0x4d0] sm:$0xff]
    %v1917 = vld [vmem:[%s0 + $0x4d8] sm:$0xff]
    %v1918 = vld [vmem:[%s0 + $0x4e0] sm:$0xff]
    %v1919 = vld [vmem:[%s0 + $0x4e8] sm:$0xff]
    %v1920 = vld [vmem:[%s0 + $0x4f0] sm:$0xff]
    %v1921 = vld [vmem:[%s0 + $0x4f8] sm:$0xff]
    %v1922 = vld [vmem:[%s0 + $0x500] sm:$0xff]
    %v1923 = vld [vmem:[%s0 + $0x508] sm:$0xff]
    %v1924 = vld [vmem:[%s0 + $0x510] sm:$0xff]
    %v1925 = vld [vmem:[%s0 + $0x518] sm:$0xff]
    %v1926 = vld [vmem:[%s0 + $0x520] sm:$0xff]
    %v1927 = vld [vmem:[%s0 + $0x528] sm:$0xff]
    %v1928 = vld [vmem:[%s0 + $0x530] sm:$0xff]
    %v1929 = vld [vmem:[%s0 + $0x538] sm:$0xff]
    %v1931 = vsel %vm64, %v1902, 0
    %v1934 = vsel %vm64, %v1903, 0
    %v1937 = vsel %vm64, %v1904, 0
    %v1940 = vsel %vm64, %v1905, 0
    %v1943 = vsel %vm64, %v1906, 0
    %v1946 = vsel %vm64, %v1907, 0
    %v1949 = vsel %vm64, %v1908, 0
    %v1952 = vsel %vm64, %v1909, 0
    %v1955 = vsel %vm64, %v1910, 0
    %v1958 = vsel %vm64, %v1911, 0
    %v1961 = vsel %vm64, %v1912, 0
    %v1964 = vsel %vm64, %v1913, 0
    %v1967 = vsel %vm64, %v1914, 0
    %v1970 = vsel %vm64, %v1915, 0
    %v1973 = vsel %vm64, %v1916, 0
    %v1976 = vsel %vm64, %v1917, 0
    %v1979 = vsel %vm64, %v1918, 0
    %v1982 = vsel %vm64, %v1919, 0
    %v1985 = vsel %vm64, %v1920, 0
    %v1988 = vsel %vm64, %v1921, 0
    %v1991 = vsel %vm64, %v1922, 0
    %v1994 = vsel %vm64, %v1923, 0
    %v1997 = vsel %vm64, %v1924, 0
    %v2000 = vsel %vm64, %v1925, 0
    %v2003 = vsel %vm64, %v1926, 0
    %v2006 = vsel %vm64, %v1927, 0
    %v2009 = vsel %vm64, %v1928, 0
    %v2012 = vsel %vm64, %v1929, 0
    %2014 = vmatprep.subr.mxu0 0.0
    %2015 = vmatpush1.msra.mxu0 %v27
    %2016 = vmatprep.subr.mxu0 0.0
    %2017 = vmatpush1.msra.mxu0 %v28
    %2018 = vmatprep.subr.mxu0 0.0
    %2019 = vmatpush1.msra.mxu0 0.0
    %2020 = vmatprep.subr.mxu0 0.0
    %2021 = vmatpush1.msra.mxu0 0.0
    %2022 = vmatprep.subr.mxu0 0.0
    %2023 = vmatpush1.msra.mxu0 0.0
    %2024 = vmatprep.subr.mxu0 0.0
    %2025 = vmatpush1.msra.mxu0 0.0
    %2026 = vmatprep.subr.mxu0 0.0
    %2027 = vmatpush1.msra.mxu0 0.0
    %2028 = vmatprep.subr.mxu0 0.0
    %2029 = vmatpush1.msra.mxu0 0.0
    %2030 = vmatprep.subr.mxu0 0.0
    %2031 = vmatpush1.msra.mxu0 0.0
    %2032 = vmatprep.subr.mxu0 0.0
    %2033 = vmatpush1.msra.mxu0 0.0
    %2034 = vmatprep.subr.mxu0 0.0
    %2035 = vmatpush1.msra.mxu0 0.0
    %2036 = vmatprep.subr.mxu0 0.0
    %2037 = vmatpush1.msra.mxu0 0.0
    %2038 = vmatprep.subr.mxu0 0.0
    %2039 = vmatpush1.msra.mxu0 0.0
    %2040 = vmatprep.subr.mxu0 0.0
    %2041 = vmatpush1.msra.mxu0 0.0
    %2042 = vmatprep.subr.mxu0 0.0
    %2043 = vmatpush1.msra.mxu0 0.0
    %2044 = vmatprep.subr.mxu0 0.0
    %2045 = vmatpush1.msra.mxu0 0.0
    %2046 = vmatprep.subr.mxu0 0.0
    %2047 = vmatpush1.msra.mxu0 0.0
    %2048 = vmatprep.subr.mxu0 0.0
    %2049 = vmatpush1.msra.mxu0 0.0
    %2050 = vmatprep.subr.mxu0 0.0
    %2051 = vmatpush1.msra.mxu0 0.0
    %2052 = vmatprep.subr.mxu0 0.0
    %2053 = vmatpush1.msra.mxu0 0.0
    %2054 = vmatprep.subr.mxu0 0.0
    %2055 = vmatpush1.msra.mxu0 0.0
    %2056 = vmatprep.subr.mxu0 0.0
    %2057 = vmatpush1.msra.mxu0 0.0
    %2058 = vmatprep.subr.mxu0 0.0
    %2059 = vmatpush1.msra.mxu0 0.0
    %2060 = vmatprep.subr.mxu0 0.0
    %2061 = vmatpush1.msra.mxu0 0.0
    %2062 = vmatprep.subr.mxu0 0.0
    %2063 = vmatpush1.msra.mxu0 0.0
    %2064 = vmatprep.subr.mxu0 0.0
    %2065 = vmatpush1.msra.mxu0 0.0
    %2066 = vmatprep.subr.mxu0 0.0
    %2067 = vmatpush1.msra.mxu0 0.0
    %2068 = vmatprep.subr.mxu0 0.0
    %2069 = vmatpush1.msra.mxu0 0.0
    %2070 = vmatprep.subr.mxu0 0.0
    %2071 = vmatpush1.msra.mxu0 0.0
    %2072 = vmatprep.subr.mxu0 0.0
    %2073 = vmatpush1.msra.mxu0 0.0
    %2074 = vmatprep.subr.mxu0 0.0
    %2075 = vmatpush1.msra.mxu0 0.0
    %2076 = vmatprep.subr.mxu0 0.0
    %2077 = vmatpush1.msra.mxu0 0.0
    %2078 = vmatprep.mubr.f32.mxu0 0.0
    %2079 = vmatmul.mubr.f32.gmra.mrb[0].mxu0 %v1931
    %v2080 = vpop.f32.mrb[0].mxu0
    %v2081 = vadd.f32 %v62, %v2080
    %v2082 = vpop.f32.mrb[0].mxu0
    %2083 = vmatprep.mubr.f32.mxu0 0.0
    %2084 = vmatmul.mubr.f32.gmra.mrb[0].mxu0 %v1934
    %v2085 = vpop.f32.mrb[0].mxu0
    %v2086 = vadd.f32 %v62, %v2085
    %v2087 = vpop.f32.mrb[0].mxu0
    %2088 = vmatprep.mubr.f32.mxu0 0.0
    %2089 = vmatmul.mubr.f32.gmra.mrb[0].mxu0 %v1937
    %v2090 = vpop.f32.mrb[0].mxu0
    %v2091 = vadd.f32 %v62, %v2090
    %v2092 = vpop.f32.mrb[0].mxu0
    %2093 = vmatprep.mubr.f32.mxu0 0.0
    %2094 = vmatmul.mubr.f32.gmra.mrb[0].mxu0 %v1940
    %v2095 = vpop.f32.mrb[0].mxu0
    %v2096 = vadd.f32 %v62, %v2095
    %v2097 = vpop.f32.mrb[0].mxu0
    %2098 = vmatprep.mubr.f32.mxu0 0.0
    %2099 = vmatmul.mubr.f32.gmra.mrb[0].mxu0 %v1943
    %v2100 = vpop.f32.mrb[0].mxu0
    %v2101 = vadd.f32 %v62, %v2100
    %v2102 = vpop.f32.mrb[0].mxu0
    %2103 = vmatprep.mubr.f32.mxu0 0.0
    %2104 = vmatmul.mubr.f32.gmra.mrb[0].mxu0 %v1946
    %v2105 = vpop.f32.mrb[0].mxu0
    %v2106 = vadd.f32 %v62, %v2105
    %v2107 = vpop.f32.mrb[0].mxu0
    %2108 = vmatprep.mubr.f32.mxu0 0.0
    %2109 = vmatmul.mubr.f32.gmra.mrb[0].mxu0 %v1949
    %v2110 = vpop.f32.mrb[0].mxu0
    %v2111 = vadd.f32 %v62, %v2110
    %v2112 = vpop.f32.mrb[0].mxu0
    %2113 = vmatprep.mubr.f32.mxu0 0.0
    %2114 = vmatmul.mubr.f32.gmra.mrb[0].mxu0 %v1952
    %v2115 = vpop.f32.mrb[0].mxu0
    %v2116 = vadd.f32 %v62, %v2115
    %v2117 = vpop.f32.mrb[0].mxu0
    %2118 = vmatprep.mubr.f32.mxu0 0.0
    %2119 = vmatmul.mubr.f32.gmra.mrb[0].mxu0 %v1955
    %v2120 = vpop.f32.mrb[0].mxu0
    %v2121 = vadd.f32 %v62, %v2120
    %v2122 = vpop.f32.mrb[0].mxu0
    %2123 = vmatprep.mubr.f32.mxu0 0.0
    %2124 = vmatmul.mubr.f32.gmra.mrb[0].mxu0 %v1958
    %v2125 = vpop.f32.mrb[0].mxu0
    %v2126 = vadd.f32 %v62, %v2125
    %v2127 = vpop.f32.mrb[0].mxu0
    %2128 = vmatprep.mubr.f32.mxu0 0.0
    %2129 = vmatmul.mubr.f32.gmra.mrb[0].mxu0 %v1961
    %v2130 = vpop.f32.mrb[0].mxu0
    %v2131 = vadd.f32 %v62, %v2130
    %v2132 = vpop.f32.mrb[0].mxu0
    %2133 = vmatprep.mubr.f32.mxu0 0.0
    %2134 = vmatmul.mubr.f32.gmra.mrb[0].mxu0 %v1964
    %v2135 = vpop.f32.mrb[0].mxu0
    %v2136 = vadd.f32 %v62, %v2135
    %v2137 = vpop.f32.mrb[0].mxu0
    %2138 = vmatprep.mubr.f32.mxu0 0.0
    %2139 = vmatmul.mubr.f32.gmra.mrb[0].mxu0 %v1967
    %v2140 = vpop.f32.mrb[0].mxu0
    %v2141 = vadd.f32 %v62, %v2140
    %v2142 = vpop.f32.mrb[0].mxu0
    %2143 = vmatprep.mubr.f32.mxu0 0.0
    %2144 = vmatmul.mubr.f32.gmra.mrb[0].mxu0 %v1970
    %v2145 = vpop.f32.mrb[0].mxu0
    %v2146 = vadd.f32 %v62, %v2145
    %v2147 = vpop.f32.mrb[0].mxu0
    %2148 = vmatprep.mubr.f32.mxu0 0.0
    %2149 = vmatmul.mubr.f32.gmra.mrb[0].mxu0 %v1973
    %v2150 = vpop.f32.mrb[0].mxu0
    %v2151 = vadd.f32 %v62, %v2150
    %v2152 = vpop.f32.mrb[0].mxu0
    %2153 = vmatprep.mubr.f32.mxu0 0.0
    %2154 = vmatmul.mubr.f32.gmra.mrb[0].mxu0 %v1976
    %v2155 = vpop.f32.mrb[0].mxu0
    %v2156 = vadd.f32 %v62, %v2155
    %v2157 = vpop.f32.mrb[0].mxu0
    %2158 = vmatprep.mubr.f32.mxu0 0.0
    %2159 = vmatmul.mubr.f32.gmra.mrb[0].mxu0 %v1979
    %v2160 = vpop.f32.mrb[0].mxu0
    %v2161 = vadd.f32 %v62, %v2160
    %v2162 = vpop.f32.mrb[0].mxu0
    %2163 = vmatprep.mubr.f32.mxu0 0.0
    %2164 = vmatmul.mubr.f32.gmra.mrb[0].mxu0 %v1982
    %v2165 = vpop.f32.mrb[0].mxu0
    %v2166 = vadd.f32 %v62, %v2165
    %v2167 = vpop.f32.mrb[0].mxu0
    %2168 = vmatprep.mubr.f32.mxu0 0.0
    %2169 = vmatmul.mubr.f32.gmra.mrb[0].mxu0 %v1985
    %v2170 = vpop.f32.mrb[0].mxu0
    %v2171 = vadd.f32 %v62, %v2170
    %v2172 = vpop.f32.mrb[0].mxu0
    %2173 = vmatprep.mubr.f32.mxu0 0.0
    %2174 = vmatmul.mubr.f32.gmra.mrb[0].mxu0 %v1988
    %v2175 = vpop.f32.mrb[0].mxu0
    %v2176 = vadd.f32 %v62, %v2175
    %v2177 = vpop.f32.mrb[0].mxu0
    %2178 = vmatprep.mubr.f32.mxu0 0.0
    %2179 = vmatmul.mubr.f32.gmra.mrb[0].mxu0 %v1991
    %v2180 = vpop.f32.mrb[0].mxu0
    %v2181 = vadd.f32 %v62, %v2180
    %v2182 = vpop.f32.mrb[0].mxu0
    %2183 = vmatprep.mubr.f32.mxu0 0.0
    %2184 = vmatmul.mubr.f32.gmra.mrb[0].mxu0 %v1994
    %v2185 = vpop.f32.mrb[0].mxu0
    %v2186 = vadd.f32 %v62, %v2185
    %v2187 = vpop.f32.mrb[0].mxu0
    %2188 = vmatprep.mubr.f32.mxu0 0.0
    %2189 = vmatmul.mubr.f32.gmra.mrb[0].mxu0 %v1997
    %v2190 = vpop.f32.mrb[0].mxu0
    %v2191 = vadd.f32 %v62, %v2190
    %v2192 = vpop.f32.mrb[0].mxu0
    %2193 = vmatprep.mubr.f32.mxu0 0.0
    %2194 = vmatmul.mubr.f32.gmra.mrb[0].mxu0 %v2000
    %v2195 = vpop.f32.mrb[0].mxu0
    %v2196 = vadd.f32 %v62, %v2195
    %v2197 = vpop.f32.mrb[0].mxu0
    %2198 = vmatprep.mubr.f32.mxu0 0.0
    %2199 = vmatmul.mubr.f32.gmra.mrb[0].mxu0 %v2003
    %v2200 = vpop.f32.mrb[0].mxu0
    %v2201 = vadd.f32 %v62, %v2200
    %v2202 = vpop.f32.mrb[0].mxu0
    %2203 = vmatprep.mubr.f32.mxu0 0.0
    %2204 = vmatmul.mubr.f32.gmra.mrb[0].mxu0 %v2006
    %v2205 = vpop.f32.mrb[0].mxu0
    %v2206 = vadd.f32 %v62, %v2205
    %v2207 = vpop.f32.mrb[0].mxu0
    %2208 = vmatprep.mubr.f32.mxu0 0.0
    %2209 = vmatmul.mubr.f32.gmra.mrb[0].mxu0 %v2009
    %v2210 = vpop.f32.mrb[0].mxu0
    %v2211 = vadd.f32 %v62, %v2210
    %v2212 = vpop.f32.mrb[0].mxu0
    %2213 = vmatprep.mubr.f32.mxu0 0.0
    %2214 = vmatmul.mubr.f32.gmra.mrb[0].mxu0 %v2012
    %v2215 = vpop.f32.mrb[0].mxu0
    %v2216 = vadd.f32 %v62, %v2215
    %v2217 = vpop.f32.mrb[0].mxu0
    %2218 = vdwg.mxu0
    %v2219 = vmax.f32 %v2081, 0.0
    %v2220 = vmax.f32 %v2086, 0.0
    %v2221 = vmax.f32 %v2091, 0.0
    %v2222 = vmax.f32 %v2096, 0.0
    %v2223 = vmax.f32 %v2101, 0.0
    %v2224 = vmax.f32 %v2106, 0.0
    %v2225 = vmax.f32 %v2111, 0.0
    %v2226 = vmax.f32 %v2116, 0.0
    %v2227 = vmax.f32 %v2121, 0.0
    %v2228 = vmax.f32 %v2126, 0.0
    %v2229 = vmax.f32 %v2131, 0.0
    %v2230 = vmax.f32 %v2136, 0.0
    %v2231 = vmax.f32 %v2141, 0.0
    %v2232 = vmax.f32 %v2146, 0.0
    %v2233 = vmax.f32 %v2151, 0.0
    %v2234 = vmax.f32 %v2156, 0.0
    %v2235 = vmax.f32 %v2161, 0.0
    %v2236 = vmax.f32 %v2166, 0.0
    %v2237 = vmax.f32 %v2171, 0.0
    %v2238 = vmax.f32 %v2176, 0.0
    %v2239 = vmax.f32 %v2181, 0.0
    %v2240 = vmax.f32 %v2186, 0.0
    %v2241 = vmax.f32 %v2191, 0.0
    %v2242 = vmax.f32 %v2196, 0.0
    %v2243 = vmax.f32 %v2201, 0.0
    %v2244 = vmax.f32 %v2206, 0.0
    %v2245 = vmax.f32 %v2211, 0.0
    %v2246 = vmax.f32 %v2216, 0.0
    %v2247 = vmax.f32 %v2219, %v2233
    %v2248 = vmax.f32 %v2220, %v2234
    %v2249 = vmax.f32 %v2221, %v2235
    %v2250 = vmax.f32 %v2222, %v2236
    %v2251 = vmax.f32 %v2223, %v2237
    %v2252 = vmax.f32 %v2224, %v2238
    %v2253 = vmax.f32 %v2225, %v2239
    %v2254 = vmax.f32 %v2226, %v2240
    %v2255 = vmax.f32 %v2227, %v2241
    %v2256 = vmax.f32 %v2228, %v2242
    %v2257 = vmax.f32 %v2229, %v2243
    %v2258 = vmax.f32 %v2230, %v2244
    %v2259 = vmax.f32 %v2231, %v2245
    %v2260 = vmax.f32 %v2232, %v2246
    %v2261 = vmax.f32 %v2247, %v2248
    %2262 = vst.msk [vmem:[#allocation2 + $0x118] sm:$0xff] %vm64, %v2261
    %v2263 = vmax.f32 %v2249, %v2250
    %2264 = vst.msk [vmem:[#allocation2 + $0x120] sm:$0xff] %vm64, %v2263
    %v2265 = vmax.f32 %v2251, %v2252
    %2266 = vst.msk [vmem:[#allocation2 + $0x128] sm:$0xff] %vm64, %v2265
    %v2267 = vmax.f32 %v2253, %v2254
    %2268 = vst.msk [vmem:[#allocation2 + $0x130] sm:$0xff] %vm64, %v2267
    %v2269 = vmax.f32 %v2255, %v2256
    %2270 = vst.msk [vmem:[#allocation2 + $0x138] sm:$0xff] %vm64, %v2269
    %v2271 = vmax.f32 %v2257, %v2258
    %2272 = vst.msk [vmem:[#allocation2 + $0x140] sm:$0xff] %vm64, %v2271
    %v2273 = vmax.f32 %v2259, %v2260
    %2274 = vst.msk [vmem:[#allocation2 + $0x148] sm:$0xff] %vm64, %v2273
    %v2275 = vld [vmem:[%s0 + $0x540] sm:$0xff]
    %v2276 = vld [vmem:[%s0 + $0x548] sm:$0xff]
    %v2277 = vld [vmem:[%s0 + $0x550] sm:$0xff]
    %v2278 = vld [vmem:[%s0 + $0x558] sm:$0xff]
    %v2279 = vld [vmem:[%s0 + $0x560] sm:$0xff]
    %v2280 = vld [vmem:[%s0 + $0x568] sm:$0xff]
    %v2281 = vld [vmem:[%s0 + $0x570] sm:$0xff]
    %v2282 = vld [vmem:[%s0 + $0x578] sm:$0xff]
    %v2283 = vld [vmem:[%s0 + $0x580] sm:$0xff]
    %v2284 = vld [vmem:[%s0 + $0x588] sm:$0xff]
    %v2285 = vld [vmem:[%s0 + $0x590] sm:$0xff]
    %v2286 = vld [vmem:[%s0 + $0x598] sm:$0xff]
    %v2287 = vld [vmem:[%s0 + $0x5a0] sm:$0xff]
    %v2288 = vld [vmem:[%s0 + $0x5a8] sm:$0xff]
    %v2289 = vld [vmem:[%s0 + $0x5b0] sm:$0xff]
    %v2290 = vld [vmem:[%s0 + $0x5b8] sm:$0xff]
    %v2291 = vld [vmem:[%s0 + $0x5c0] sm:$0xff]
    %v2292 = vld [vmem:[%s0 + $0x5c8] sm:$0xff]
    %v2293 = vld [vmem:[%s0 + $0x5d0] sm:$0xff]
    %v2294 = vld [vmem:[%s0 + $0x5d8] sm:$0xff]
    %v2295 = vld [vmem:[%s0 + $0x5e0] sm:$0xff]
    %v2296 = vld [vmem:[%s0 + $0x5e8] sm:$0xff]
    %v2297 = vld [vmem:[%s0 + $0x5f0] sm:$0xff]
    %v2298 = vld [vmem:[%s0 + $0x5f8] sm:$0xff]
    %v2299 = vld [vmem:[%s0 + $0x600] sm:$0xff]
    %v2300 = vld [vmem:[%s0 + $0x608] sm:$0xff]
    %v2301 = vld [vmem:[%s0 + $0x610] sm:$0xff]
    %v2302 = vld [vmem:[%s0 + $0x618] sm:$0xff]
    %v2304 = vsel %vm64, %v2275, 0
    %v2307 = vsel %vm64, %v2276, 0
    %v2310 = vsel %vm64, %v2277, 0
    %v2313 = vsel %vm64, %v2278, 0
    %v2316 = vsel %vm64, %v2279, 0
    %v2319 = vsel %vm64, %v2280, 0
    %v2322 = vsel %vm64, %v2281, 0
    %v2325 = vsel %vm64, %v2282, 0
    %v2328 = vsel %vm64, %v2283, 0
    %v2331 = vsel %vm64, %v2284, 0
    %v2334 = vsel %vm64, %v2285, 0
    %v2337 = vsel %vm64, %v2286, 0
    %v2340 = vsel %vm64, %v2287, 0
    %v2343 = vsel %vm64, %v2288, 0
    %v2346 = vsel %vm64, %v2289, 0
    %v2349 = vsel %vm64, %v2290, 0
    %v2352 = vsel %vm64, %v2291, 0
    %v2355 = vsel %vm64, %v2292, 0
    %v2358 = vsel %vm64, %v2293, 0
    %v2361 = vsel %vm64, %v2294, 0
    %v2364 = vsel %vm64, %v2295, 0
    %v2367 = vsel %vm64, %v2296, 0
    %v2370 = vsel %vm64, %v2297, 0
    %v2373 = vsel %vm64, %v2298, 0
    %v2376 = vsel %vm64, %v2299, 0
    %v2379 = vsel %vm64, %v2300, 0
    %v2382 = vsel %vm64, %v2301, 0
    %v2385 = vsel %vm64, %v2302, 0
    %2387 = vmatprep.subr.mxu0 0.0
    %2388 = vmatpush1.msra.mxu0 %v27
    %2389 = vmatprep.subr.mxu0 0.0
    %2390 = vmatpush1.msra.mxu0 %v28
    %2391 = vmatprep.subr.mxu0 0.0
    %2392 = vmatpush1.msra.mxu0 0.0
    %2393 = vmatprep.subr.mxu0 0.0
    %2394 = vmatpush1.msra.mxu0 0.0
    %2395 = vmatprep.subr.mxu0 0.0
    %2396 = vmatpush1.msra.mxu0 0.0
    %2397 = vmatprep.subr.mxu0 0.0
    %2398 = vmatpush1.msra.mxu0 0.0
    %2399 = vmatprep.subr.mxu0 0.0
    %2400 = vmatpush1.msra.mxu0 0.0
    %2401 = vmatprep.subr.mxu0 0.0
    %2402 = vmatpush1.msra.mxu0 0.0
    %2403 = vmatprep.subr.mxu0 0.0
    %2404 = vmatpush1.msra.mxu0 0.0
    %2405 = vmatprep.subr.mxu0 0.0
    %2406 = vmatpush1.msra.mxu0 0.0
    %2407 = vmatprep.subr.mxu0 0.0
    %2408 = vmatpush1.msra.mxu0 0.0
    %2409 = vmatprep.subr.mxu0 0.0
    %2410 = vmatpush1.msra.mxu0 0.0
    %2411 = vmatprep.subr.mxu0 0.0
    %2412 = vmatpush1.msra.mxu0 0.0
    %2413 = vmatprep.subr.mxu0 0.0
    %2414 = vmatpush1.msra.mxu0 0.0
    %2415 = vmatprep.subr.mxu0 0.0
    %2416 = vmatpush1.msra.mxu0 0.0
    %2417 = vmatprep.subr.mxu0 0.0
    %2418 = vmatpush1.msra.mxu0 0.0
    %2419 = vmatprep.subr.mxu0 0.0
    %2420 = vmatpush1.msra.mxu0 0.0
    %2421 = vmatprep.subr.mxu0 0.0
    %2422 = vmatpush1.msra.mxu0 0.0
    %2423 = vmatprep.subr.mxu0 0.0
    %2424 = vmatpush1.msra.mxu0 0.0
    %2425 = vmatprep.subr.mxu0 0.0
    %2426 = vmatpush1.msra.mxu0 0.0
    %2427 = vmatprep.subr.mxu0 0.0
    %2428 = vmatpush1.msra.mxu0 0.0
    %2429 = vmatprep.subr.mxu0 0.0
    %2430 = vmatpush1.msra.mxu0 0.0
    %2431 = vmatprep.subr.mxu0 0.0
    %2432 = vmatpush1.msra.mxu0 0.0
    %2433 = vmatprep.subr.mxu0 0.0
    %2434 = vmatpush1.msra.mxu0 0.0
    %2435 = vmatprep.subr.mxu0 0.0
    %2436 = vmatpush1.msra.mxu0 0.0
    %2437 = vmatprep.subr.mxu0 0.0
    %2438 = vmatpush1.msra.mxu0 0.0
    %2439 = vmatprep.subr.mxu0 0.0
    %2440 = vmatpush1.msra.mxu0 0.0
    %2441 = vmatprep.subr.mxu0 0.0
    %2442 = vmatpush1.msra.mxu0 0.0
    %2443 = vmatprep.subr.mxu0 0.0
    %2444 = vmatpush1.msra.mxu0 0.0
    %2445 = vmatprep.subr.mxu0 0.0
    %2446 = vmatpush1.msra.mxu0 0.0
    %2447 = vmatprep.subr.mxu0 0.0
    %2448 = vmatpush1.msra.mxu0 0.0
    %2449 = vmatprep.subr.mxu0 0.0
    %2450 = vmatpush1.msra.mxu0 0.0
    %2451 = vmatprep.mubr.f32.mxu0 0.0
    %2452 = vmatmul.mubr.f32.gmra.mrb[0].mxu0 %v2304
    %v2453 = vpop.f32.mrb[0].mxu0
    %v2454 = vadd.f32 %v62, %v2453
    %v2455 = vpop.f32.mrb[0].mxu0
    %2456 = vmatprep.mubr.f32.mxu0 0.0
    %2457 = vmatmul.mubr.f32.gmra.mrb[0].mxu0 %v2307
    %v2458 = vpop.f32.mrb[0].mxu0
    %v2459 = vadd.f32 %v62, %v2458
    %v2460 = vpop.f32.mrb[0].mxu0
    %2461 = vmatprep.mubr.f32.mxu0 0.0
    %2462 = vmatmul.mubr.f32.gmra.mrb[0].mxu0 %v2310
    %v2463 = vpop.f32.mrb[0].mxu0
    %v2464 = vadd.f32 %v62, %v2463
    %v2465 = vpop.f32.mrb[0].mxu0
    %2466 = vmatprep.mubr.f32.mxu0 0.0
    %2467 = vmatmul.mubr.f32.gmra.mrb[0].mxu0 %v2313
    %v2468 = vpop.f32.mrb[0].mxu0
    %v2469 = vadd.f32 %v62, %v2468
    %v2470 = vpop.f32.mrb[0].mxu0
    %2471 = vmatprep.mubr.f32.mxu0 0.0
    %2472 = vmatmul.mubr.f32.gmra.mrb[0].mxu0 %v2316
    %v2473 = vpop.f32.mrb[0].mxu0
    %v2474 = vadd.f32 %v62, %v2473
    %v2475 = vpop.f32.mrb[0].mxu0
    %2476 = vmatprep.mubr.f32.mxu0 0.0
    %2477 = vmatmul.mubr.f32.gmra.mrb[0].mxu0 %v2319
    %v2478 = vpop.f32.mrb[0].mxu0
    %v2479 = vadd.f32 %v62, %v2478
    %v2480 = vpop.f32.mrb[0].mxu0
    %2481 = vmatprep.mubr.f32.mxu0 0.0
    %2482 = vmatmul.mubr.f32.gmra.mrb[0].mxu0 %v2322
    %v2483 = vpop.f32.mrb[0].mxu0
    %v2484 = vadd.f32 %v62, %v2483
    %v2485 = vpop.f32.mrb[0].mxu0
    %2486 = vmatprep.mubr.f32.mxu0 0.0
    %2487 = vmatmul.mubr.f32.gmra.mrb[0].mxu0 %v2325
    %v2488 = vpop.f32.mrb[0].mxu0
    %v2489 = vadd.f32 %v62, %v2488
    %v2490 = vpop.f32.mrb[0].mxu0
    %2491 = vmatprep.mubr.f32.mxu0 0.0
    %2492 = vmatmul.mubr.f32.gmra.mrb[0].mxu0 %v2328
    %v2493 = vpop.f32.mrb[0].mxu0
    %v2494 = vadd.f32 %v62, %v2493
    %v2495 = vpop.f32.mrb[0].mxu0
    %2496 = vmatprep.mubr.f32.mxu0 0.0
    %2497 = vmatmul.mubr.f32.gmra.mrb[0].mxu0 %v2331
    %v2498 = vpop.f32.mrb[0].mxu0
    %v2499 = vadd.f32 %v62, %v2498
    %v2500 = vpop.f32.mrb[0].mxu0
    %2501 = vmatprep.mubr.f32.mxu0 0.0
    %2502 = vmatmul.mubr.f32.gmra.mrb[0].mxu0 %v2334
    %v2503 = vpop.f32.mrb[0].mxu0
    %v2504 = vadd.f32 %v62, %v2503
    %v2505 = vpop.f32.mrb[0].mxu0
    %2506 = vmatprep.mubr.f32.mxu0 0.0
    %2507 = vmatmul.mubr.f32.gmra.mrb[0].mxu0 %v2337
    %v2508 = vpop.f32.mrb[0].mxu0
    %v2509 = vadd.f32 %v62, %v2508
    %v2510 = vpop.f32.mrb[0].mxu0
    %2511 = vmatprep.mubr.f32.mxu0 0.0
    %2512 = vmatmul.mubr.f32.gmra.mrb[0].mxu0 %v2340
    %v2513 = vpop.f32.mrb[0].mxu0
    %v2514 = vadd.f32 %v62, %v2513
    %v2515 = vpop.f32.mrb[0].mxu0
    %2516 = vmatprep.mubr.f32.mxu0 0.0
    %2517 = vmatmul.mubr.f32.gmra.mrb[0].mxu0 %v2343
    %v2518 = vpop.f32.mrb[0].mxu0
    %v2519 = vadd.f32 %v62, %v2518
    %v2520 = vpop.f32.mrb[0].mxu0
    %2521 = vmatprep.mubr.f32.mxu0 0.0
    %2522 = vmatmul.mubr.f32.gmra.mrb[0].mxu0 %v2346
    %v2523 = vpop.f32.mrb[0].mxu0
    %v2524 = vadd.f32 %v62, %v2523
    %v2525 = vpop.f32.mrb[0].mxu0
    %2526 = vmatprep.mubr.f32.mxu0 0.0
    %2527 = vmatmul.mubr.f32.gmra.mrb[0].mxu0 %v2349
    %v2528 = vpop.f32.mrb[0].mxu0
    %v2529 = vadd.f32 %v62, %v2528
    %v2530 = vpop.f32.mrb[0].mxu0
    %2531 = vmatprep.mubr.f32.mxu0 0.0
    %2532 = vmatmul.mubr.f32.gmra.mrb[0].mxu0 %v2352
    %v2533 = vpop.f32.mrb[0].mxu0
    %v2534 = vadd.f32 %v62, %v2533
    %v2535 = vpop.f32.mrb[0].mxu0
    %2536 = vmatprep.mubr.f32.mxu0 0.0
    %2537 = vmatmul.mubr.f32.gmra.mrb[0].mxu0 %v2355
    %v2538 = vpop.f32.mrb[0].mxu0
    %v2539 = vadd.f32 %v62, %v2538
    %v2540 = vpop.f32.mrb[0].mxu0
    %2541 = vmatprep.mubr.f32.mxu0 0.0
    %2542 = vmatmul.mubr.f32.gmra.mrb[0].mxu0 %v2358
    %v2543 = vpop.f32.mrb[0].mxu0
    %v2544 = vadd.f32 %v62, %v2543
    %v2545 = vpop.f32.mrb[0].mxu0
    %2546 = vmatprep.mubr.f32.mxu0 0.0
    %2547 = vmatmul.mubr.f32.gmra.mrb[0].mxu0 %v2361
    %v2548 = vpop.f32.mrb[0].mxu0
    %v2549 = vadd.f32 %v62, %v2548
    %v2550 = vpop.f32.mrb[0].mxu0
    %2551 = vmatprep.mubr.f32.mxu0 0.0
    %2552 = vmatmul.mubr.f32.gmra.mrb[0].mxu0 %v2364
    %v2553 = vpop.f32.mrb[0].mxu0
    %v2554 = vadd.f32 %v62, %v2553
    %v2555 = vpop.f32.mrb[0].mxu0
    %2556 = vmatprep.mubr.f32.mxu0 0.0
    %2557 = vmatmul.mubr.f32.gmra.mrb[0].mxu0 %v2367
    %v2558 = vpop.f32.mrb[0].mxu0
    %v2559 = vadd.f32 %v62, %v2558
    %v2560 = vpop.f32.mrb[0].mxu0
    %2561 = vmatprep.mubr.f32.mxu0 0.0
    %2562 = vmatmul.mubr.f32.gmra.mrb[0].mxu0 %v2370
    %v2563 = vpop.f32.mrb[0].mxu0
    %v2564 = vadd.f32 %v62, %v2563
    %v2565 = vpop.f32.mrb[0].mxu0
    %2566 = vmatprep.mubr.f32.mxu0 0.0
    %2567 = vmatmul.mubr.f32.gmra.mrb[0].mxu0 %v2373
    %v2568 = vpop.f32.mrb[0].mxu0
    %v2569 = vadd.f32 %v62, %v2568
    %v2570 = vpop.f32.mrb[0].mxu0
    %2571 = vmatprep.mubr.f32.mxu0 0.0
    %2572 = vmatmul.mubr.f32.gmra.mrb[0].mxu0 %v2376
    %v2573 = vpop.f32.mrb[0].mxu0
    %v2574 = vadd.f32 %v62, %v2573
    %v2575 = vpop.f32.mrb[0].mxu0
    %2576 = vmatprep.mubr.f32.mxu0 0.0
    %2577 = vmatmul.mubr.f32.gmra.mrb[0].mxu0 %v2379
    %v2578 = vpop.f32.mrb[0].mxu0
    %v2579 = vadd.f32 %v62, %v2578
    %v2580 = vpop.f32.mrb[0].mxu0
    %2581 = vmatprep.mubr.f32.mxu0 0.0
    %2582 = vmatmul.mubr.f32.gmra.mrb[0].mxu0 %v2382
    %v2583 = vpop.f32.mrb[0].mxu0
    %v2584 = vadd.f32 %v62, %v2583
    %v2585 = vpop.f32.mrb[0].mxu0
    %2586 = vmatprep.mubr.f32.mxu0 0.0
    %2587 = vmatmul.mubr.f32.gmra.mrb[0].mxu0 %v2385
    %v2588 = vpop.f32.mrb[0].mxu0
    %v2589 = vadd.f32 %v62, %v2588
    %v2590 = vpop.f32.mrb[0].mxu0
    %2591 = vdwg.mxu0
    %v2592 = vmax.f32 %v2454, 0.0
    %v2593 = vmax.f32 %v2459, 0.0
    %v2594 = vmax.f32 %v2464, 0.0
    %v2595 = vmax.f32 %v2469, 0.0
    %v2596 = vmax.f32 %v2474, 0.0
    %v2597 = vmax.f32 %v2479, 0.0
    %v2598 = vmax.f32 %v2484, 0.0
    %v2599 = vmax.f32 %v2489, 0.0
    %v2600 = vmax.f32 %v2494, 0.0
    %v2601 = vmax.f32 %v2499, 0.0
    %v2602 = vmax.f32 %v2504, 0.0
    %v2603 = vmax.f32 %v2509, 0.0
    %v2604 = vmax.f32 %v2514, 0.0
    %v2605 = vmax.f32 %v2519, 0.0
    %v2606 = vmax.f32 %v2524, 0.0
    %v2607 = vmax.f32 %v2529, 0.0
    %v2608 = vmax.f32 %v2534, 0.0
    %v2609 = vmax.f32 %v2539, 0.0
    %v2610 = vmax.f32 %v2544, 0.0
    %v2611 = vmax.f32 %v2549, 0.0
    %v2612 = vmax.f32 %v2554, 0.0
    %v2613 = vmax.f32 %v2559, 0.0
    %v2614 = vmax.f32 %v2564, 0.0
    %v2615 = vmax.f32 %v2569, 0.0
    %v2616 = vmax.f32 %v2574, 0.0
    %v2617 = vmax.f32 %v2579, 0.0
    %v2618 = vmax.f32 %v2584, 0.0
    %v2619 = vmax.f32 %v2589, 0.0
    %v2620 = vmax.f32 %v2592, %v2606
    %v2621 = vmax.f32 %v2593, %v2607
    %v2622 = vmax.f32 %v2594, %v2608
    %v2623 = vmax.f32 %v2595, %v2609
    %v2624 = vmax.f32 %v2596, %v2610
    %v2625 = vmax.f32 %v2597, %v2611
    %v2626 = vmax.f32 %v2598, %v2612
    %v2627 = vmax.f32 %v2599, %v2613
    %v2628 = vmax.f32 %v2600, %v2614
    %v2629 = vmax.f32 %v2601, %v2615
    %v2630 = vmax.f32 %v2602, %v2616
    %v2631 = vmax.f32 %v2603, %v2617
    %v2632 = vmax.f32 %v2604, %v2618
    %v2633 = vmax.f32 %v2605, %v2619
    %v2634 = vmax.f32 %v2620, %v2621
    %2635 = vst.msk [vmem:[#allocation2 + $0x150] sm:$0xff] %vm64, %v2634
    %v2636 = vmax.f32 %v2622, %v2623
    %2637 = vst.msk [vmem:[#allocation2 + $0x158] sm:$0xff] %vm64, %v2636
    %v2638 = vmax.f32 %v2624, %v2625
    %2639 = vst.msk [vmem:[#allocation2 + $0x160] sm:$0xff] %vm64, %v2638
    %v2640 = vmax.f32 %v2626, %v2627
    %2641 = vst.msk [vmem:[#allocation2 + $0x168] sm:$0xff] %vm64, %v2640
    %v2642 = vmax.f32 %v2628, %v2629
    %2643 = vst.msk [vmem:[#allocation2 + $0x170] sm:$0xff] %vm64, %v2642
    %v2644 = vmax.f32 %v2630, %v2631
    %2645 = vst.msk [vmem:[#allocation2 + $0x178] sm:$0xff] %vm64, %v2644
    %v2646 = vmax.f32 %v2632, %v2633
    %2647 = vst.msk [vmem:[#allocation2 + $0x180] sm:$0xff] %vm64, %v2646
    %v2648 = vld [vmem:[#allocation2] sm:$0xff]
    %v2649 = vld [vmem:[#allocation2 + $0x8] sm:$0xff]
    %v2650 = vld [vmem:[#allocation2 + $0x10] sm:$0xff]
    %v2651 = vld [vmem:[#allocation2 + $0x18] sm:$0xff]
    %v2652 = vld [vmem:[#allocation2 + $0x20] sm:$0xff]
    %v2653 = vld [vmem:[#allocation2 + $0x38] sm:$0xff]
    %v2654 = vld [vmem:[#allocation2 + $0x40] sm:$0xff]
    %v2655 = vld [vmem:[#allocation2 + $0x48] sm:$0xff]
    %v2656 = vld [vmem:[#allocation2 + $0x50] sm:$0xff]
    %v2657 = vld [vmem:[#allocation2 + $0x58] sm:$0xff]
    %v2658 = vld [vmem:[#allocation2 + $0x70] sm:$0xff]
    %v2659 = vld [vmem:[#allocation2 + $0x78] sm:$0xff]
    %v2660 = vld [vmem:[#allocation2 + $0x80] sm:$0xff]
    %v2661 = vld [vmem:[#allocation2 + $0x88] sm:$0xff]
    %v2662 = vld [vmem:[#allocation2 + $0x90] sm:$0xff]
    %v2663 = vld [vmem:[#allocation2 + $0xa8] sm:$0xff]
    %v2664 = vld [vmem:[#allocation2 + $0xb0] sm:$0xff]
    %v2665 = vld [vmem:[#allocation2 + $0xb8] sm:$0xff]
    %v2666 = vld [vmem:[#allocation2 + $0xc0] sm:$0xff]
    %v2667 = vld [vmem:[#allocation2 + $0xc8] sm:$0xff]
    %v2668 = vld [vmem:[#allocation2 + $0xe0] sm:$0xff]
    %v2669 = vld [vmem:[#allocation2 + $0xe8] sm:$0xff]
    %v2670 = vld [vmem:[#allocation2 + $0xf0] sm:$0xff]
    %v2671 = vld [vmem:[#allocation2 + $0xf8] sm:$0xff]
    %v2672 = vld [vmem:[#allocation2 + $0x100] sm:$0xff]
    %v2673 = vld [vmem:[%s3] sm:$0xff]
    %v2674 = vld [vmem:[%s3 + $0x8] sm:$0xff]
    %v2675 = vld [vmem:[#allocation2 + $0x28] sm:$0xff]
    %v2676 = vld [vmem:[#allocation2 + $0x60] sm:$0xff]
    %v2677 = vld [vmem:[#allocation2 + $0x98] sm:$0xff]
    %v2678 = vld [vmem:[#allocation2 + $0xd0] sm:$0xff]
    %v2679 = vld [vmem:[#allocation2 + $0x108] sm:$0xff]
    %s2680 = scalar_lea.vmem %s3, 16
    %v2681 = vld [vmem:[%s2680] sm:$0xff]
    %v2682 = vld [vmem:[%s2680 + $0x8] sm:$0xff]
    %v2684 = vsel %vm64, %v2649, 0
    %v2687 = vsel %vm64, %v2650, 0
    %v2690 = vsel %vm64, %v2651, 0
    %v2693 = vsel %vm64, %v2652, 0
    %v2696 = vsel %vm64, %v2675, 0
    %v2699 = vsel %vm64, %v2654, 0
    %v2702 = vsel %vm64, %v2655, 0
    %v2705 = vsel %vm64, %v2656, 0
    %v2708 = vsel %vm64, %v2657, 0
    %v2711 = vsel %vm64, %v2676, 0
    %v2714 = vsel %vm64, %v2659, 0
    %v2717 = vsel %vm64, %v2660, 0
    %v2720 = vsel %vm64, %v2661, 0
    %v2723 = vsel %vm64, %v2662, 0
    %v2726 = vsel %vm64, %v2677, 0
    %v2729 = vsel %vm64, %v2664, 0
    %v2732 = vsel %vm64, %v2665, 0
    %v2735 = vsel %vm64, %v2666, 0
    %v2738 = vsel %vm64, %v2667, 0
    %v2741 = vsel %vm64, %v2678, 0
    %v2744 = vsel %vm64, %v2669, 0
    %v2747 = vsel %vm64, %v2670, 0
    %v2750 = vsel %vm64, %v2671, 0
    %v2753 = vsel %vm64, %v2672, 0
    %v2756 = vsel %vm64, %v2679, 0
    %2758 = vmatprep.subr.mxu0 0.0
    %2759 = vmatpush1.msra.mxu0 %v2681
    %2760 = vmatprep.subr.mxu0 0.0
    %2761 = vmatpush1.msra.mxu0 %v2682
    %2762 = vmatprep.subr.mxu0 0.0
    %2763 = vmatpush1.msra.mxu0 0.0
    %2764 = vmatprep.subr.mxu0 0.0
    %2765 = vmatpush1.msra.mxu0 0.0
    %2766 = vmatprep.subr.mxu0 0.0
    %2767 = vmatpush1.msra.mxu0 0.0
    %2768 = vmatprep.subr.mxu0 0.0
    %2769 = vmatpush1.msra.mxu0 0.0
    %2770 = vmatprep.subr.mxu0 0.0
    %2771 = vmatpush1.msra.mxu0 0.0
    %2772 = vmatprep.subr.mxu0 0.0
    %2773 = vmatpush1.msra.mxu0 0.0
    %2774 = vmatprep.subr.mxu0 0.0
    %2775 = vmatpush1.msra.mxu0 0.0
    %2776 = vmatprep.subr.mxu0 0.0
    %2777 = vmatpush1.msra.mxu0 0.0
    %2778 = vmatprep.subr.mxu0 0.0
    %2779 = vmatpush1.msra.mxu0 0.0
    %2780 = vmatprep.subr.mxu0 0.0
    %2781 = vmatpush1.msra.mxu0 0.0
    %2782 = vmatprep.subr.mxu0 0.0
    %2783 = vmatpush1.msra.mxu0 0.0
    %2784 = vmatprep.subr.mxu0 0.0
    %2785 = vmatpush1.msra.mxu0 0.0
    %2786 = vmatprep.subr.mxu0 0.0
    %2787 = vmatpush1.msra.mxu0 0.0
    %2788 = vmatprep.subr.mxu0 0.0
    %2789 = vmatpush1.msra.mxu0 0.0
    %2790 = vmatprep.subr.mxu0 0.0
    %2791 = vmatpush1.msra.mxu0 0.0
    %2792 = vmatprep.subr.mxu0 0.0
    %2793 = vmatpush1.msra.mxu0 0.0
    %2794 = vmatprep.subr.mxu0 0.0
    %2795 = vmatpush1.msra.mxu0 0.0
    %2796 = vmatprep.subr.mxu0 0.0
    %2797 = vmatpush1.msra.mxu0 0.0
    %2798 = vmatprep.subr.mxu0 0.0
    %2799 = vmatpush1.msra.mxu0 0.0
    %2800 = vmatprep.subr.mxu0 0.0
    %2801 = vmatpush1.msra.mxu0 0.0
    %2802 = vmatprep.subr.mxu0 0.0
    %2803 = vmatpush1.msra.mxu0 0.0
    %2804 = vmatprep.subr.mxu0 0.0
    %2805 = vmatpush1.msra.mxu0 0.0
    %2806 = vmatprep.subr.mxu0 0.0
    %2807 = vmatpush1.msra.mxu0 0.0
    %2808 = vmatprep.subr.mxu0 0.0
    %2809 = vmatpush1.msra.mxu0 0.0
    %2810 = vmatprep.subr.mxu0 0.0
    %2811 = vmatpush1.msra.mxu0 0.0
    %2812 = vmatprep.subr.mxu0 0.0
    %2813 = vmatpush1.msra.mxu0 0.0
    %2814 = vmatprep.subr.mxu0 0.0
    %2815 = vmatpush1.msra.mxu0 0.0
    %2816 = vmatprep.subr.mxu0 0.0
    %2817 = vmatpush1.msra.mxu0 0.0
    %2818 = vmatprep.subr.mxu0 0.0
    %2819 = vmatpush1.msra.mxu0 0.0
    %2820 = vmatprep.subr.mxu0 0.0
    %2821 = vmatpush1.msra.mxu0 0.0
    %2822 = vmatprep.mubr.f32.mxu0 0.0
    %2823 = vmatmul.mubr.f32.gmra.mrb[0].mxu0 %v2684
    %v2824 = vpop.f32.mrb[0].mxu0
    %v2825 = vadd.f32 0.0, %v2824
    %v2826 = vpop.f32.mrb[0].mxu0
    %2827 = vmatprep.mubr.f32.mxu0 0.0
    %2828 = vmatmul.mubr.f32.gmra.mrb[0].mxu0 %v2687
    %v2829 = vpop.f32.mrb[0].mxu0
    %v2830 = vadd.f32 0.0, %v2829
    %v2831 = vpop.f32.mrb[0].mxu0
    %2832 = vmatprep.mubr.f32.mxu0 0.0
    %2833 = vmatmul.mubr.f32.gmra.mrb[0].mxu0 %v2690
    %v2834 = vpop.f32.mrb[0].mxu0
    %v2835 = vadd.f32 0.0, %v2834
    %v2836 = vpop.f32.mrb[0].mxu0
    %2837 = vmatprep.mubr.f32.mxu0 0.0
    %2838 = vmatmul.mubr.f32.gmra.mrb[0].mxu0 %v2693
    %v2839 = vpop.f32.mrb[0].mxu0
    %v2840 = vadd.f32 0.0, %v2839
    %v2841 = vpop.f32.mrb[0].mxu0
    %2842 = vmatprep.mubr.f32.mxu0 0.0
    %2843 = vmatmul.mubr.f32.gmra.mrb[0].mxu0 %v2696
    %v2844 = vpop.f32.mrb[0].mxu0
    %v2845 = vpop.f32.mrb[0].mxu0
    %2846 = vmatprep.mubr.f32.mxu0 0.0
    %2847 = vmatmul.mubr.f32.gmra.mrb[0].mxu0 %v2699
    %v2848 = vpop.f32.mrb[0].mxu0
    %v2849 = vadd.f32 0.0, %v2848
    %v2850 = vpop.f32.mrb[0].mxu0
    %2851 = vmatprep.mubr.f32.mxu0 0.0
    %2852 = vmatmul.mubr.f32.gmra.mrb[0].mxu0 %v2702
    %v2853 = vpop.f32.mrb[0].mxu0
    %v2854 = vadd.f32 0.0, %v2853
    %v2855 = vpop.f32.mrb[0].mxu0
    %2856 = vmatprep.mubr.f32.mxu0 0.0
    %2857 = vmatmul.mubr.f32.gmra.mrb[0].mxu0 %v2705
    %v2858 = vpop.f32.mrb[0].mxu0
    %v2859 = vadd.f32 0.0, %v2858
    %v2860 = vpop.f32.mrb[0].mxu0
    %2861 = vmatprep.mubr.f32.mxu0 0.0
    %2862 = vmatmul.mubr.f32.gmra.mrb[0].mxu0 %v2708
    %v2863 = vpop.f32.mrb[0].mxu0
    %v2864 = vadd.f32 0.0, %v2863
    %v2865 = vpop.f32.mrb[0].mxu0
    %2866 = vmatprep.mubr.f32.mxu0 0.0
    %2867 = vmatmul.mubr.f32.gmra.mrb[0].mxu0 %v2711
    %v2868 = vpop.f32.mrb[0].mxu0
    %v2869 = vpop.f32.mrb[0].mxu0
    %2870 = vmatprep.mubr.f32.mxu0 0.0
    %2871 = vmatmul.mubr.f32.gmra.mrb[0].mxu0 %v2714
    %v2872 = vpop.f32.mrb[0].mxu0
    %v2873 = vadd.f32 0.0, %v2872
    %v2874 = vpop.f32.mrb[0].mxu0
    %2875 = vmatprep.mubr.f32.mxu0 0.0
    %2876 = vmatmul.mubr.f32.gmra.mrb[0].mxu0 %v2717
    %v2877 = vpop.f32.mrb[0].mxu0
    %v2878 = vadd.f32 0.0, %v2877
    %v2879 = vpop.f32.mrb[0].mxu0
    %2880 = vmatprep.mubr.f32.mxu0 0.0
    %2881 = vmatmul.mubr.f32.gmra.mrb[0].mxu0 %v2720
    %v2882 = vpop.f32.mrb[0].mxu0
    %v2883 = vadd.f32 0.0, %v2882
    %v2884 = vpop.f32.mrb[0].mxu0
    %2885 = vmatprep.mubr.f32.mxu0 0.0
    %2886 = vmatmul.mubr.f32.gmra.mrb[0].mxu0 %v2723
    %v2887 = vpop.f32.mrb[0].mxu0
    %v2888 = vadd.f32 0.0, %v2887
    %v2889 = vpop.f32.mrb[0].mxu0
    %2890 = vmatprep.mubr.f32.mxu0 0.0
    %2891 = vmatmul.mubr.f32.gmra.mrb[0].mxu0 %v2726
    %v2892 = vpop.f32.mrb[0].mxu0
    %v2893 = vpop.f32.mrb[0].mxu0
    %2894 = vmatprep.mubr.f32.mxu0 0.0
    %2895 = vmatmul.mubr.f32.gmra.mrb[0].mxu0 %v2729
    %v2896 = vpop.f32.mrb[0].mxu0
    %v2897 = vadd.f32 0.0, %v2896
    %v2898 = vpop.f32.mrb[0].mxu0
    %2899 = vmatprep.mubr.f32.mxu0 0.0
    %2900 = vmatmul.mubr.f32.gmra.mrb[0].mxu0 %v2732
    %v2901 = vpop.f32.mrb[0].mxu0
    %v2902 = vadd.f32 0.0, %v2901
    %v2903 = vpop.f32.mrb[0].mxu0
    %2904 = vmatprep.mubr.f32.mxu0 0.0
    %2905 = vmatmul.mubr.f32.gmra.mrb[0].mxu0 %v2735
    %v2906 = vpop.f32.mrb[0].mxu0
    %v2907 = vadd.f32 0.0, %v2906
    %v2908 = vpop.f32.mrb[0].mxu0
    %2909 = vmatprep.mubr.f32.mxu0 0.0
    %2910 = vmatmul.mubr.f32.gmra.mrb[0].mxu0 %v2738
    %v2911 = vpop.f32.mrb[0].mxu0
    %v2912 = vadd.f32 0.0, %v2911
    %v2913 = vpop.f32.mrb[0].mxu0
    %2914 = vmatprep.mubr.f32.mxu0 0.0
    %2915 = vmatmul.mubr.f32.gmra.mrb[0].mxu0 %v2741
    %v2916 = vpop.f32.mrb[0].mxu0
    %v2917 = vpop.f32.mrb[0].mxu0
    %2918 = vmatprep.mubr.f32.mxu0 0.0
    %2919 = vmatmul.mubr.f32.gmra.mrb[0].mxu0 %v2744
    %v2920 = vpop.f32.mrb[0].mxu0
    %v2921 = vpop.f32.mrb[0].mxu0
    %2922 = vmatprep.mubr.f32.mxu0 0.0
    %2923 = vmatmul.mubr.f32.gmra.mrb[0].mxu0 %v2747
    %v2924 = vpop.f32.mrb[0].mxu0
    %v2925 = vpop.f32.mrb[0].mxu0
    %2926 = vmatprep.mubr.f32.mxu0 0.0
    %2927 = vmatmul.mubr.f32.gmra.mrb[0].mxu0 %v2750
    %v2928 = vpop.f32.mrb[0].mxu0
    %v2929 = vpop.f32.mrb[0].mxu0
    %2930 = vmatprep.mubr.f32.mxu0 0.0
    %2931 = vmatmul.mubr.f32.gmra.mrb[0].mxu0 %v2753
    %v2932 = vpop.f32.mrb[0].mxu0
    %v2933 = vpop.f32.mrb[0].mxu0
    %2934 = vmatprep.mubr.f32.mxu0 0.0
    %2935 = vmatmul.mubr.f32.gmra.mrb[0].mxu0 %v2756
    %v2936 = vpop.f32.mrb[0].mxu0
    %v2937 = vpop.f32.mrb[0].mxu0
    %2938 = vdwg.mxu0
    %v2940 = vsel %vm64, %v2648, 0
    %v2943 = vsel %vm64, %v2653, 0
    %v2946 = vsel %vm64, %v2658, 0
    %v2949 = vsel %vm64, %v2663, 0
    %v2952 = vsel %vm64, %v2668, 0
    %2954 = vmatprep.subr.mxu0 0.0
    %2955 = vmatpush1.msra.mxu0 %v2673
    %2956 = vmatprep.subr.mxu0 0.0
    %2957 = vmatpush1.msra.mxu0 %v2674
    %2958 = vmatprep.subr.mxu0 0.0
    %2959 = vmatpush1.msra.mxu0 0.0
    %2960 = vmatprep.subr.mxu0 0.0
    %2961 = vmatpush1.msra.mxu0 0.0
    %2962 = vmatprep.subr.mxu0 0.0
    %2963 = vmatpush1.msra.mxu0 0.0
    %2964 = vmatprep.subr.mxu0 0.0
    %2965 = vmatpush1.msra.mxu0 0.0
    %2966 = vmatprep.subr.mxu0 0.0
    %2967 = vmatpush1.msra.mxu0 0.0
    %2968 = vmatprep.subr.mxu0 0.0
    %2969 = vmatpush1.msra.mxu0 0.0
    %2970 = vmatprep.subr.mxu0 0.0
    %2971 = vmatpush1.msra.mxu0 0.0
    %2972 = vmatprep.subr.mxu0 0.0
    %2973 = vmatpush1.msra.mxu0 0.0
    %2974 = vmatprep.subr.mxu0 0.0
    %2975 = vmatpush1.msra.mxu0 0.0
    %2976 = vmatprep.subr.mxu0 0.0
    %2977 = vmatpush1.msra.mxu0 0.0
    %2978 = vmatprep.subr.mxu0 0.0
    %2979 = vmatpush1.msra.mxu0 0.0
    %2980 = vmatprep.subr.mxu0 0.0
    %2981 = vmatpush1.msra.mxu0 0.0
    %2982 = vmatprep.subr.mxu0 0.0
    %2983 = vmatpush1.msra.mxu0 0.0
    %2984 = vmatprep.subr.mxu0 0.0
    %2985 = vmatpush1.msra.mxu0 0.0
    %2986 = vmatprep.subr.mxu0 0.0
    %2987 = vmatpush1.msra.mxu0 0.0
    %2988 = vmatprep.subr.mxu0 0.0
    %2989 = vmatpush1.msra.mxu0 0.0
    %2990 = vmatprep.subr.mxu0 0.0
    %2991 = vmatpush1.msra.mxu0 0.0
    %2992 = vmatprep.subr.mxu0 0.0
    %2993 = vmatpush1.msra.mxu0 0.0
    %2994 = vmatprep.subr.mxu0 0.0
    %2995 = vmatpush1.msra.mxu0 0.0
    %2996 = vmatprep.subr.mxu0 0.0
    %2997 = vmatpush1.msra.mxu0 0.0
    %2998 = vmatprep.subr.mxu0 0.0
    %2999 = vmatpush1.msra.mxu0 0.0
    %3000 = vmatprep.subr.mxu0 0.0
    %3001 = vmatpush1.msra.mxu0 0.0
    %3002 = vmatprep.subr.mxu0 0.0
    %3003 = vmatpush1.msra.mxu0 0.0
    %3004 = vmatprep.subr.mxu0 0.0
    %3005 = vmatpush1.msra.mxu0 0.0
    %3006 = vmatprep.subr.mxu0 0.0
    %3007 = vmatpush1.msra.mxu0 0.0
    %3008 = vmatprep.subr.mxu0 0.0
    %3009 = vmatpush1.msra.mxu0 0.0
    %3010 = vmatprep.subr.mxu0 0.0
    %3011 = vmatpush1.msra.mxu0 0.0
    %3012 = vmatprep.subr.mxu0 0.0
    %3013 = vmatpush1.msra.mxu0 0.0
    %3014 = vmatprep.subr.mxu0 0.0
    %3015 = vmatpush1.msra.mxu0 0.0
    %3016 = vmatprep.subr.mxu0 0.0
    %3017 = vmatpush1.msra.mxu0 0.0
    %3018 = vmatprep.mubr.f32.mxu0 0.0
    %3019 = vmatmul.mubr.f32.gmra.mrb[0].mxu0 %v2940
    %v3020 = vpop.f32.mrb[0].mxu0
    %v3021 = vadd.f32 %v2825, %v3020
    %v3022 = vpop.f32.mrb[0].mxu0
    %3023 = vmatprep.mubr.f32.mxu0 0.0
    %3024 = vmatmul.mubr.f32.gmra.mrb[0].mxu0 %v2684
    %v3025 = vpop.f32.mrb[0].mxu0
    %v3026 = vadd.f32 %v2830, %v3025
    %v3027 = vpop.f32.mrb[0].mxu0
    %3028 = vmatprep.mubr.f32.mxu0 0.0
    %3029 = vmatmul.mubr.f32.gmra.mrb[0].mxu0 %v2687
    %v3030 = vpop.f32.mrb[0].mxu0
    %v3031 = vadd.f32 %v2835, %v3030
    %v3032 = vpop.f32.mrb[0].mxu0
    %3033 = vmatprep.mubr.f32.mxu0 0.0
    %3034 = vmatmul.mubr.f32.gmra.mrb[0].mxu0 %v2690
    %v3035 = vpop.f32.mrb[0].mxu0
    %v3036 = vadd.f32 %v2840, %v3035
    %v3037 = vpop.f32.mrb[0].mxu0
    %3038 = vmatprep.mubr.f32.mxu0 0.0
    %3039 = vmatmul.mubr.f32.gmra.mrb[0].mxu0 %v2693
    %v3040 = vpop.f32.mrb[0].mxu0
    %v3041 = vpop.f32.mrb[0].mxu0
    %3042 = vmatprep.mubr.f32.mxu0 0.0
    %3043 = vmatmul.mubr.f32.gmra.mrb[0].mxu0 %v2943
    %v3044 = vpop.f32.mrb[0].mxu0
    %v3045 = vadd.f32 %v2849, %v3044
    %v3046 = vpop.f32.mrb[0].mxu0
    %3047 = vmatprep.mubr.f32.mxu0 0.0
    %3048 = vmatmul.mubr.f32.gmra.mrb[0].mxu0 %v2699
    %v3049 = vpop.f32.mrb[0].mxu0
    %v3050 = vadd.f32 %v2854, %v3049
    %v3051 = vpop.f32.mrb[0].mxu0
    %3052 = vmatprep.mubr.f32.mxu0 0.0
    %3053 = vmatmul.mubr.f32.gmra.mrb[0].mxu0 %v2702
    %v3054 = vpop.f32.mrb[0].mxu0
    %v3055 = vadd.f32 %v2859, %v3054
    %v3056 = vpop.f32.mrb[0].mxu0
    %3057 = vmatprep.mubr.f32.mxu0 0.0
    %3058 = vmatmul.mubr.f32.gmra.mrb[0].mxu0 %v2705
    %v3059 = vpop.f32.mrb[0].mxu0
    %v3060 = vadd.f32 %v2864, %v3059
    %v3061 = vpop.f32.mrb[0].mxu0
    %3062 = vmatprep.mubr.f32.mxu0 0.0
    %3063 = vmatmul.mubr.f32.gmra.mrb[0].mxu0 %v2708
    %v3064 = vpop.f32.mrb[0].mxu0
    %v3065 = vpop.f32.mrb[0].mxu0
    %3066 = vmatprep.mubr.f32.mxu0 0.0
    %3067 = vmatmul.mubr.f32.gmra.mrb[0].mxu0 %v2946
    %v3068 = vpop.f32.mrb[0].mxu0
    %v3069 = vadd.f32 %v2873, %v3068
    %v3070 = vpop.f32.mrb[0].mxu0
    %3071 = vmatprep.mubr.f32.mxu0 0.0
    %3072 = vmatmul.mubr.f32.gmra.mrb[0].mxu0 %v2714
    %v3073 = vpop.f32.mrb[0].mxu0
    %v3074 = vadd.f32 %v2878, %v3073
    %v3075 = vpop.f32.mrb[0].mxu0
    %3076 = vmatprep.mubr.f32.mxu0 0.0
    %3077 = vmatmul.mubr.f32.gmra.mrb[0].mxu0 %v2717
    %v3078 = vpop.f32.mrb[0].mxu0
    %v3079 = vadd.f32 %v2883, %v3078
    %v3080 = vpop.f32.mrb[0].mxu0
    %3081 = vmatprep.mubr.f32.mxu0 0.0
    %3082 = vmatmul.mubr.f32.gmra.mrb[0].mxu0 %v2720
    %v3083 = vpop.f32.mrb[0].mxu0
    %v3084 = vadd.f32 %v2888, %v3083
    %v3085 = vpop.f32.mrb[0].mxu0
    %3086 = vmatprep.mubr.f32.mxu0 0.0
    %3087 = vmatmul.mubr.f32.gmra.mrb[0].mxu0 %v2723
    %v3088 = vpop.f32.mrb[0].mxu0
    %v3089 = vpop.f32.mrb[0].mxu0
    %3090 = vmatprep.mubr.f32.mxu0 0.0
    %3091 = vmatmul.mubr.f32.gmra.mrb[0].mxu0 %v2949
    %v3092 = vpop.f32.mrb[0].mxu0
    %v3093 = vadd.f32 %v2897, %v3092
    %v3094 = vpop.f32.mrb[0].mxu0
    %3095 = vmatprep.mubr.f32.mxu0 0.0
    %3096 = vmatmul.mubr.f32.gmra.mrb[0].mxu0 %v2729
    %v3097 = vpop.f32.mrb[0].mxu0
    %v3098 = vadd.f32 %v2902, %v3097
    %v3099 = vpop.f32.mrb[0].mxu0
    %3100 = vmatprep.mubr.f32.mxu0 0.0
    %3101 = vmatmul.mubr.f32.gmra.mrb[0].mxu0 %v2732
    %v3102 = vpop.f32.mrb[0].mxu0
    %v3103 = vadd.f32 %v2907, %v3102
    %v3104 = vpop.f32.mrb[0].mxu0
    %3105 = vmatprep.mubr.f32.mxu0 0.0
    %3106 = vmatmul.mubr.f32.gmra.mrb[0].mxu0 %v2735
    %v3107 = vpop.f32.mrb[0].mxu0
    %v3108 = vadd.f32 %v2912, %v3107
    %v3109 = vpop.f32.mrb[0].mxu0
    %3110 = vmatprep.mubr.f32.mxu0 0.0
    %3111 = vmatmul.mubr.f32.gmra.mrb[0].mxu0 %v2738
    %v3112 = vpop.f32.mrb[0].mxu0
    %v3113 = vpop.f32.mrb[0].mxu0
    %3114 = vmatprep.mubr.f32.mxu0 0.0
    %3115 = vmatmul.mubr.f32.gmra.mrb[0].mxu0 %v2952
    %v3116 = vpop.f32.mrb[0].mxu0
    %v3117 = vpop.f32.mrb[0].mxu0
    %3118 = vmatprep.mubr.f32.mxu0 0.0
    %3119 = vmatmul.mubr.f32.gmra.mrb[0].mxu0 %v2744
    %v3120 = vpop.f32.mrb[0].mxu0
    %v3121 = vpop.f32.mrb[0].mxu0
    %3122 = vmatprep.mubr.f32.mxu0 0.0
    %3123 = vmatmul.mubr.f32.gmra.mrb[0].mxu0 %v2747
    %v3124 = vpop.f32.mrb[0].mxu0
    %v3125 = vpop.f32.mrb[0].mxu0
    %3126 = vmatprep.mubr.f32.mxu0 0.0
    %3127 = vmatmul.mubr.f32.gmra.mrb[0].mxu0 %v2750
    %v3128 = vpop.f32.mrb[0].mxu0
    %v3129 = vpop.f32.mrb[0].mxu0
    %3130 = vmatprep.mubr.f32.mxu0 0.0
    %3131 = vmatmul.mubr.f32.gmra.mrb[0].mxu0 %v2753
    %v3132 = vpop.f32.mrb[0].mxu0
    %v3133 = vpop.f32.mrb[0].mxu0
    %3134 = vdwg.mxu0
    %v3135 = vld [vmem:[#allocation2 + $0x10] sm:$0xff]
    %v3136 = vld [vmem:[#allocation2 + $0x18] sm:$0xff]
    %v3137 = vld [vmem:[#allocation2 + $0x20] sm:$0xff]
    %v3138 = vld [vmem:[#allocation2 + $0x28] sm:$0xff]
    %v3139 = vld [vmem:[#allocation2 + $0x30] sm:$0xff]
    %v3140 = vld [vmem:[#allocation2 + $0x48] sm:$0xff]
    %v3141 = vld [vmem:[#allocation2 + $0x50] sm:$0xff]
    %v3142 = vld [vmem:[#allocation2 + $0x58] sm:$0xff]
    %v3143 = vld [vmem:[#allocation2 + $0x60] sm:$0xff]
    %v3144 = vld [vmem:[#allocation2 + $0x68] sm:$0xff]
    %v3145 = vld [vmem:[#allocation2 + $0x80] sm:$0xff]
    %v3146 = vld [vmem:[#allocation2 + $0x88] sm:$0xff]
    %v3147 = vld [vmem:[#allocation2 + $0x90] sm:$0xff]
    %v3148 = vld [vmem:[#allocation2 + $0x98] sm:$0xff]
    %v3149 = vld [vmem:[#allocation2 + $0xa0] sm:$0xff]
    %v3150 = vld [vmem:[#allocation2 + $0xb8] sm:$0xff]
    %v3151 = vld [vmem:[#allocation2 + $0xc0] sm:$0xff]
    %v3152 = vld [vmem:[#allocation2 + $0xc8] sm:$0xff]
    %v3153 = vld [vmem:[#allocation2 + $0xd0] sm:$0xff]
    %v3154 = vld [vmem:[#allocation2 + $0xd8] sm:$0xff]
    %v3155 = vld [vmem:[#allocation2 + $0xf0] sm:$0xff]
    %v3156 = vld [vmem:[#allocation2 + $0xf8] sm:$0xff]
    %v3157 = vld [vmem:[#allocation2 + $0x100] sm:$0xff]
    %v3158 = vld [vmem:[#allocation2 + $0x108] sm:$0xff]
    %v3159 = vld [vmem:[#allocation2 + $0x110] sm:$0xff]
    %s3160 = scalar_lea.vmem %s3, 32
    %v3161 = vld [vmem:[%s3160] sm:$0xff]
    %v3162 = vld [vmem:[%s3160 + $0x8] sm:$0xff]
    %v3164 = vsel %vm64, %v3135, 0
    %v3167 = vsel %vm64, %v3136, 0
    %v3170 = vsel %vm64, %v3137, 0
    %v3173 = vsel %vm64, %v3138, 0
    %v3176 = vsel %vm64, %v3139, 0
    %v3179 = vsel %vm64, %v3140, 0
    %v3182 = vsel %vm64, %v3141, 0
    %v3185 = vsel %vm64, %v3142, 0
    %v3188 = vsel %vm64, %v3143, 0
    %v3191 = vsel %vm64, %v3144, 0
    %v3194 = vsel %vm64, %v3145, 0
    %v3197 = vsel %vm64, %v3146, 0
    %v3200 = vsel %vm64, %v3147, 0
    %v3203 = vsel %vm64, %v3148, 0
    %v3206 = vsel %vm64, %v3149, 0
    %v3209 = vsel %vm64, %v3150, 0
    %v3212 = vsel %vm64, %v3151, 0
    %v3215 = vsel %vm64, %v3152, 0
    %v3218 = vsel %vm64, %v3153, 0
    %v3221 = vsel %vm64, %v3154, 0
    %v3224 = vsel %vm64, %v3155, 0
    %v3227 = vsel %vm64, %v3156, 0
    %v3230 = vsel %vm64, %v3157, 0
    %v3233 = vsel %vm64, %v3158, 0
    %v3236 = vsel %vm64, %v3159, 0
    %3238 = vmatprep.subr.mxu0 0.0
    %3239 = vmatpush1.msra.mxu0 %v3161
    %3240 = vmatprep.subr.mxu0 0.0
    %3241 = vmatpush1.msra.mxu0 %v3162
    %3242 = vmatprep.subr.mxu0 0.0
    %3243 = vmatpush1.msra.mxu0 0.0
    %3244 = vmatprep.subr.mxu0 0.0
    %3245 = vmatpush1.msra.mxu0 0.0
    %3246 = vmatprep.subr.mxu0 0.0
    %3247 = vmatpush1.msra.mxu0 0.0
    %3248 = vmatprep.subr.mxu0 0.0
    %3249 = vmatpush1.msra.mxu0 0.0
    %3250 = vmatprep.subr.mxu0 0.0
    %3251 = vmatpush1.msra.mxu0 0.0
    %3252 = vmatprep.subr.mxu0 0.0
    %3253 = vmatpush1.msra.mxu0 0.0
    %3254 = vmatprep.subr.mxu0 0.0
    %3255 = vmatpush1.msra.mxu0 0.0
    %3256 = vmatprep.subr.mxu0 0.0
    %3257 = vmatpush1.msra.mxu0 0.0
    %3258 = vmatprep.subr.mxu0 0.0
    %3259 = vmatpush1.msra.mxu0 0.0
    %3260 = vmatprep.subr.mxu0 0.0
    %3261 = vmatpush1.msra.mxu0 0.0
    %3262 = vmatprep.subr.mxu0 0.0
    %3263 = vmatpush1.msra.mxu0 0.0
    %3264 = vmatprep.subr.mxu0 0.0
    %3265 = vmatpush1.msra.mxu0 0.0
    %3266 = vmatprep.subr.mxu0 0.0
    %3267 = vmatpush1.msra.mxu0 0.0
    %3268 = vmatprep.subr.mxu0 0.0
    %3269 = vmatpush1.msra.mxu0 0.0
    %3270 = vmatprep.subr.mxu0 0.0
    %3271 = vmatpush1.msra.mxu0 0.0
    %3272 = vmatprep.subr.mxu0 0.0
    %3273 = vmatpush1.msra.mxu0 0.0
    %3274 = vmatprep.subr.mxu0 0.0
    %3275 = vmatpush1.msra.mxu0 0.0
    %3276 = vmatprep.subr.mxu0 0.0
    %3277 = vmatpush1.msra.mxu0 0.0
    %3278 = vmatprep.subr.mxu0 0.0
    %3279 = vmatpush1.msra.mxu0 0.0
    %3280 = vmatprep.subr.mxu0 0.0
    %3281 = vmatpush1.msra.mxu0 0.0
    %3282 = vmatprep.subr.mxu0 0.0
    %3283 = vmatpush1.msra.mxu0 0.0
    %3284 = vmatprep.subr.mxu0 0.0
    %3285 = vmatpush1.msra.mxu0 0.0
    %3286 = vmatprep.subr.mxu0 0.0
    %3287 = vmatpush1.msra.mxu0 0.0
    %3288 = vmatprep.subr.mxu0 0.0
    %3289 = vmatpush1.msra.mxu0 0.0
    %3290 = vmatprep.subr.mxu0 0.0
    %3291 = vmatpush1.msra.mxu0 0.0
    %3292 = vmatprep.subr.mxu0 0.0
    %3293 = vmatpush1.msra.mxu0 0.0
    %3294 = vmatprep.subr.mxu0 0.0
    %3295 = vmatpush1.msra.mxu0 0.0
    %3296 = vmatprep.subr.mxu0 0.0
    %3297 = vmatpush1.msra.mxu0 0.0
    %3298 = vmatprep.subr.mxu0 0.0
    %3299 = vmatpush1.msra.mxu0 0.0
    %3300 = vmatprep.subr.mxu0 0.0
    %3301 = vmatpush1.msra.mxu0 0.0
    %3302 = vmatprep.mubr.f32.mxu0 0.0
    %3303 = vmatmul.mubr.f32.gmra.mrb[0].mxu0 %v3164
    %v3304 = vpop.f32.mrb[0].mxu0
    %v3305 = vadd.f32 0.0, %v3304
    %v3306 = vpop.f32.mrb[0].mxu0
    %3307 = vmatprep.mubr.f32.mxu0 0.0
    %3308 = vmatmul.mubr.f32.gmra.mrb[0].mxu0 %v3167
    %v3309 = vpop.f32.mrb[0].mxu0
    %v3310 = vadd.f32 0.0, %v3309
    %v3311 = vpop.f32.mrb[0].mxu0
    %3312 = vmatprep.mubr.f32.mxu0 0.0
    %3313 = vmatmul.mubr.f32.gmra.mrb[0].mxu0 %v3170
    %v3314 = vpop.f32.mrb[0].mxu0
    %v3315 = vadd.f32 0.0, %v3314
    %v3316 = vpop.f32.mrb[0].mxu0
    %3317 = vmatprep.mubr.f32.mxu0 0.0
    %3318 = vmatmul.mubr.f32.gmra.mrb[0].mxu0 %v3173
    %v3319 = vpop.f32.mrb[0].mxu0
    %v3320 = vadd.f32 0.0, %v3319
    %v3321 = vpop.f32.mrb[0].mxu0
    %3322 = vmatprep.mubr.f32.mxu0 0.0
    %3323 = vmatmul.mubr.f32.gmra.mrb[0].mxu0 %v3176
    %v3324 = vpop.f32.mrb[0].mxu0
    %v3325 = vpop.f32.mrb[0].mxu0
    %3326 = vmatprep.mubr.f32.mxu0 0.0
    %3327 = vmatmul.mubr.f32.gmra.mrb[0].mxu0 %v3179
    %v3328 = vpop.f32.mrb[0].mxu0
    %v3329 = vadd.f32 0.0, %v3328
    %v3330 = vpop.f32.mrb[0].mxu0
    %3331 = vmatprep.mubr.f32.mxu0 0.0
    %3332 = vmatmul.mubr.f32.gmra.mrb[0].mxu0 %v3182
    %v3333 = vpop.f32.mrb[0].mxu0
    %v3334 = vadd.f32 0.0, %v3333
    %v3335 = vpop.f32.mrb[0].mxu0
    %3336 = vmatprep.mubr.f32.mxu0 0.0
    %3337 = vmatmul.mubr.f32.gmra.mrb[0].mxu0 %v3185
    %v3338 = vpop.f32.mrb[0].mxu0
    %v3339 = vadd.f32 0.0, %v3338
    %v3340 = vpop.f32.mrb[0].mxu0
    %3341 = vmatprep.mubr.f32.mxu0 0.0
    %3342 = vmatmul.mubr.f32.gmra.mrb[0].mxu0 %v3188
    %v3343 = vpop.f32.mrb[0].mxu0
    %v3344 = vadd.f32 0.0, %v3343
    %v3345 = vpop.f32.mrb[0].mxu0
    %3346 = vmatprep.mubr.f32.mxu0 0.0
    %3347 = vmatmul.mubr.f32.gmra.mrb[0].mxu0 %v3191
    %v3348 = vpop.f32.mrb[0].mxu0
    %v3349 = vpop.f32.mrb[0].mxu0
    %3350 = vmatprep.mubr.f32.mxu0 0.0
    %3351 = vmatmul.mubr.f32.gmra.mrb[0].mxu0 %v3194
    %v3352 = vpop.f32.mrb[0].mxu0
    %v3353 = vadd.f32 0.0, %v3352
    %v3354 = vpop.f32.mrb[0].mxu0
    %3355 = vmatprep.mubr.f32.mxu0 0.0
    %3356 = vmatmul.mubr.f32.gmra.mrb[0].mxu0 %v3197
    %v3357 = vpop.f32.mrb[0].mxu0
    %v3358 = vadd.f32 0.0, %v3357
    %v3359 = vpop.f32.mrb[0].mxu0
    %3360 = vmatprep.mubr.f32.mxu0 0.0
    %3361 = vmatmul.mubr.f32.gmra.mrb[0].mxu0 %v3200
    %v3362 = vpop.f32.mrb[0].mxu0
    %v3363 = vadd.f32 0.0, %v3362
    %v3364 = vpop.f32.mrb[0].mxu0
    %3365 = vmatprep.mubr.f32.mxu0 0.0
    %3366 = vmatmul.mubr.f32.gmra.mrb[0].mxu0 %v3203
    %v3367 = vpop.f32.mrb[0].mxu0
    %v3368 = vadd.f32 0.0, %v3367
    %v3369 = vpop.f32.mrb[0].mxu0
    %3370 = vmatprep.mubr.f32.mxu0 0.0
    %3371 = vmatmul.mubr.f32.gmra.mrb[0].mxu0 %v3206
    %v3372 = vpop.f32.mrb[0].mxu0
    %v3373 = vpop.f32.mrb[0].mxu0
    %3374 = vmatprep.mubr.f32.mxu0 0.0
    %3375 = vmatmul.mubr.f32.gmra.mrb[0].mxu0 %v3209
    %v3376 = vpop.f32.mrb[0].mxu0
    %v3377 = vadd.f32 0.0, %v3376
    %v3378 = vpop.f32.mrb[0].mxu0
    %3379 = vmatprep.mubr.f32.mxu0 0.0
    %3380 = vmatmul.mubr.f32.gmra.mrb[0].mxu0 %v3212
    %v3381 = vpop.f32.mrb[0].mxu0
    %v3382 = vadd.f32 0.0, %v3381
    %v3383 = vpop.f32.mrb[0].mxu0
    %3384 = vmatprep.mubr.f32.mxu0 0.0
    %3385 = vmatmul.mubr.f32.gmra.mrb[0].mxu0 %v3215
    %v3386 = vpop.f32.mrb[0].mxu0
    %v3387 = vadd.f32 0.0, %v3386
    %v3388 = vpop.f32.mrb[0].mxu0
    %3389 = vmatprep.mubr.f32.mxu0 0.0
    %3390 = vmatmul.mubr.f32.gmra.mrb[0].mxu0 %v3218
    %v3391 = vpop.f32.mrb[0].mxu0
    %v3392 = vadd.f32 0.0, %v3391
    %v3393 = vpop.f32.mrb[0].mxu0
    %3394 = vmatprep.mubr.f32.mxu0 0.0
    %3395 = vmatmul.mubr.f32.gmra.mrb[0].mxu0 %v3221
    %v3396 = vpop.f32.mrb[0].mxu0
    %v3397 = vpop.f32.mrb[0].mxu0
    %3398 = vmatprep.mubr.f32.mxu0 0.0
    %3399 = vmatmul.mubr.f32.gmra.mrb[0].mxu0 %v3224
    %v3400 = vpop.f32.mrb[0].mxu0
    %v3401 = vpop.f32.mrb[0].mxu0
    %3402 = vmatprep.mubr.f32.mxu0 0.0
    %3403 = vmatmul.mubr.f32.gmra.mrb[0].mxu0 %v3227
    %v3404 = vpop.f32.mrb[0].mxu0
    %v3405 = vpop.f32.mrb[0].mxu0
    %3406 = vmatprep.mubr.f32.mxu0 0.0
    %3407 = vmatmul.mubr.f32.gmra.mrb[0].mxu0 %v3230
    %v3408 = vpop.f32.mrb[0].mxu0
    %v3409 = vpop.f32.mrb[0].mxu0
    %3410 = vmatprep.mubr.f32.mxu0 0.0
    %3411 = vmatmul.mubr.f32.gmra.mrb[0].mxu0 %v3233
    %v3412 = vpop.f32.mrb[0].mxu0
    %v3413 = vpop.f32.mrb[0].mxu0
    %3414 = vmatprep.mubr.f32.mxu0 0.0
    %3415 = vmatmul.mubr.f32.gmra.mrb[0].mxu0 %v3236
    %v3416 = vpop.f32.mrb[0].mxu0
    %v3417 = vpop.f32.mrb[0].mxu0
    %3418 = vdwg.mxu0
    %v3419 = vadd.f32 %v3021, %v3305
    %v3420 = vadd.f32 %v3026, %v3310
    %v3421 = vadd.f32 %v3031, %v3315
    %v3422 = vadd.f32 %v3036, %v3320
    %v3423 = vadd.f32 %v3045, %v3329
    %v3424 = vadd.f32 %v3050, %v3334
    %v3425 = vadd.f32 %v3055, %v3339
    %v3426 = vadd.f32 %v3060, %v3344
    %v3427 = vadd.f32 %v3069, %v3353
    %v3428 = vadd.f32 %v3074, %v3358
    %v3429 = vadd.f32 %v3079, %v3363
    %v3430 = vadd.f32 %v3084, %v3368
    %v3431 = vadd.f32 %v3093, %v3377
    %v3432 = vadd.f32 %v3098, %v3382
    %v3433 = vadd.f32 %v3103, %v3387
    %v3434 = vadd.f32 %v3108, %v3392
    %v3435 = vld [vmem:[#allocation2 + $0x118] sm:$0xff]
    %v3436 = vld [vmem:[#allocation2 + $0x120] sm:$0xff]
    %v3437 = vld [vmem:[#allocation2 + $0x128] sm:$0xff]
    %v3438 = vld [vmem:[#allocation2 + $0x130] sm:$0xff]
    %v3439 = vld [vmem:[#allocation2 + $0x138] sm:$0xff]
    %s3440 = scalar_lea.vmem %s3, 48
    %v3441 = vld [vmem:[%s3440] sm:$0xff]
    %v3442 = vld [vmem:[%s3440 + $0x8] sm:$0xff]
    %v3444 = vsel %vm64, %v3435, 0
    %v3447 = vsel %vm64, %v3436, 0
    %v3450 = vsel %vm64, %v3437, 0
    %v3453 = vsel %vm64, %v3438, 0
    %v3456 = vsel %vm64, %v3439, 0
    %3458 = vmatprep.subr.mxu0 0.0
    %3459 = vmatpush1.msra.mxu0 %v3441
    %3460 = vmatprep.subr.mxu0 0.0
    %3461 = vmatpush1.msra.mxu0 %v3442
    %3462 = vmatprep.subr.mxu0 0.0
    %3463 = vmatpush1.msra.mxu0 0.0
    %3464 = vmatprep.subr.mxu0 0.0
    %3465 = vmatpush1.msra.mxu0 0.0
    %3466 = vmatprep.subr.mxu0 0.0
    %3467 = vmatpush1.msra.mxu0 0.0
    %3468 = vmatprep.subr.mxu0 0.0
    %3469 = vmatpush1.msra.mxu0 0.0
    %3470 = vmatprep.subr.mxu0 0.0
    %3471 = vmatpush1.msra.mxu0 0.0
    %3472 = vmatprep.subr.mxu0 0.0
    %3473 = vmatpush1.msra.mxu0 0.0
    %3474 = vmatprep.subr.mxu0 0.0
    %3475 = vmatpush1.msra.mxu0 0.0
    %3476 = vmatprep.subr.mxu0 0.0
    %3477 = vmatpush1.msra.mxu0 0.0
    %3478 = vmatprep.subr.mxu0 0.0
    %3479 = vmatpush1.msra.mxu0 0.0
    %3480 = vmatprep.subr.mxu0 0.0
    %3481 = vmatpush1.msra.mxu0 0.0
    %3482 = vmatprep.subr.mxu0 0.0
    %3483 = vmatpush1.msra.mxu0 0.0
    %3484 = vmatprep.subr.mxu0 0.0
    %3485 = vmatpush1.msra.mxu0 0.0
    %3486 = vmatprep.subr.mxu0 0.0
    %3487 = vmatpush1.msra.mxu0 0.0
    %3488 = vmatprep.subr.mxu0 0.0
    %3489 = vmatpush1.msra.mxu0 0.0
    %3490 = vmatprep.subr.mxu0 0.0
    %3491 = vmatpush1.msra.mxu0 0.0
    %3492 = vmatprep.subr.mxu0 0.0
    %3493 = vmatpush1.msra.mxu0 0.0
    %3494 = vmatprep.subr.mxu0 0.0
    %3495 = vmatpush1.msra.mxu0 0.0
    %3496 = vmatprep.subr.mxu0 0.0
    %3497 = vmatpush1.msra.mxu0 0.0
    %3498 = vmatprep.subr.mxu0 0.0
    %3499 = vmatpush1.msra.mxu0 0.0
    %3500 = vmatprep.subr.mxu0 0.0
    %3501 = vmatpush1.msra.mxu0 0.0
    %3502 = vmatprep.subr.mxu0 0.0
    %3503 = vmatpush1.msra.mxu0 0.0
    %3504 = vmatprep.subr.mxu0 0.0
    %3505 = vmatpush1.msra.mxu0 0.0
    %3506 = vmatprep.subr.mxu0 0.0
    %3507 = vmatpush1.msra.mxu0 0.0
    %3508 = vmatprep.subr.mxu0 0.0
    %3509 = vmatpush1.msra.mxu0 0.0
    %3510 = vmatprep.subr.mxu0 0.0
    %3511 = vmatpush1.msra.mxu0 0.0
    %3512 = vmatprep.subr.mxu0 0.0
    %3513 = vmatpush1.msra.mxu0 0.0
    %3514 = vmatprep.subr.mxu0 0.0
    %3515 = vmatpush1.msra.mxu0 0.0
    %3516 = vmatprep.subr.mxu0 0.0
    %3517 = vmatpush1.msra.mxu0 0.0
    %3518 = vmatprep.subr.mxu0 0.0
    %3519 = vmatpush1.msra.mxu0 0.0
    %3520 = vmatprep.subr.mxu0 0.0
    %3521 = vmatpush1.msra.mxu0 0.0
    %3522 = vmatprep.mubr.f32.mxu0 0.0
    %3523 = vmatmul.mubr.f32.gmra.mrb[0].mxu0 %v2943
    %v3524 = vpop.f32.mrb[0].mxu0
    %v3525 = vadd.f32 0.0, %v3524
    %v3526 = vpop.f32.mrb[0].mxu0
    %3527 = vmatprep.mubr.f32.mxu0 0.0
    %3528 = vmatmul.mubr.f32.gmra.mrb[0].mxu0 %v2699
    %v3529 = vpop.f32.mrb[0].mxu0
    %v3530 = vadd.f32 0.0, %v3529
    %v3531 = vpop.f32.mrb[0].mxu0
    %3532 = vmatprep.mubr.f32.mxu0 0.0
    %3533 = vmatmul.mubr.f32.gmra.mrb[0].mxu0 %v2702
    %v3534 = vpop.f32.mrb[0].mxu0
    %v3535 = vadd.f32 0.0, %v3534
    %v3536 = vpop.f32.mrb[0].mxu0
    %3537 = vmatprep.mubr.f32.mxu0 0.0
    %3538 = vmatmul.mubr.f32.gmra.mrb[0].mxu0 %v2705
    %v3539 = vpop.f32.mrb[0].mxu0
    %v3540 = vadd.f32 0.0, %v3539
    %v3541 = vpop.f32.mrb[0].mxu0
    %3542 = vmatprep.mubr.f32.mxu0 0.0
    %3543 = vmatmul.mubr.f32.gmra.mrb[0].mxu0 %v2708
    %v3544 = vpop.f32.mrb[0].mxu0
    %v3545 = vpop.f32.mrb[0].mxu0
    %3546 = vmatprep.mubr.f32.mxu0 0.0
    %3547 = vmatmul.mubr.f32.gmra.mrb[0].mxu0 %v2946
    %v3548 = vpop.f32.mrb[0].mxu0
    %v3549 = vadd.f32 0.0, %v3548
    %v3550 = vpop.f32.mrb[0].mxu0
    %3551 = vmatprep.mubr.f32.mxu0 0.0
    %3552 = vmatmul.mubr.f32.gmra.mrb[0].mxu0 %v2714
    %v3553 = vpop.f32.mrb[0].mxu0
    %v3554 = vadd.f32 0.0, %v3553
    %v3555 = vpop.f32.mrb[0].mxu0
    %3556 = vmatprep.mubr.f32.mxu0 0.0
    %3557 = vmatmul.mubr.f32.gmra.mrb[0].mxu0 %v2717
    %v3558 = vpop.f32.mrb[0].mxu0
    %v3559 = vadd.f32 0.0, %v3558
    %v3560 = vpop.f32.mrb[0].mxu0
    %3561 = vmatprep.mubr.f32.mxu0 0.0
    %3562 = vmatmul.mubr.f32.gmra.mrb[0].mxu0 %v2720
    %v3563 = vpop.f32.mrb[0].mxu0
    %v3564 = vadd.f32 0.0, %v3563
    %v3565 = vpop.f32.mrb[0].mxu0
    %3566 = vmatprep.mubr.f32.mxu0 0.0
    %3567 = vmatmul.mubr.f32.gmra.mrb[0].mxu0 %v2723
    %v3568 = vpop.f32.mrb[0].mxu0
    %v3569 = vpop.f32.mrb[0].mxu0
    %3570 = vmatprep.mubr.f32.mxu0 0.0
    %3571 = vmatmul.mubr.f32.gmra.mrb[0].mxu0 %v2949
    %v3572 = vpop.f32.mrb[0].mxu0
    %v3573 = vadd.f32 0.0, %v3572
    %v3574 = vpop.f32.mrb[0].mxu0
    %3575 = vmatprep.mubr.f32.mxu0 0.0
    %3576 = vmatmul.mubr.f32.gmra.mrb[0].mxu0 %v2729
    %v3577 = vpop.f32.mrb[0].mxu0
    %v3578 = vadd.f32 0.0, %v3577
    %v3579 = vpop.f32.mrb[0].mxu0
    %3580 = vmatprep.mubr.f32.mxu0 0.0
    %3581 = vmatmul.mubr.f32.gmra.mrb[0].mxu0 %v2732
    %v3582 = vpop.f32.mrb[0].mxu0
    %v3583 = vadd.f32 0.0, %v3582
    %v3584 = vpop.f32.mrb[0].mxu0
    %3585 = vmatprep.mubr.f32.mxu0 0.0
    %3586 = vmatmul.mubr.f32.gmra.mrb[0].mxu0 %v2735
    %v3587 = vpop.f32.mrb[0].mxu0
    %v3588 = vadd.f32 0.0, %v3587
    %v3589 = vpop.f32.mrb[0].mxu0
    %3590 = vmatprep.mubr.f32.mxu0 0.0
    %3591 = vmatmul.mubr.f32.gmra.mrb[0].mxu0 %v2738
    %v3592 = vpop.f32.mrb[0].mxu0
    %v3593 = vpop.f32.mrb[0].mxu0
    %3594 = vmatprep.mubr.f32.mxu0 0.0
    %3595 = vmatmul.mubr.f32.gmra.mrb[0].mxu0 %v2952
    %v3596 = vpop.f32.mrb[0].mxu0
    %v3597 = vadd.f32 0.0, %v3596
    %v3598 = vpop.f32.mrb[0].mxu0
    %3599 = vmatprep.mubr.f32.mxu0 0.0
    %3600 = vmatmul.mubr.f32.gmra.mrb[0].mxu0 %v2744
    %v3601 = vpop.f32.mrb[0].mxu0
    %v3602 = vadd.f32 0.0, %v3601
    %v3603 = vpop.f32.mrb[0].mxu0
    %3604 = vmatprep.mubr.f32.mxu0 0.0
    %3605 = vmatmul.mubr.f32.gmra.mrb[0].mxu0 %v2747
    %v3606 = vpop.f32.mrb[0].mxu0
    %v3607 = vadd.f32 0.0, %v3606
    %v3608 = vpop.f32.mrb[0].mxu0
    %3609 = vmatprep.mubr.f32.mxu0 0.0
    %3610 = vmatmul.mubr.f32.gmra.mrb[0].mxu0 %v2750
    %v3611 = vpop.f32.mrb[0].mxu0
    %v3612 = vadd.f32 0.0, %v3611
    %v3613 = vpop.f32.mrb[0].mxu0
    %3614 = vmatprep.mubr.f32.mxu0 0.0
    %3615 = vmatmul.mubr.f32.gmra.mrb[0].mxu0 %v2753
    %v3616 = vpop.f32.mrb[0].mxu0
    %v3617 = vpop.f32.mrb[0].mxu0
    %3618 = vmatprep.mubr.f32.mxu0 0.0
    %3619 = vmatmul.mubr.f32.gmra.mrb[0].mxu0 %v3444
    %v3620 = vpop.f32.mrb[0].mxu0
    %v3621 = vpop.f32.mrb[0].mxu0
    %3622 = vmatprep.mubr.f32.mxu0 0.0
    %3623 = vmatmul.mubr.f32.gmra.mrb[0].mxu0 %v3447
    %v3624 = vpop.f32.mrb[0].mxu0
    %v3625 = vpop.f32.mrb[0].mxu0
    %3626 = vmatprep.mubr.f32.mxu0 0.0
    %3627 = vmatmul.mubr.f32.gmra.mrb[0].mxu0 %v3450
    %v3628 = vpop.f32.mrb[0].mxu0
    %v3629 = vpop.f32.mrb[0].mxu0
    %3630 = vmatprep.mubr.f32.mxu0 0.0
    %3631 = vmatmul.mubr.f32.gmra.mrb[0].mxu0 %v3453
    %v3632 = vpop.f32.mrb[0].mxu0
    %v3633 = vpop.f32.mrb[0].mxu0
    %3634 = vmatprep.mubr.f32.mxu0 0.0
    %3635 = vmatmul.mubr.f32.gmra.mrb[0].mxu0 %v3456
    %v3636 = vpop.f32.mrb[0].mxu0
    %v3637 = vpop.f32.mrb[0].mxu0
    %3638 = vdwg.mxu0
    %v3639 = vadd.f32 %v3419, %v3525
    %v3640 = vadd.f32 %v3420, %v3530
    %v3641 = vadd.f32 %v3421, %v3535
    %v3642 = vadd.f32 %v3422, %v3540
    %v3643 = vadd.f32 %v3423, %v3549
    %v3644 = vadd.f32 %v3424, %v3554
    %v3645 = vadd.f32 %v3425, %v3559
    %v3646 = vadd.f32 %v3426, %v3564
    %v3647 = vadd.f32 %v3427, %v3573
    %v3648 = vadd.f32 %v3428, %v3578
    %v3649 = vadd.f32 %v3429, %v3583
    %v3650 = vadd.f32 %v3430, %v3588
    %v3651 = vadd.f32 %v3431, %v3597
    %v3652 = vadd.f32 %v3432, %v3602
    %v3653 = vadd.f32 %v3433, %v3607
    %v3654 = vadd.f32 %v3434, %v3612
    %v3655 = vld [vmem:[#allocation2 + $0x120] sm:$0xff]
    %v3656 = vld [vmem:[#allocation2 + $0x128] sm:$0xff]
    %v3657 = vld [vmem:[#allocation2 + $0x130] sm:$0xff]
    %v3658 = vld [vmem:[#allocation2 + $0x138] sm:$0xff]
    %v3659 = vld [vmem:[#allocation2 + $0x140] sm:$0xff]
    %s3660 = scalar_lea.vmem %s3, 64
    %v3661 = vld [vmem:[%s3660] sm:$0xff]
    %v3662 = vld [vmem:[%s3660 + $0x8] sm:$0xff]
    %v3664 = vsel %vm64, %v3655, 0
    %v3667 = vsel %vm64, %v3656, 0
    %v3670 = vsel %vm64, %v3657, 0
    %v3673 = vsel %vm64, %v3658, 0
    %v3676 = vsel %vm64, %v3659, 0
    %3678 = vmatprep.subr.mxu0 0.0
    %3679 = vmatpush1.msra.mxu0 %v3661
    %3680 = vmatprep.subr.mxu0 0.0
    %3681 = vmatpush1.msra.mxu0 %v3662
    %3682 = vmatprep.subr.mxu0 0.0
    %3683 = vmatpush1.msra.mxu0 0.0
    %3684 = vmatprep.subr.mxu0 0.0
    %3685 = vmatpush1.msra.mxu0 0.0
    %3686 = vmatprep.subr.mxu0 0.0
    %3687 = vmatpush1.msra.mxu0 0.0
    %3688 = vmatprep.subr.mxu0 0.0
    %3689 = vmatpush1.msra.mxu0 0.0
    %3690 = vmatprep.subr.mxu0 0.0
    %3691 = vmatpush1.msra.mxu0 0.0
    %3692 = vmatprep.subr.mxu0 0.0
    %3693 = vmatpush1.msra.mxu0 0.0
    %3694 = vmatprep.subr.mxu0 0.0
    %3695 = vmatpush1.msra.mxu0 0.0
    %3696 = vmatprep.subr.mxu0 0.0
    %3697 = vmatpush1.msra.mxu0 0.0
    %3698 = vmatprep.subr.mxu0 0.0
    %3699 = vmatpush1.msra.mxu0 0.0
    %3700 = vmatprep.subr.mxu0 0.0
    %3701 = vmatpush1.msra.mxu0 0.0
    %3702 = vmatprep.subr.mxu0 0.0
    %3703 = vmatpush1.msra.mxu0 0.0
    %3704 = vmatprep.subr.mxu0 0.0
    %3705 = vmatpush1.msra.mxu0 0.0
    %3706 = vmatprep.subr.mxu0 0.0
    %3707 = vmatpush1.msra.mxu0 0.0
    %3708 = vmatprep.subr.mxu0 0.0
    %3709 = vmatpush1.msra.mxu0 0.0
    %3710 = vmatprep.subr.mxu0 0.0
    %3711 = vmatpush1.msra.mxu0 0.0
    %3712 = vmatprep.subr.mxu0 0.0
    %3713 = vmatpush1.msra.mxu0 0.0
    %3714 = vmatprep.subr.mxu0 0.0
    %3715 = vmatpush1.msra.mxu0 0.0
    %3716 = vmatprep.subr.mxu0 0.0
    %3717 = vmatpush1.msra.mxu0 0.0
    %3718 = vmatprep.subr.mxu0 0.0
    %3719 = vmatpush1.msra.mxu0 0.0
    %3720 = vmatprep.subr.mxu0 0.0
    %3721 = vmatpush1.msra.mxu0 0.0
    %3722 = vmatprep.subr.mxu0 0.0
    %3723 = vmatpush1.msra.mxu0 0.0
    %3724 = vmatprep.subr.mxu0 0.0
    %3725 = vmatpush1.msra.mxu0 0.0
    %3726 = vmatprep.subr.mxu0 0.0
    %3727 = vmatpush1.msra.mxu0 0.0
    %3728 = vmatprep.subr.mxu0 0.0
    %3729 = vmatpush1.msra.mxu0 0.0
    %3730 = vmatprep.subr.mxu0 0.0
    %3731 = vmatpush1.msra.mxu0 0.0
    %3732 = vmatprep.subr.mxu0 0.0
    %3733 = vmatpush1.msra.mxu0 0.0
    %3734 = vmatprep.subr.mxu0 0.0
    %3735 = vmatpush1.msra.mxu0 0.0
    %3736 = vmatprep.subr.mxu0 0.0
    %3737 = vmatpush1.msra.mxu0 0.0
    %3738 = vmatprep.subr.mxu0 0.0
    %3739 = vmatpush1.msra.mxu0 0.0
    %3740 = vmatprep.subr.mxu0 0.0
    %3741 = vmatpush1.msra.mxu0 0.0
    %3742 = vmatprep.mubr.f32.mxu0 0.0
    %3743 = vmatmul.mubr.f32.gmra.mrb[0].mxu0 %v2699
    %v3744 = vpop.f32.mrb[0].mxu0
    %v3745 = vadd.f32 0.0, %v3744
    %v3746 = vpop.f32.mrb[0].mxu0
    %3747 = vmatprep.mubr.f32.mxu0 0.0
    %3748 = vmatmul.mubr.f32.gmra.mrb[0].mxu0 %v2702
    %v3749 = vpop.f32.mrb[0].mxu0
    %v3750 = vadd.f32 0.0, %v3749
    %v3751 = vpop.f32.mrb[0].mxu0
    %3752 = vmatprep.mubr.f32.mxu0 0.0
    %3753 = vmatmul.mubr.f32.gmra.mrb[0].mxu0 %v2705
    %v3754 = vpop.f32.mrb[0].mxu0
    %v3755 = vadd.f32 0.0, %v3754
    %v3756 = vpop.f32.mrb[0].mxu0
    %3757 = vmatprep.mubr.f32.mxu0 0.0
    %3758 = vmatmul.mubr.f32.gmra.mrb[0].mxu0 %v2708
    %v3759 = vpop.f32.mrb[0].mxu0
    %v3760 = vadd.f32 0.0, %v3759
    %v3761 = vpop.f32.mrb[0].mxu0
    %3762 = vmatprep.mubr.f32.mxu0 0.0
    %3763 = vmatmul.mubr.f32.gmra.mrb[0].mxu0 %v2711
    %v3764 = vpop.f32.mrb[0].mxu0
    %v3765 = vpop.f32.mrb[0].mxu0
    %3766 = vmatprep.mubr.f32.mxu0 0.0
    %3767 = vmatmul.mubr.f32.gmra.mrb[0].mxu0 %v2714
    %v3768 = vpop.f32.mrb[0].mxu0
    %v3769 = vadd.f32 0.0, %v3768
    %v3770 = vpop.f32.mrb[0].mxu0
    %3771 = vmatprep.mubr.f32.mxu0 0.0
    %3772 = vmatmul.mubr.f32.gmra.mrb[0].mxu0 %v2717
    %v3773 = vpop.f32.mrb[0].mxu0
    %v3774 = vadd.f32 0.0, %v3773
    %v3775 = vpop.f32.mrb[0].mxu0
    %3776 = vmatprep.mubr.f32.mxu0 0.0
    %3777 = vmatmul.mubr.f32.gmra.mrb[0].mxu0 %v2720
    %v3778 = vpop.f32.mrb[0].mxu0
    %v3779 = vadd.f32 0.0, %v3778
    %v3780 = vpop.f32.mrb[0].mxu0
    %3781 = vmatprep.mubr.f32.mxu0 0.0
    %3782 = vmatmul.mubr.f32.gmra.mrb[0].mxu0 %v2723
    %v3783 = vpop.f32.mrb[0].mxu0
    %v3784 = vadd.f32 0.0, %v3783
    %v3785 = vpop.f32.mrb[0].mxu0
    %3786 = vmatprep.mubr.f32.mxu0 0.0
    %3787 = vmatmul.mubr.f32.gmra.mrb[0].mxu0 %v2726
    %v3788 = vpop.f32.mrb[0].mxu0
    %v3789 = vpop.f32.mrb[0].mxu0
    %3790 = vmatprep.mubr.f32.mxu0 0.0
    %3791 = vmatmul.mubr.f32.gmra.mrb[0].mxu0 %v2729
    %v3792 = vpop.f32.mrb[0].mxu0
    %v3793 = vadd.f32 0.0, %v3792
    %v3794 = vpop.f32.mrb[0].mxu0
    %3795 = vmatprep.mubr.f32.mxu0 0.0
    %3796 = vmatmul.mubr.f32.gmra.mrb[0].mxu0 %v2732
    %v3797 = vpop.f32.mrb[0].mxu0
    %v3798 = vadd.f32 0.0, %v3797
    %v3799 = vpop.f32.mrb[0].mxu0
    %3800 = vmatprep.mubr.f32.mxu0 0.0
    %3801 = vmatmul.mubr.f32.gmra.mrb[0].mxu0 %v2735
    %v3802 = vpop.f32.mrb[0].mxu0
    %v3803 = vadd.f32 0.0, %v3802
    %v3804 = vpop.f32.mrb[0].mxu0
    %3805 = vmatprep.mubr.f32.mxu0 0.0
    %3806 = vmatmul.mubr.f32.gmra.mrb[0].mxu0 %v2738
    %v3807 = vpop.f32.mrb[0].mxu0
    %v3808 = vadd.f32 0.0, %v3807
    %v3809 = vpop.f32.mrb[0].mxu0
    %3810 = vmatprep.mubr.f32.mxu0 0.0
    %3811 = vmatmul.mubr.f32.gmra.mrb[0].mxu0 %v2741
    %v3812 = vpop.f32.mrb[0].mxu0
    %v3813 = vpop.f32.mrb[0].mxu0
    %3814 = vmatprep.mubr.f32.mxu0 0.0
    %3815 = vmatmul.mubr.f32.gmra.mrb[0].mxu0 %v2744
    %v3816 = vpop.f32.mrb[0].mxu0
    %v3817 = vadd.f32 0.0, %v3816
    %v3818 = vpop.f32.mrb[0].mxu0
    %3819 = vmatprep.mubr.f32.mxu0 0.0
    %3820 = vmatmul.mubr.f32.gmra.mrb[0].mxu0 %v2747
    %v3821 = vpop.f32.mrb[0].mxu0
    %v3822 = vadd.f32 0.0, %v3821
    %v3823 = vpop.f32.mrb[0].mxu0
    %3824 = vmatprep.mubr.f32.mxu0 0.0
    %3825 = vmatmul.mubr.f32.gmra.mrb[0].mxu0 %v2750
    %v3826 = vpop.f32.mrb[0].mxu0
    %v3827 = vadd.f32 0.0, %v3826
    %v3828 = vpop.f32.mrb[0].mxu0
    %3829 = vmatprep.mubr.f32.mxu0 0.0
    %3830 = vmatmul.mubr.f32.gmra.mrb[0].mxu0 %v2753
    %v3831 = vpop.f32.mrb[0].mxu0
    %v3832 = vadd.f32 0.0, %v3831
    %v3833 = vpop.f32.mrb[0].mxu0
    %3834 = vmatprep.mubr.f32.mxu0 0.0
    %3835 = vmatmul.mubr.f32.gmra.mrb[0].mxu0 %v2756
    %v3836 = vpop.f32.mrb[0].mxu0
    %v3837 = vpop.f32.mrb[0].mxu0
    %3838 = vmatprep.mubr.f32.mxu0 0.0
    %3839 = vmatmul.mubr.f32.gmra.mrb[0].mxu0 %v3664
    %v3840 = vpop.f32.mrb[0].mxu0
    %v3841 = vpop.f32.mrb[0].mxu0
    %3842 = vmatprep.mubr.f32.mxu0 0.0
    %3843 = vmatmul.mubr.f32.gmra.mrb[0].mxu0 %v3667
    %v3844 = vpop.f32.mrb[0].mxu0
    %v3845 = vpop.f32.mrb[0].mxu0
    %3846 = vmatprep.mubr.f32.mxu0 0.0
    %3847 = vmatmul.mubr.f32.gmra.mrb[0].mxu0 %v3670
    %v3848 = vpop.f32.mrb[0].mxu0
    %v3849 = vpop.f32.mrb[0].mxu0
    %3850 = vmatprep.mubr.f32.mxu0 0.0
    %3851 = vmatmul.mubr.f32.gmra.mrb[0].mxu0 %v3673
    %v3852 = vpop.f32.mrb[0].mxu0
    %v3853 = vpop.f32.mrb[0].mxu0
    %3854 = vmatprep.mubr.f32.mxu0 0.0
    %3855 = vmatmul.mubr.f32.gmra.mrb[0].mxu0 %v3676
    %v3856 = vpop.f32.mrb[0].mxu0
    %v3857 = vpop.f32.mrb[0].mxu0
    %3858 = vdwg.mxu0
    %v3859 = vadd.f32 %v3639, %v3745
    %v3860 = vadd.f32 %v3640, %v3750
    %v3861 = vadd.f32 %v3641, %v3755
    %v3862 = vadd.f32 %v3642, %v3760
    %v3863 = vadd.f32 %v3643, %v3769
    %v3864 = vadd.f32 %v3644, %v3774
    %v3865 = vadd.f32 %v3645, %v3779
    %v3866 = vadd.f32 %v3646, %v3784
    %v3867 = vadd.f32 %v3647, %v3793
    %v3868 = vadd.f32 %v3648, %v3798
    %v3869 = vadd.f32 %v3649, %v3803
    %v3870 = vadd.f32 %v3650, %v3808
    %v3871 = vadd.f32 %v3651, %v3817
    %v3872 = vadd.f32 %v3652, %v3822
    %v3873 = vadd.f32 %v3653, %v3827
    %v3874 = vadd.f32 %v3654, %v3832
    %v3875 = vld [vmem:[#allocation2 + $0x128] sm:$0xff]
    %v3876 = vld [vmem:[#allocation2 + $0x130] sm:$0xff]
    %v3877 = vld [vmem:[#allocation2 + $0x138] sm:$0xff]
    %v3878 = vld [vmem:[#allocation2 + $0x140] sm:$0xff]
    %v3879 = vld [vmem:[#allocation2 + $0x148] sm:$0xff]
    %s3880 = scalar_lea.vmem %s3, 80
    %v3881 = vld [vmem:[%s3880] sm:$0xff]
    %v3882 = vld [vmem:[%s3880 + $0x8] sm:$0xff]
    %v3884 = vsel %vm64, %v3875, 0
    %v3887 = vsel %vm64, %v3876, 0
    %v3890 = vsel %vm64, %v3877, 0
    %v3893 = vsel %vm64, %v3878, 0
    %v3896 = vsel %vm64, %v3879, 0
    %3898 = vmatprep.subr.mxu0 0.0
    %3899 = vmatpush1.msra.mxu0 %v3881
    %3900 = vmatprep.subr.mxu0 0.0
    %3901 = vmatpush1.msra.mxu0 %v3882
    %3902 = vmatprep.subr.mxu0 0.0
    %3903 = vmatpush1.msra.mxu0 0.0
    %3904 = vmatprep.subr.mxu0 0.0
    %3905 = vmatpush1.msra.mxu0 0.0
    %3906 = vmatprep.subr.mxu0 0.0
    %3907 = vmatpush1.msra.mxu0 0.0
    %3908 = vmatprep.subr.mxu0 0.0
    %3909 = vmatpush1.msra.mxu0 0.0
    %3910 = vmatprep.subr.mxu0 0.0
    %3911 = vmatpush1.msra.mxu0 0.0
    %3912 = vmatprep.subr.mxu0 0.0
    %3913 = vmatpush1.msra.mxu0 0.0
    %3914 = vmatprep.subr.mxu0 0.0
    %3915 = vmatpush1.msra.mxu0 0.0
    %3916 = vmatprep.subr.mxu0 0.0
    %3917 = vmatpush1.msra.mxu0 0.0
    %3918 = vmatprep.subr.mxu0 0.0
    %3919 = vmatpush1.msra.mxu0 0.0
    %3920 = vmatprep.subr.mxu0 0.0
    %3921 = vmatpush1.msra.mxu0 0.0
    %3922 = vmatprep.subr.mxu0 0.0
    %3923 = vmatpush1.msra.mxu0 0.0
    %3924 = vmatprep.subr.mxu0 0.0
    %3925 = vmatpush1.msra.mxu0 0.0
    %3926 = vmatprep.subr.mxu0 0.0
    %3927 = vmatpush1.msra.mxu0 0.0
    %3928 = vmatprep.subr.mxu0 0.0
    %3929 = vmatpush1.msra.mxu0 0.0
    %3930 = vmatprep.subr.mxu0 0.0
    %3931 = vmatpush1.msra.mxu0 0.0
    %3932 = vmatprep.subr.mxu0 0.0
    %3933 = vmatpush1.msra.mxu0 0.0
    %3934 = vmatprep.subr.mxu0 0.0
    %3935 = vmatpush1.msra.mxu0 0.0
    %3936 = vmatprep.subr.mxu0 0.0
    %3937 = vmatpush1.msra.mxu0 0.0
    %3938 = vmatprep.subr.mxu0 0.0
    %3939 = vmatpush1.msra.mxu0 0.0
    %3940 = vmatprep.subr.mxu0 0.0
    %3941 = vmatpush1.msra.mxu0 0.0
    %3942 = vmatprep.subr.mxu0 0.0
    %3943 = vmatpush1.msra.mxu0 0.0
    %3944 = vmatprep.subr.mxu0 0.0
    %3945 = vmatpush1.msra.mxu0 0.0
    %3946 = vmatprep.subr.mxu0 0.0
    %3947 = vmatpush1.msra.mxu0 0.0
    %3948 = vmatprep.subr.mxu0 0.0
    %3949 = vmatpush1.msra.mxu0 0.0
    %3950 = vmatprep.subr.mxu0 0.0
    %3951 = vmatpush1.msra.mxu0 0.0
    %3952 = vmatprep.subr.mxu0 0.0
    %3953 = vmatpush1.msra.mxu0 0.0
    %3954 = vmatprep.subr.mxu0 0.0
    %3955 = vmatpush1.msra.mxu0 0.0
    %3956 = vmatprep.subr.mxu0 0.0
    %3957 = vmatpush1.msra.mxu0 0.0
    %3958 = vmatprep.subr.mxu0 0.0
    %3959 = vmatpush1.msra.mxu0 0.0
    %3960 = vmatprep.subr.mxu0 0.0
    %3961 = vmatpush1.msra.mxu0 0.0
    %3962 = vmatprep.mubr.f32.mxu0 0.0
    %3963 = vmatmul.mubr.f32.gmra.mrb[0].mxu0 %v3179
    %v3964 = vpop.f32.mrb[0].mxu0
    %v3965 = vadd.f32 0.0, %v3964
    %v3966 = vpop.f32.mrb[0].mxu0
    %3967 = vmatprep.mubr.f32.mxu0 0.0
    %3968 = vmatmul.mubr.f32.gmra.mrb[0].mxu0 %v3182
    %v3969 = vpop.f32.mrb[0].mxu0
    %v3970 = vadd.f32 0.0, %v3969
    %v3971 = vpop.f32.mrb[0].mxu0
    %3972 = vmatprep.mubr.f32.mxu0 0.0
    %3973 = vmatmul.mubr.f32.gmra.mrb[0].mxu0 %v3185
    %v3974 = vpop.f32.mrb[0].mxu0
    %v3975 = vadd.f32 0.0, %v3974
    %v3976 = vpop.f32.mrb[0].mxu0
    %3977 = vmatprep.mubr.f32.mxu0 0.0
    %3978 = vmatmul.mubr.f32.gmra.mrb[0].mxu0 %v3188
    %v3979 = vpop.f32.mrb[0].mxu0
    %v3980 = vadd.f32 0.0, %v3979
    %v3981 = vpop.f32.mrb[0].mxu0
    %3982 = vmatprep.mubr.f32.mxu0 0.0
    %3983 = vmatmul.mubr.f32.gmra.mrb[0].mxu0 %v3191
    %v3984 = vpop.f32.mrb[0].mxu0
    %v3985 = vpop.f32.mrb[0].mxu0
    %3986 = vmatprep.mubr.f32.mxu0 0.0
    %3987 = vmatmul.mubr.f32.gmra.mrb[0].mxu0 %v3194
    %v3988 = vpop.f32.mrb[0].mxu0
    %v3989 = vadd.f32 0.0, %v3988
    %v3990 = vpop.f32.mrb[0].mxu0
    %3991 = vmatprep.mubr.f32.mxu0 0.0
    %3992 = vmatmul.mubr.f32.gmra.mrb[0].mxu0 %v3197
    %v3993 = vpop.f32.mrb[0].mxu0
    %v3994 = vadd.f32 0.0, %v3993
    %v3995 = vpop.f32.mrb[0].mxu0
    %3996 = vmatprep.mubr.f32.mxu0 0.0
    %3997 = vmatmul.mubr.f32.gmra.mrb[0].mxu0 %v3200
    %v3998 = vpop.f32.mrb[0].mxu0
    %v3999 = vadd.f32 0.0, %v3998
    %v4000 = vpop.f32.mrb[0].mxu0
    %4001 = vmatprep.mubr.f32.mxu0 0.0
    %4002 = vmatmul.mubr.f32.gmra.mrb[0].mxu0 %v3203
    %v4003 = vpop.f32.mrb[0].mxu0
    %v4004 = vadd.f32 0.0, %v4003
    %v4005 = vpop.f32.mrb[0].mxu0
    %4006 = vmatprep.mubr.f32.mxu0 0.0
    %4007 = vmatmul.mubr.f32.gmra.mrb[0].mxu0 %v3206
    %v4008 = vpop.f32.mrb[0].mxu0
    %v4009 = vpop.f32.mrb[0].mxu0
    %4010 = vmatprep.mubr.f32.mxu0 0.0
    %4011 = vmatmul.mubr.f32.gmra.mrb[0].mxu0 %v3209
    %v4012 = vpop.f32.mrb[0].mxu0
    %v4013 = vadd.f32 0.0, %v4012
    %v4014 = vpop.f32.mrb[0].mxu0
    %4015 = vmatprep.mubr.f32.mxu0 0.0
    %4016 = vmatmul.mubr.f32.gmra.mrb[0].mxu0 %v3212
    %v4017 = vpop.f32.mrb[0].mxu0
    %v4018 = vadd.f32 0.0, %v4017
    %v4019 = vpop.f32.mrb[0].mxu0
    %4020 = vmatprep.mubr.f32.mxu0 0.0
    %4021 = vmatmul.mubr.f32.gmra.mrb[0].mxu0 %v3215
    %v4022 = vpop.f32.mrb[0].mxu0
    %v4023 = vadd.f32 0.0, %v4022
    %v4024 = vpop.f32.mrb[0].mxu0
    %4025 = vmatprep.mubr.f32.mxu0 0.0
    %4026 = vmatmul.mubr.f32.gmra.mrb[0].mxu0 %v3218
    %v4027 = vpop.f32.mrb[0].mxu0
    %v4028 = vadd.f32 0.0, %v4027
    %v4029 = vpop.f32.mrb[0].mxu0
    %4030 = vmatprep.mubr.f32.mxu0 0.0
    %4031 = vmatmul.mubr.f32.gmra.mrb[0].mxu0 %v3221
    %v4032 = vpop.f32.mrb[0].mxu0
    %v4033 = vpop.f32.mrb[0].mxu0
    %4034 = vmatprep.mubr.f32.mxu0 0.0
    %4035 = vmatmul.mubr.f32.gmra.mrb[0].mxu0 %v3224
    %v4036 = vpop.f32.mrb[0].mxu0
    %v4037 = vadd.f32 0.0, %v4036
    %v4038 = vpop.f32.mrb[0].mxu0
    %4039 = vmatprep.mubr.f32.mxu0 0.0
    %4040 = vmatmul.mubr.f32.gmra.mrb[0].mxu0 %v3227
    %v4041 = vpop.f32.mrb[0].mxu0
    %v4042 = vadd.f32 0.0, %v4041
    %v4043 = vpop.f32.mrb[0].mxu0
    %4044 = vmatprep.mubr.f32.mxu0 0.0
    %4045 = vmatmul.mubr.f32.gmra.mrb[0].mxu0 %v3230
    %v4046 = vpop.f32.mrb[0].mxu0
    %v4047 = vadd.f32 0.0, %v4046
    %v4048 = vpop.f32.mrb[0].mxu0
    %4049 = vmatprep.mubr.f32.mxu0 0.0
    %4050 = vmatmul.mubr.f32.gmra.mrb[0].mxu0 %v3233
    %v4051 = vpop.f32.mrb[0].mxu0
    %v4052 = vadd.f32 0.0, %v4051
    %v4053 = vpop.f32.mrb[0].mxu0
    %4054 = vmatprep.mubr.f32.mxu0 0.0
    %4055 = vmatmul.mubr.f32.gmra.mrb[0].mxu0 %v3236
    %v4056 = vpop.f32.mrb[0].mxu0
    %v4057 = vpop.f32.mrb[0].mxu0
    %4058 = vmatprep.mubr.f32.mxu0 0.0
    %4059 = vmatmul.mubr.f32.gmra.mrb[0].mxu0 %v3884
    %v4060 = vpop.f32.mrb[0].mxu0
    %v4061 = vpop.f32.mrb[0].mxu0
    %4062 = vmatprep.mubr.f32.mxu0 0.0
    %4063 = vmatmul.mubr.f32.gmra.mrb[0].mxu0 %v3887
    %v4064 = vpop.f32.mrb[0].mxu0
    %v4065 = vpop.f32.mrb[0].mxu0
    %4066 = vmatprep.mubr.f32.mxu0 0.0
    %4067 = vmatmul.mubr.f32.gmra.mrb[0].mxu0 %v3890
    %v4068 = vpop.f32.mrb[0].mxu0
    %v4069 = vpop.f32.mrb[0].mxu0
    %4070 = vmatprep.mubr.f32.mxu0 0.0
    %4071 = vmatmul.mubr.f32.gmra.mrb[0].mxu0 %v3893
    %v4072 = vpop.f32.mrb[0].mxu0
    %v4073 = vpop.f32.mrb[0].mxu0
    %4074 = vmatprep.mubr.f32.mxu0 0.0
    %4075 = vmatmul.mubr.f32.gmra.mrb[0].mxu0 %v3896
    %v4076 = vpop.f32.mrb[0].mxu0
    %v4077 = vpop.f32.mrb[0].mxu0
    %4078 = vdwg.mxu0
    %v4079 = vadd.f32 %v3859, %v3965
    %v4080 = vadd.f32 %v3860, %v3970
    %v4081 = vadd.f32 %v3861, %v3975
    %v4082 = vadd.f32 %v3862, %v3980
    %v4083 = vadd.f32 %v3863, %v3989
    %v4084 = vadd.f32 %v3864, %v3994
    %v4085 = vadd.f32 %v3865, %v3999
    %v4086 = vadd.f32 %v3866, %v4004
    %v4087 = vadd.f32 %v3867, %v4013
    %v4088 = vadd.f32 %v3868, %v4018
    %v4089 = vadd.f32 %v3869, %v4023
    %v4090 = vadd.f32 %v3870, %v4028
    %v4091 = vadd.f32 %v3871, %v4037
    %v4092 = vadd.f32 %v3872, %v4042
    %v4093 = vadd.f32 %v3873, %v4047
    %v4094 = vadd.f32 %v3874, %v4052
    %v4095 = vld [vmem:[#allocation2 + $0x150] sm:$0xff]
    %v4096 = vld [vmem:[#allocation2 + $0x158] sm:$0xff]
    %v4097 = vld [vmem:[#allocation2 + $0x160] sm:$0xff]
    %v4098 = vld [vmem:[#allocation2 + $0x168] sm:$0xff]
    %v4099 = vld [vmem:[#allocation2 + $0x170] sm:$0xff]
    %s4100 = scalar_lea.vmem %s3, 96
    %v4101 = vld [vmem:[%s4100] sm:$0xff]
    %v4102 = vld [vmem:[%s4100 + $0x8] sm:$0xff]
    %v4104 = vsel %vm64, %v4095, 0
    %v4107 = vsel %vm64, %v4096, 0
    %v4110 = vsel %vm64, %v4097, 0
    %v4113 = vsel %vm64, %v4098, 0
    %v4116 = vsel %vm64, %v4099, 0
    %4118 = vmatprep.subr.mxu0 0.0
    %4119 = vmatpush1.msra.mxu0 %v4101
    %4120 = vmatprep.subr.mxu0 0.0
    %4121 = vmatpush1.msra.mxu0 %v4102
    %4122 = vmatprep.subr.mxu0 0.0
    %4123 = vmatpush1.msra.mxu0 0.0
    %4124 = vmatprep.subr.mxu0 0.0
    %4125 = vmatpush1.msra.mxu0 0.0
    %4126 = vmatprep.subr.mxu0 0.0
    %4127 = vmatpush1.msra.mxu0 0.0
    %4128 = vmatprep.subr.mxu0 0.0
    %4129 = vmatpush1.msra.mxu0 0.0
    %4130 = vmatprep.subr.mxu0 0.0
    %4131 = vmatpush1.msra.mxu0 0.0
    %4132 = vmatprep.subr.mxu0 0.0
    %4133 = vmatpush1.msra.mxu0 0.0
    %4134 = vmatprep.subr.mxu0 0.0
    %4135 = vmatpush1.msra.mxu0 0.0
    %4136 = vmatprep.subr.mxu0 0.0
    %4137 = vmatpush1.msra.mxu0 0.0
    %4138 = vmatprep.subr.mxu0 0.0
    %4139 = vmatpush1.msra.mxu0 0.0
    %4140 = vmatprep.subr.mxu0 0.0
    %4141 = vmatpush1.msra.mxu0 0.0
    %4142 = vmatprep.subr.mxu0 0.0
    %4143 = vmatpush1.msra.mxu0 0.0
    %4144 = vmatprep.subr.mxu0 0.0
    %4145 = vmatpush1.msra.mxu0 0.0
    %4146 = vmatprep.subr.mxu0 0.0
    %4147 = vmatpush1.msra.mxu0 0.0
    %4148 = vmatprep.subr.mxu0 0.0
    %4149 = vmatpush1.msra.mxu0 0.0
    %4150 = vmatprep.subr.mxu0 0.0
    %4151 = vmatpush1.msra.mxu0 0.0
    %4152 = vmatprep.subr.mxu0 0.0
    %4153 = vmatpush1.msra.mxu0 0.0
    %4154 = vmatprep.subr.mxu0 0.0
    %4155 = vmatpush1.msra.mxu0 0.0
    %4156 = vmatprep.subr.mxu0 0.0
    %4157 = vmatpush1.msra.mxu0 0.0
    %4158 = vmatprep.subr.mxu0 0.0
    %4159 = vmatpush1.msra.mxu0 0.0
    %4160 = vmatprep.subr.mxu0 0.0
    %4161 = vmatpush1.msra.mxu0 0.0
    %4162 = vmatprep.subr.mxu0 0.0
    %4163 = vmatpush1.msra.mxu0 0.0
    %4164 = vmatprep.subr.mxu0 0.0
    %4165 = vmatpush1.msra.mxu0 0.0
    %4166 = vmatprep.subr.mxu0 0.0
    %4167 = vmatpush1.msra.mxu0 0.0
    %4168 = vmatprep.subr.mxu0 0.0
    %4169 = vmatpush1.msra.mxu0 0.0
    %4170 = vmatprep.subr.mxu0 0.0
    %4171 = vmatpush1.msra.mxu0 0.0
    %4172 = vmatprep.subr.mxu0 0.0
    %4173 = vmatpush1.msra.mxu0 0.0
    %4174 = vmatprep.subr.mxu0 0.0
    %4175 = vmatpush1.msra.mxu0 0.0
    %4176 = vmatprep.subr.mxu0 0.0
    %4177 = vmatpush1.msra.mxu0 0.0
    %4178 = vmatprep.subr.mxu0 0.0
    %4179 = vmatpush1.msra.mxu0 0.0
    %4180 = vmatprep.subr.mxu0 0.0
    %4181 = vmatpush1.msra.mxu0 0.0
    %4182 = vmatprep.mubr.f32.mxu0 0.0
    %4183 = vmatmul.mubr.f32.gmra.mrb[0].mxu0 %v2946
    %v4184 = vpop.f32.mrb[0].mxu0
    %v4185 = vadd.f32 0.0, %v4184
    %v4186 = vpop.f32.mrb[0].mxu0
    %4187 = vmatprep.mubr.f32.mxu0 0.0
    %4188 = vmatmul.mubr.f32.gmra.mrb[0].mxu0 %v2714
    %v4189 = vpop.f32.mrb[0].mxu0
    %v4190 = vadd.f32 0.0, %v4189
    %v4191 = vpop.f32.mrb[0].mxu0
    %4192 = vmatprep.mubr.f32.mxu0 0.0
    %4193 = vmatmul.mubr.f32.gmra.mrb[0].mxu0 %v2717
    %v4194 = vpop.f32.mrb[0].mxu0
    %v4195 = vadd.f32 0.0, %v4194
    %v4196 = vpop.f32.mrb[0].mxu0
    %4197 = vmatprep.mubr.f32.mxu0 0.0
    %4198 = vmatmul.mubr.f32.gmra.mrb[0].mxu0 %v2720
    %v4199 = vpop.f32.mrb[0].mxu0
    %v4200 = vadd.f32 0.0, %v4199
    %v4201 = vpop.f32.mrb[0].mxu0
    %4202 = vmatprep.mubr.f32.mxu0 0.0
    %4203 = vmatmul.mubr.f32.gmra.mrb[0].mxu0 %v2723
    %v4204 = vpop.f32.mrb[0].mxu0
    %v4205 = vpop.f32.mrb[0].mxu0
    %4206 = vmatprep.mubr.f32.mxu0 0.0
    %4207 = vmatmul.mubr.f32.gmra.mrb[0].mxu0 %v2949
    %v4208 = vpop.f32.mrb[0].mxu0
    %v4209 = vadd.f32 0.0, %v4208
    %v4210 = vpop.f32.mrb[0].mxu0
    %4211 = vmatprep.mubr.f32.mxu0 0.0
    %4212 = vmatmul.mubr.f32.gmra.mrb[0].mxu0 %v2729
    %v4213 = vpop.f32.mrb[0].mxu0
    %v4214 = vadd.f32 0.0, %v4213
    %v4215 = vpop.f32.mrb[0].mxu0
    %4216 = vmatprep.mubr.f32.mxu0 0.0
    %4217 = vmatmul.mubr.f32.gmra.mrb[0].mxu0 %v2732
    %v4218 = vpop.f32.mrb[0].mxu0
    %v4219 = vadd.f32 0.0, %v4218
    %v4220 = vpop.f32.mrb[0].mxu0
    %4221 = vmatprep.mubr.f32.mxu0 0.0
    %4222 = vmatmul.mubr.f32.gmra.mrb[0].mxu0 %v2735
    %v4223 = vpop.f32.mrb[0].mxu0
    %v4224 = vadd.f32 0.0, %v4223
    %v4225 = vpop.f32.mrb[0].mxu0
    %4226 = vmatprep.mubr.f32.mxu0 0.0
    %4227 = vmatmul.mubr.f32.gmra.mrb[0].mxu0 %v2738
    %v4228 = vpop.f32.mrb[0].mxu0
    %v4229 = vpop.f32.mrb[0].mxu0
    %4230 = vmatprep.mubr.f32.mxu0 0.0
    %4231 = vmatmul.mubr.f32.gmra.mrb[0].mxu0 %v2952
    %v4232 = vpop.f32.mrb[0].mxu0
    %v4233 = vadd.f32 0.0, %v4232
    %v4234 = vpop.f32.mrb[0].mxu0
    %4235 = vmatprep.mubr.f32.mxu0 0.0
    %4236 = vmatmul.mubr.f32.gmra.mrb[0].mxu0 %v2744
    %v4237 = vpop.f32.mrb[0].mxu0
    %v4238 = vadd.f32 0.0, %v4237
    %v4239 = vpop.f32.mrb[0].mxu0
    %4240 = vmatprep.mubr.f32.mxu0 0.0
    %4241 = vmatmul.mubr.f32.gmra.mrb[0].mxu0 %v2747
    %v4242 = vpop.f32.mrb[0].mxu0
    %v4243 = vadd.f32 0.0, %v4242
    %v4244 = vpop.f32.mrb[0].mxu0
    %4245 = vmatprep.mubr.f32.mxu0 0.0
    %4246 = vmatmul.mubr.f32.gmra.mrb[0].mxu0 %v2750
    %v4247 = vpop.f32.mrb[0].mxu0
    %v4248 = vadd.f32 0.0, %v4247
    %v4249 = vpop.f32.mrb[0].mxu0
    %4250 = vmatprep.mubr.f32.mxu0 0.0
    %4251 = vmatmul.mubr.f32.gmra.mrb[0].mxu0 %v2753
    %v4252 = vpop.f32.mrb[0].mxu0
    %v4253 = vpop.f32.mrb[0].mxu0
    %4254 = vmatprep.mubr.f32.mxu0 0.0
    %4255 = vmatmul.mubr.f32.gmra.mrb[0].mxu0 %v3444
    %v4256 = vpop.f32.mrb[0].mxu0
    %v4257 = vadd.f32 0.0, %v4256
    %v4258 = vpop.f32.mrb[0].mxu0
    %4259 = vmatprep.mubr.f32.mxu0 0.0
    %4260 = vmatmul.mubr.f32.gmra.mrb[0].mxu0 %v3447
    %v4261 = vpop.f32.mrb[0].mxu0
    %v4262 = vadd.f32 0.0, %v4261
    %v4263 = vpop.f32.mrb[0].mxu0
    %4264 = vmatprep.mubr.f32.mxu0 0.0
    %4265 = vmatmul.mubr.f32.gmra.mrb[0].mxu0 %v3450
    %v4266 = vpop.f32.mrb[0].mxu0
    %v4267 = vadd.f32 0.0, %v4266
    %v4268 = vpop.f32.mrb[0].mxu0
    %4269 = vmatprep.mubr.f32.mxu0 0.0
    %4270 = vmatmul.mubr.f32.gmra.mrb[0].mxu0 %v3453
    %v4271 = vpop.f32.mrb[0].mxu0
    %v4272 = vadd.f32 0.0, %v4271
    %v4273 = vpop.f32.mrb[0].mxu0
    %4274 = vmatprep.mubr.f32.mxu0 0.0
    %4275 = vmatmul.mubr.f32.gmra.mrb[0].mxu0 %v3456
    %v4276 = vpop.f32.mrb[0].mxu0
    %v4277 = vpop.f32.mrb[0].mxu0
    %4278 = vmatprep.mubr.f32.mxu0 0.0
    %4279 = vmatmul.mubr.f32.gmra.mrb[0].mxu0 %v4104
    %v4280 = vpop.f32.mrb[0].mxu0
    %v4281 = vpop.f32.mrb[0].mxu0
    %4282 = vmatprep.mubr.f32.mxu0 0.0
    %4283 = vmatmul.mubr.f32.gmra.mrb[0].mxu0 %v4107
    %v4284 = vpop.f32.mrb[0].mxu0
    %v4285 = vpop.f32.mrb[0].mxu0
    %4286 = vmatprep.mubr.f32.mxu0 0.0
    %4287 = vmatmul.mubr.f32.gmra.mrb[0].mxu0 %v4110
    %v4288 = vpop.f32.mrb[0].mxu0
    %v4289 = vpop.f32.mrb[0].mxu0
    %4290 = vmatprep.mubr.f32.mxu0 0.0
    %4291 = vmatmul.mubr.f32.gmra.mrb[0].mxu0 %v4113
    %v4292 = vpop.f32.mrb[0].mxu0
    %v4293 = vpop.f32.mrb[0].mxu0
    %4294 = vmatprep.mubr.f32.mxu0 0.0
    %4295 = vmatmul.mubr.f32.gmra.mrb[0].mxu0 %v4116
    %v4296 = vpop.f32.mrb[0].mxu0
    %v4297 = vpop.f32.mrb[0].mxu0
    %4298 = vdwg.mxu0
    %v4299 = vadd.f32 %v4079, %v4185
    %v4300 = vadd.f32 %v4080, %v4190
    %v4301 = vadd.f32 %v4081, %v4195
    %v4302 = vadd.f32 %v4082, %v4200
    %v4303 = vadd.f32 %v4083, %v4209
    %v4304 = vadd.f32 %v4084, %v4214
    %v4305 = vadd.f32 %v4085, %v4219
    %v4306 = vadd.f32 %v4086, %v4224
    %v4307 = vadd.f32 %v4087, %v4233
    %v4308 = vadd.f32 %v4088, %v4238
    %v4309 = vadd.f32 %v4089, %v4243
    %v4310 = vadd.f32 %v4090, %v4248
    %v4311 = vadd.f32 %v4091, %v4257
    %v4312 = vadd.f32 %v4092, %v4262
    %v4313 = vadd.f32 %v4093, %v4267
    %v4314 = vadd.f32 %v4094, %v4272
    %v4315 = vld [vmem:[#allocation2 + $0x158] sm:$0xff]
    %v4316 = vld [vmem:[#allocation2 + $0x160] sm:$0xff]
    %v4317 = vld [vmem:[#allocation2 + $0x168] sm:$0xff]
    %v4318 = vld [vmem:[#allocation2 + $0x170] sm:$0xff]
    %v4319 = vld [vmem:[#allocation2 + $0x178] sm:$0xff]
    %s4320 = scalar_lea.vmem %s3, 112
    %v4321 = vld [vmem:[%s4320] sm:$0xff]
    %v4322 = vld [vmem:[%s4320 + $0x8] sm:$0xff]
    %v4324 = vsel %vm64, %v4315, 0
    %v4327 = vsel %vm64, %v4316, 0
    %v4330 = vsel %vm64, %v4317, 0
    %v4333 = vsel %vm64, %v4318, 0
    %v4336 = vsel %vm64, %v4319, 0
    %4338 = vmatprep.subr.mxu0 0.0
    %4339 = vmatpush1.msra.mxu0 %v4321
    %4340 = vmatprep.subr.mxu0 0.0
    %4341 = vmatpush1.msra.mxu0 %v4322
    %4342 = vmatprep.subr.mxu0 0.0
    %4343 = vmatpush1.msra.mxu0 0.0
    %4344 = vmatprep.subr.mxu0 0.0
    %4345 = vmatpush1.msra.mxu0 0.0
    %4346 = vmatprep.subr.mxu0 0.0
    %4347 = vmatpush1.msra.mxu0 0.0
    %4348 = vmatprep.subr.mxu0 0.0
    %4349 = vmatpush1.msra.mxu0 0.0
    %4350 = vmatprep.subr.mxu0 0.0
    %4351 = vmatpush1.msra.mxu0 0.0
    %4352 = vmatprep.subr.mxu0 0.0
    %4353 = vmatpush1.msra.mxu0 0.0
    %4354 = vmatprep.subr.mxu0 0.0
    %4355 = vmatpush1.msra.mxu0 0.0
    %4356 = vmatprep.subr.mxu0 0.0
    %4357 = vmatpush1.msra.mxu0 0.0
    %4358 = vmatprep.subr.mxu0 0.0
    %4359 = vmatpush1.msra.mxu0 0.0
    %4360 = vmatprep.subr.mxu0 0.0
    %4361 = vmatpush1.msra.mxu0 0.0
    %4362 = vmatprep.subr.mxu0 0.0
    %4363 = vmatpush1.msra.mxu0 0.0
    %4364 = vmatprep.subr.mxu0 0.0
    %4365 = vmatpush1.msra.mxu0 0.0
    %4366 = vmatprep.subr.mxu0 0.0
    %4367 = vmatpush1.msra.mxu0 0.0
    %4368 = vmatprep.subr.mxu0 0.0
    %4369 = vmatpush1.msra.mxu0 0.0
    %4370 = vmatprep.subr.mxu0 0.0
    %4371 = vmatpush1.msra.mxu0 0.0
    %4372 = vmatprep.subr.mxu0 0.0
    %4373 = vmatpush1.msra.mxu0 0.0
    %4374 = vmatprep.subr.mxu0 0.0
    %4375 = vmatpush1.msra.mxu0 0.0
    %4376 = vmatprep.subr.mxu0 0.0
    %4377 = vmatpush1.msra.mxu0 0.0
    %4378 = vmatprep.subr.mxu0 0.0
    %4379 = vmatpush1.msra.mxu0 0.0
    %4380 = vmatprep.subr.mxu0 0.0
    %4381 = vmatpush1.msra.mxu0 0.0
    %4382 = vmatprep.subr.mxu0 0.0
    %4383 = vmatpush1.msra.mxu0 0.0
    %4384 = vmatprep.subr.mxu0 0.0
    %4385 = vmatpush1.msra.mxu0 0.0
    %4386 = vmatprep.subr.mxu0 0.0
    %4387 = vmatpush1.msra.mxu0 0.0
    %4388 = vmatprep.subr.mxu0 0.0
    %4389 = vmatpush1.msra.mxu0 0.0
    %4390 = vmatprep.subr.mxu0 0.0
    %4391 = vmatpush1.msra.mxu0 0.0
    %4392 = vmatprep.subr.mxu0 0.0
    %4393 = vmatpush1.msra.mxu0 0.0
    %4394 = vmatprep.subr.mxu0 0.0
    %4395 = vmatpush1.msra.mxu0 0.0
    %4396 = vmatprep.subr.mxu0 0.0
    %4397 = vmatpush1.msra.mxu0 0.0
    %4398 = vmatprep.subr.mxu0 0.0
    %4399 = vmatpush1.msra.mxu0 0.0
    %4400 = vmatprep.subr.mxu0 0.0
    %4401 = vmatpush1.msra.mxu0 0.0
    %4402 = vmatprep.mubr.f32.mxu0 0.0
    %4403 = vmatmul.mubr.f32.gmra.mrb[0].mxu0 %v2714
    %v4404 = vpop.f32.mrb[0].mxu0
    %v4405 = vadd.f32 0.0, %v4404
    %v4406 = vpop.f32.mrb[0].mxu0
    %4407 = vmatprep.mubr.f32.mxu0 0.0
    %4408 = vmatmul.mubr.f32.gmra.mrb[0].mxu0 %v2717
    %v4409 = vpop.f32.mrb[0].mxu0
    %v4410 = vadd.f32 0.0, %v4409
    %v4411 = vpop.f32.mrb[0].mxu0
    %4412 = vmatprep.mubr.f32.mxu0 0.0
    %4413 = vmatmul.mubr.f32.gmra.mrb[0].mxu0 %v2720
    %v4414 = vpop.f32.mrb[0].mxu0
    %v4415 = vadd.f32 0.0, %v4414
    %v4416 = vpop.f32.mrb[0].mxu0
    %4417 = vmatprep.mubr.f32.mxu0 0.0
    %4418 = vmatmul.mubr.f32.gmra.mrb[0].mxu0 %v2723
    %v4419 = vpop.f32.mrb[0].mxu0
    %v4420 = vadd.f32 0.0, %v4419
    %v4421 = vpop.f32.mrb[0].mxu0
    %4422 = vmatprep.mubr.f32.mxu0 0.0
    %4423 = vmatmul.mubr.f32.gmra.mrb[0].mxu0 %v2726
    %v4424 = vpop.f32.mrb[0].mxu0
    %v4425 = vpop.f32.mrb[0].mxu0
    %4426 = vmatprep.mubr.f32.mxu0 0.0
    %4427 = vmatmul.mubr.f32.gmra.mrb[0].mxu0 %v2729
    %v4428 = vpop.f32.mrb[0].mxu0
    %v4429 = vadd.f32 0.0, %v4428
    %v4430 = vpop.f32.mrb[0].mxu0
    %4431 = vmatprep.mubr.f32.mxu0 0.0
    %4432 = vmatmul.mubr.f32.gmra.mrb[0].mxu0 %v2732
    %v4433 = vpop.f32.mrb[0].mxu0
    %v4434 = vadd.f32 0.0, %v4433
    %v4435 = vpop.f32.mrb[0].mxu0
    %4436 = vmatprep.mubr.f32.mxu0 0.0
    %4437 = vmatmul.mubr.f32.gmra.mrb[0].mxu0 %v2735
    %v4438 = vpop.f32.mrb[0].mxu0
    %v4439 = vadd.f32 0.0, %v4438
    %v4440 = vpop.f32.mrb[0].mxu0
    %4441 = vmatprep.mubr.f32.mxu0 0.0
    %4442 = vmatmul.mubr.f32.gmra.mrb[0].mxu0 %v2738
    %v4443 = vpop.f32.mrb[0].mxu0
    %v4444 = vadd.f32 0.0, %v4443
    %v4445 = vpop.f32.mrb[0].mxu0
    %4446 = vmatprep.mubr.f32.mxu0 0.0
    %4447 = vmatmul.mubr.f32.gmra.mrb[0].mxu0 %v2741
    %v4448 = vpop.f32.mrb[0].mxu0
    %v4449 = vpop.f32.mrb[0].mxu0
    %4450 = vmatprep.mubr.f32.mxu0 0.0
    %4451 = vmatmul.mubr.f32.gmra.mrb[0].mxu0 %v2744
    %v4452 = vpop.f32.mrb[0].mxu0
    %v4453 = vadd.f32 0.0, %v4452
    %v4454 = vpop.f32.mrb[0].mxu0
    %4455 = vmatprep.mubr.f32.mxu0 0.0
    %4456 = vmatmul.mubr.f32.gmra.mrb[0].mxu0 %v2747
    %v4457 = vpop.f32.mrb[0].mxu0
    %v4458 = vadd.f32 0.0, %v4457
    %v4459 = vpop.f32.mrb[0].mxu0
    %4460 = vmatprep.mubr.f32.mxu0 0.0
    %4461 = vmatmul.mubr.f32.gmra.mrb[0].mxu0 %v2750
    %v4462 = vpop.f32.mrb[0].mxu0
    %v4463 = vadd.f32 0.0, %v4462
    %v4464 = vpop.f32.mrb[0].mxu0
    %4465 = vmatprep.mubr.f32.mxu0 0.0
    %4466 = vmatmul.mubr.f32.gmra.mrb[0].mxu0 %v2753
    %v4467 = vpop.f32.mrb[0].mxu0
    %v4468 = vadd.f32 0.0, %v4467
    %v4469 = vpop.f32.mrb[0].mxu0
    %4470 = vmatprep.mubr.f32.mxu0 0.0
    %4471 = vmatmul.mubr.f32.gmra.mrb[0].mxu0 %v2756
    %v4472 = vpop.f32.mrb[0].mxu0
    %v4473 = vpop.f32.mrb[0].mxu0
    %4474 = vmatprep.mubr.f32.mxu0 0.0
    %4475 = vmatmul.mubr.f32.gmra.mrb[0].mxu0 %v3664
    %v4476 = vpop.f32.mrb[0].mxu0
    %v4477 = vadd.f32 0.0, %v4476
    %v4478 = vpop.f32.mrb[0].mxu0
    %4479 = vmatprep.mubr.f32.mxu0 0.0
    %4480 = vmatmul.mubr.f32.gmra.mrb[0].mxu0 %v3667
    %v4481 = vpop.f32.mrb[0].mxu0
    %v4482 = vadd.f32 0.0, %v4481
    %v4483 = vpop.f32.mrb[0].mxu0
    %4484 = vmatprep.mubr.f32.mxu0 0.0
    %4485 = vmatmul.mubr.f32.gmra.mrb[0].mxu0 %v3670
    %v4486 = vpop.f32.mrb[0].mxu0
    %v4487 = vadd.f32 0.0, %v4486
    %v4488 = vpop.f32.mrb[0].mxu0
    %4489 = vmatprep.mubr.f32.mxu0 0.0
    %4490 = vmatmul.mubr.f32.gmra.mrb[0].mxu0 %v3673
    %v4491 = vpop.f32.mrb[0].mxu0
    %v4492 = vadd.f32 0.0, %v4491
    %v4493 = vpop.f32.mrb[0].mxu0
    %4494 = vmatprep.mubr.f32.mxu0 0.0
    %4495 = vmatmul.mubr.f32.gmra.mrb[0].mxu0 %v3676
    %v4496 = vpop.f32.mrb[0].mxu0
    %v4497 = vpop.f32.mrb[0].mxu0
    %4498 = vmatprep.mubr.f32.mxu0 0.0
    %4499 = vmatmul.mubr.f32.gmra.mrb[0].mxu0 %v4324
    %v4500 = vpop.f32.mrb[0].mxu0
    %v4501 = vpop.f32.mrb[0].mxu0
    %4502 = vmatprep.mubr.f32.mxu0 0.0
    %4503 = vmatmul.mubr.f32.gmra.mrb[0].mxu0 %v4327
    %v4504 = vpop.f32.mrb[0].mxu0
    %v4505 = vpop.f32.mrb[0].mxu0
    %4506 = vmatprep.mubr.f32.mxu0 0.0
    %4507 = vmatmul.mubr.f32.gmra.mrb[0].mxu0 %v4330
    %v4508 = vpop.f32.mrb[0].mxu0
    %v4509 = vpop.f32.mrb[0].mxu0
    %4510 = vmatprep.mubr.f32.mxu0 0.0
    %4511 = vmatmul.mubr.f32.gmra.mrb[0].mxu0 %v4333
    %v4512 = vpop.f32.mrb[0].mxu0
    %v4513 = vpop.f32.mrb[0].mxu0
    %4514 = vmatprep.mubr.f32.mxu0 0.0
    %4515 = vmatmul.mubr.f32.gmra.mrb[0].mxu0 %v4336
    %v4516 = vpop.f32.mrb[0].mxu0
    %v4517 = vpop.f32.mrb[0].mxu0
    %4518 = vdwg.mxu0
    %v4519 = vadd.f32 %v4299, %v4405
    %v4520 = vadd.f32 %v4300, %v4410
    %v4521 = vadd.f32 %v4301, %v4415
    %v4522 = vadd.f32 %v4302, %v4420
    %v4523 = vadd.f32 %v4303, %v4429
    %v4524 = vadd.f32 %v4304, %v4434
    %v4525 = vadd.f32 %v4305, %v4439
    %v4526 = vadd.f32 %v4306, %v4444
    %v4527 = vadd.f32 %v4307, %v4453
    %v4528 = vadd.f32 %v4308, %v4458
    %v4529 = vadd.f32 %v4309, %v4463
    %v4530 = vadd.f32 %v4310, %v4468
    %v4531 = vadd.f32 %v4311, %v4477
    %v4532 = vadd.f32 %v4312, %v4482
    %v4533 = vadd.f32 %v4313, %v4487
    %v4534 = vadd.f32 %v4314, %v4492
    %v4535 = vld [vmem:[#allocation2 + $0x160] sm:$0xff]
    %v4536 = vld [vmem:[#allocation2 + $0x168] sm:$0xff]
    %v4537 = vld [vmem:[#allocation2 + $0x170] sm:$0xff]
    %v4538 = vld [vmem:[#allocation2 + $0x178] sm:$0xff]
    %v4539 = vld [vmem:[#allocation2 + $0x180] sm:$0xff]
    %s4540 = scalar_lea.vmem %s3, 128
    %v4541 = vld [vmem:[%s4540] sm:$0xff]
    %v4542 = vld [vmem:[%s4540 + $0x8] sm:$0xff]
    %v4544 = vsel %vm64, %v4535, 0
    %v4547 = vsel %vm64, %v4536, 0
    %v4550 = vsel %vm64, %v4537, 0
    %v4553 = vsel %vm64, %v4538, 0
    %v4556 = vsel %vm64, %v4539, 0
    %4558 = vmatprep.subr.mxu0 0.0
    %4559 = vmatpush1.msra.mxu0 %v4541
    %4560 = vmatprep.subr.mxu0 0.0
    %4561 = vmatpush1.msra.mxu0 %v4542
    %4562 = vmatprep.subr.mxu0 0.0
    %4563 = vmatpush1.msra.mxu0 0.0
    %4564 = vmatprep.subr.mxu0 0.0
    %4565 = vmatpush1.msra.mxu0 0.0
    %4566 = vmatprep.subr.mxu0 0.0
    %4567 = vmatpush1.msra.mxu0 0.0
    %4568 = vmatprep.subr.mxu0 0.0
    %4569 = vmatpush1.msra.mxu0 0.0
    %4570 = vmatprep.subr.mxu0 0.0
    %4571 = vmatpush1.msra.mxu0 0.0
    %4572 = vmatprep.subr.mxu0 0.0
    %4573 = vmatpush1.msra.mxu0 0.0
    %4574 = vmatprep.subr.mxu0 0.0
    %4575 = vmatpush1.msra.mxu0 0.0
    %4576 = vmatprep.subr.mxu0 0.0
    %4577 = vmatpush1.msra.mxu0 0.0
    %4578 = vmatprep.subr.mxu0 0.0
    %4579 = vmatpush1.msra.mxu0 0.0
    %4580 = vmatprep.subr.mxu0 0.0
    %4581 = vmatpush1.msra.mxu0 0.0
    %4582 = vmatprep.subr.mxu0 0.0
    %4583 = vmatpush1.msra.mxu0 0.0
    %4584 = vmatprep.subr.mxu0 0.0
    %4585 = vmatpush1.msra.mxu0 0.0
    %4586 = vmatprep.subr.mxu0 0.0
    %4587 = vmatpush1.msra.mxu0 0.0
    %4588 = vmatprep.subr.mxu0 0.0
    %4589 = vmatpush1.msra.mxu0 0.0
    %4590 = vmatprep.subr.mxu0 0.0
    %4591 = vmatpush1.msra.mxu0 0.0
    %4592 = vmatprep.subr.mxu0 0.0
    %4593 = vmatpush1.msra.mxu0 0.0
    %4594 = vmatprep.subr.mxu0 0.0
    %4595 = vmatpush1.msra.mxu0 0.0
    %4596 = vmatprep.subr.mxu0 0.0
    %4597 = vmatpush1.msra.mxu0 0.0
    %4598 = vmatprep.subr.mxu0 0.0
    %4599 = vmatpush1.msra.mxu0 0.0
    %4600 = vmatprep.subr.mxu0 0.0
    %4601 = vmatpush1.msra.mxu0 0.0
    %4602 = vmatprep.subr.mxu0 0.0
    %4603 = vmatpush1.msra.mxu0 0.0
    %4604 = vmatprep.subr.mxu0 0.0
    %4605 = vmatpush1.msra.mxu0 0.0
    %4606 = vmatprep.subr.mxu0 0.0
    %4607 = vmatpush1.msra.mxu0 0.0
    %4608 = vmatprep.subr.mxu0 0.0
    %4609 = vmatpush1.msra.mxu0 0.0
    %4610 = vmatprep.subr.mxu0 0.0
    %4611 = vmatpush1.msra.mxu0 0.0
    %4612 = vmatprep.subr.mxu0 0.0
    %4613 = vmatpush1.msra.mxu0 0.0
    %4614 = vmatprep.subr.mxu0 0.0
    %4615 = vmatpush1.msra.mxu0 0.0
    %4616 = vmatprep.subr.mxu0 0.0
    %4617 = vmatpush1.msra.mxu0 0.0
    %4618 = vmatprep.subr.mxu0 0.0
    %4619 = vmatpush1.msra.mxu0 0.0
    %4620 = vmatprep.subr.mxu0 0.0
    %4621 = vmatpush1.msra.mxu0 0.0
    %4622 = vmatprep.mubr.f32.mxu0 0.0
    %4623 = vmatmul.mubr.f32.gmra.mrb[0].mxu0 %v3194
    %v4624 = vpop.f32.mrb[0].mxu0
    %v4625 = vadd.f32 0.0, %v4624
    %v4626 = vpop.f32.mrb[0].mxu0
    %4627 = vmatprep.mubr.f32.mxu0 0.0
    %4628 = vmatmul.mubr.f32.gmra.mrb[0].mxu0 %v3197
    %v4629 = vpop.f32.mrb[0].mxu0
    %v4630 = vadd.f32 0.0, %v4629
    %v4631 = vpop.f32.mrb[0].mxu0
    %4632 = vmatprep.mubr.f32.mxu0 0.0
    %4633 = vmatmul.mubr.f32.gmra.mrb[0].mxu0 %v3200
    %v4634 = vpop.f32.mrb[0].mxu0
    %v4635 = vadd.f32 0.0, %v4634
    %v4636 = vpop.f32.mrb[0].mxu0
    %4637 = vmatprep.mubr.f32.mxu0 0.0
    %4638 = vmatmul.mubr.f32.gmra.mrb[0].mxu0 %v3203
    %v4639 = vpop.f32.mrb[0].mxu0
    %v4640 = vadd.f32 0.0, %v4639
    %v4641 = vpop.f32.mrb[0].mxu0
    %4642 = vmatprep.mubr.f32.mxu0 0.0
    %4643 = vmatmul.mubr.f32.gmra.mrb[0].mxu0 %v3206
    %v4644 = vpop.f32.mrb[0].mxu0
    %v4645 = vpop.f32.mrb[0].mxu0
    %4646 = vmatprep.mubr.f32.mxu0 0.0
    %4647 = vmatmul.mubr.f32.gmra.mrb[0].mxu0 %v3209
    %v4648 = vpop.f32.mrb[0].mxu0
    %v4649 = vadd.f32 0.0, %v4648
    %v4650 = vpop.f32.mrb[0].mxu0
    %4651 = vmatprep.mubr.f32.mxu0 0.0
    %4652 = vmatmul.mubr.f32.gmra.mrb[0].mxu0 %v3212
    %v4653 = vpop.f32.mrb[0].mxu0
    %v4654 = vadd.f32 0.0, %v4653
    %v4655 = vpop.f32.mrb[0].mxu0
    %4656 = vmatprep.mubr.f32.mxu0 0.0
    %4657 = vmatmul.mubr.f32.gmra.mrb[0].mxu0 %v3215
    %v4658 = vpop.f32.mrb[0].mxu0
    %v4659 = vadd.f32 0.0, %v4658
    %v4660 = vpop.f32.mrb[0].mxu0
    %4661 = vmatprep.mubr.f32.mxu0 0.0
    %4662 = vmatmul.mubr.f32.gmra.mrb[0].mxu0 %v3218
    %v4663 = vpop.f32.mrb[0].mxu0
    %v4664 = vadd.f32 0.0, %v4663
    %v4665 = vpop.f32.mrb[0].mxu0
    %4666 = vmatprep.mubr.f32.mxu0 0.0
    %4667 = vmatmul.mubr.f32.gmra.mrb[0].mxu0 %v3221
    %v4668 = vpop.f32.mrb[0].mxu0
    %v4669 = vpop.f32.mrb[0].mxu0
    %4670 = vmatprep.mubr.f32.mxu0 0.0
    %4671 = vmatmul.mubr.f32.gmra.mrb[0].mxu0 %v3224
    %v4672 = vpop.f32.mrb[0].mxu0
    %v4673 = vadd.f32 0.0, %v4672
    %v4674 = vpop.f32.mrb[0].mxu0
    %4675 = vmatprep.mubr.f32.mxu0 0.0
    %4676 = vmatmul.mubr.f32.gmra.mrb[0].mxu0 %v3227
    %v4677 = vpop.f32.mrb[0].mxu0
    %v4678 = vadd.f32 0.0, %v4677
    %v4679 = vpop.f32.mrb[0].mxu0
    %4680 = vmatprep.mubr.f32.mxu0 0.0
    %4681 = vmatmul.mubr.f32.gmra.mrb[0].mxu0 %v3230
    %v4682 = vpop.f32.mrb[0].mxu0
    %v4683 = vadd.f32 0.0, %v4682
    %v4684 = vpop.f32.mrb[0].mxu0
    %4685 = vmatprep.mubr.f32.mxu0 0.0
    %4686 = vmatmul.mubr.f32.gmra.mrb[0].mxu0 %v3233
    %v4687 = vpop.f32.mrb[0].mxu0
    %v4688 = vadd.f32 0.0, %v4687
    %v4689 = vpop.f32.mrb[0].mxu0
    %4690 = vmatprep.mubr.f32.mxu0 0.0
    %4691 = vmatmul.mubr.f32.gmra.mrb[0].mxu0 %v3236
    %v4692 = vpop.f32.mrb[0].mxu0
    %v4693 = vpop.f32.mrb[0].mxu0
    %4694 = vmatprep.mubr.f32.mxu0 0.0
    %4695 = vmatmul.mubr.f32.gmra.mrb[0].mxu0 %v3884
    %v4696 = vpop.f32.mrb[0].mxu0
    %v4697 = vadd.f32 0.0, %v4696
    %v4698 = vpop.f32.mrb[0].mxu0
    %4699 = vmatprep.mubr.f32.mxu0 0.0
    %4700 = vmatmul.mubr.f32.gmra.mrb[0].mxu0 %v3887
    %v4701 = vpop.f32.mrb[0].mxu0
    %v4702 = vadd.f32 0.0, %v4701
    %v4703 = vpop.f32.mrb[0].mxu0
    %4704 = vmatprep.mubr.f32.mxu0 0.0
    %4705 = vmatmul.mubr.f32.gmra.mrb[0].mxu0 %v3890
    %v4706 = vpop.f32.mrb[0].mxu0
    %v4707 = vadd.f32 0.0, %v4706
    %v4708 = vpop.f32.mrb[0].mxu0
    %4709 = vmatprep.mubr.f32.mxu0 0.0
    %4710 = vmatmul.mubr.f32.gmra.mrb[0].mxu0 %v3893
    %v4711 = vpop.f32.mrb[0].mxu0
    %v4712 = vadd.f32 0.0, %v4711
    %v4713 = vpop.f32.mrb[0].mxu0
    %4714 = vmatprep.mubr.f32.mxu0 0.0
    %4715 = vmatmul.mubr.f32.gmra.mrb[0].mxu0 %v3896
    %v4716 = vpop.f32.mrb[0].mxu0
    %v4717 = vpop.f32.mrb[0].mxu0
    %4718 = vmatprep.mubr.f32.mxu0 0.0
    %4719 = vmatmul.mubr.f32.gmra.mrb[0].mxu0 %v4544
    %v4720 = vpop.f32.mrb[0].mxu0
    %v4721 = vpop.f32.mrb[0].mxu0
    %4722 = vmatprep.mubr.f32.mxu0 0.0
    %4723 = vmatmul.mubr.f32.gmra.mrb[0].mxu0 %v4547
    %v4724 = vpop.f32.mrb[0].mxu0
    %v4725 = vpop.f32.mrb[0].mxu0
    %4726 = vmatprep.mubr.f32.mxu0 0.0
    %4727 = vmatmul.mubr.f32.gmra.mrb[0].mxu0 %v4550
    %v4728 = vpop.f32.mrb[0].mxu0
    %v4729 = vpop.f32.mrb[0].mxu0
    %4730 = vmatprep.mubr.f32.mxu0 0.0
    %4731 = vmatmul.mubr.f32.gmra.mrb[0].mxu0 %v4553
    %v4732 = vpop.f32.mrb[0].mxu0
    %v4733 = vpop.f32.mrb[0].mxu0
    %4734 = vmatprep.mubr.f32.mxu0 0.0
    %4735 = vmatmul.mubr.f32.gmra.mrb[0].mxu0 %v4556
    %v4736 = vpop.f32.mrb[0].mxu0
    %v4737 = vpop.f32.mrb[0].mxu0
    %4738 = vdwg.mxu0
    %v4739 = vadd.f32 %v4519, %v4625
    %v4740 = vadd.f32 %v4520, %v4630
    %v4741 = vadd.f32 %v4521, %v4635
    %v4742 = vadd.f32 %v4522, %v4640
    %v4743 = vadd.f32 %v4523, %v4649
    %v4744 = vadd.f32 %v4524, %v4654
    %v4745 = vadd.f32 %v4525, %v4659
    %v4746 = vadd.f32 %v4526, %v4664
    %v4747 = vadd.f32 %v4527, %v4673
    %v4748 = vadd.f32 %v4528, %v4678
    %v4749 = vadd.f32 %v4529, %v4683
    %v4750 = vadd.f32 %v4530, %v4688
    %v4751 = vadd.f32 %v4531, %v4697
    %v4752 = vadd.f32 %v4532, %v4702
    %v4753 = vadd.f32 %v4533, %v4707
    %v4754 = vadd.f32 %v4534, %v4712
    %v4755 = vld [vmem:[%s4] sm:$0x1]
    %v4757 = vlaneseq
    %v4758 = vshrl.u32 %v4757, 7
    %v4759 = vsub.s32 0, %v4758
    %v4760 = vrot.slane %v4755, %v4759
    %v4762 = vadd.f32 %v4739, %v4760
    %v4763 = vadd.f32 %v4740, %v4760
    %v4764 = vadd.f32 %v4741, %v4760
    %v4765 = vadd.f32 %v4742, %v4760
    %v4766 = vadd.f32 %v4743, %v4760
    %v4767 = vadd.f32 %v4744, %v4760
    %v4768 = vadd.f32 %v4745, %v4760
    %v4769 = vadd.f32 %v4746, %v4760
    %v4770 = vadd.f32 %v4747, %v4760
    %v4771 = vadd.f32 %v4748, %v4760
    %v4772 = vadd.f32 %v4749, %v4760
    %v4773 = vadd.f32 %v4750, %v4760
    %v4774 = vadd.f32 %v4751, %v4760
    %v4775 = vadd.f32 %v4752, %v4760
    %v4776 = vadd.f32 %v4753, %v4760
    %v4777 = vadd.f32 %v4754, %v4760
    %v4778 = vmax.f32 %v4762, 0.0
    %v4779 = vmax.f32 %v4763, 0.0
    %v4780 = vmax.f32 %v4764, 0.0
    %v4781 = vmax.f32 %v4765, 0.0
    %v4782 = vmax.f32 %v4766, 0.0
    %v4783 = vmax.f32 %v4767, 0.0
    %v4784 = vmax.f32 %v4768, 0.0
    %v4785 = vmax.f32 %v4769, 0.0
    %v4786 = vmax.f32 %v4770, 0.0
    %v4787 = vmax.f32 %v4771, 0.0
    %v4788 = vmax.f32 %v4772, 0.0
    %v4789 = vmax.f32 %v4773, 0.0
    %v4790 = vmax.f32 %v4774, 0.0
    %v4791 = vmax.f32 %v4775, 0.0
    %v4792 = vmax.f32 %v4776, 0.0
    %v4793 = vmax.f32 %v4777, 0.0
    %v4794 = vmax.f32 %v4778, %v4779
    %v4795 = vmax.f32 %v4782, %v4783
    %v4796 = vmax.f32 %v4794, %v4795
    %v4797 = vadd.f32 %v4796, 0.0
    %v4798 = vmax.f32 %v4780, %v4781
    %v4799 = vmax.f32 %v4784, %v4785
    %v4800 = vmax.f32 %v4798, %v4799
    %v4801 = vadd.f32 %v4797, %v4800
    %v4802 = vmax.f32 %v4786, %v4787
    %v4803 = vmax.f32 %v4790, %v4791
    %v4804 = vmax.f32 %v4802, %v4803
    %v4805 = vadd.f32 %v4801, %v4804
    %v4806 = vmax.f32 %v4788, %v4789
    %v4807 = vmax.f32 %v4792, %v4793
    %v4808 = vmax.f32 %v4806, %v4807
    %v4809 = vadd.f32 %v4805, %v4808
    %v4810 = vmul.f32 %v4809, 0.25
    %v4811 = vld [vmem:[%s5] sm:$0xff]
    %v4812 = vld [vmem:[%s5 + $0x8] sm:$0xff]
    %v4813 = vld [vmem:[%s5 + $0x10] sm:$0xff]
    %v4814 = vld [vmem:[%s5 + $0x18] sm:$0xff]
    %v4815 = vld [vmem:[%s6] sm:$0x1]
    %v4817 = vlaneseq
    %v4818 = vshrl.u32 %v4817, 7
    %v4819 = vsub.s32 0, %v4818
    %v4820 = vrot.slane %v4815, %v4819
    %vm4822 = vcmask 261120
    %v4824 = vsel %vm4822, %v4810, 0
    %4826 = vmatprep.subr.mxu0 0.0
    %4827 = vmatpush1.msra.mxu0 %v4811
    %4828 = vmatprep.subr.mxu0 0.0
    %4829 = vmatpush1.msra.mxu0 %v4812
    %4830 = vmatprep.subr.mxu0 0.0
    %4831 = vmatpush1.msra.mxu0 %v4813
    %4832 = vmatprep.subr.mxu0 0.0
    %4833 = vmatpush1.msra.mxu0 %v4814
    %4834 = vmatprep.subr.mxu0 0.0
    %4835 = vmatpush1.msra.mxu0 0.0
    %4836 = vmatprep.subr.mxu0 0.0
    %4837 = vmatpush1.msra.mxu0 0.0
    %4838 = vmatprep.subr.mxu0 0.0
    %4839 = vmatpush1.msra.mxu0 0.0
    %4840 = vmatprep.subr.mxu0 0.0
    %4841 = vmatpush1.msra.mxu0 0.0
    %4842 = vmatprep.subr.mxu0 0.0
    %4843 = vmatpush1.msra.mxu0 0.0
    %4844 = vmatprep.subr.mxu0 0.0
    %4845 = vmatpush1.msra.mxu0 0.0
    %4846 = vmatprep.subr.mxu0 0.0
    %4847 = vmatpush1.msra.mxu0 0.0
    %4848 = vmatprep.subr.mxu0 0.0
    %4849 = vmatpush1.msra.mxu0 0.0
    %4850 = vmatprep.subr.mxu0 0.0
    %4851 = vmatpush1.msra.mxu0 0.0
    %4852 = vmatprep.subr.mxu0 0.0
    %4853 = vmatpush1.msra.mxu0 0.0
    %4854 = vmatprep.subr.mxu0 0.0
    %4855 = vmatpush1.msra.mxu0 0.0
    %4856 = vmatprep.subr.mxu0 0.0
    %4857 = vmatpush1.msra.mxu0 0.0
    %4858 = vmatprep.subr.mxu0 0.0
    %4859 = vmatpush1.msra.mxu0 0.0
    %4860 = vmatprep.subr.mxu0 0.0
    %4861 = vmatpush1.msra.mxu0 0.0
    %4862 = vmatprep.subr.mxu0 0.0
    %4863 = vmatpush1.msra.mxu0 0.0
    %4864 = vmatprep.subr.mxu0 0.0
    %4865 = vmatpush1.msra.mxu0 0.0
    %4866 = vmatprep.subr.mxu0 0.0
    %4867 = vmatpush1.msra.mxu0 0.0
    %4868 = vmatprep.subr.mxu0 0.0
    %4869 = vmatpush1.msra.mxu0 0.0
    %4870 = vmatprep.subr.mxu0 0.0
    %4871 = vmatpush1.msra.mxu0 0.0
    %4872 = vmatprep.subr.mxu0 0.0
    %4873 = vmatpush1.msra.mxu0 0.0
    %4874 = vmatprep.subr.mxu0 0.0
    %4875 = vmatpush1.msra.mxu0 0.0
    %4876 = vmatprep.subr.mxu0 0.0
    %4877 = vmatpush1.msra.mxu0 0.0
    %4878 = vmatprep.subr.mxu0 0.0
    %4879 = vmatpush1.msra.mxu0 0.0
    %4880 = vmatprep.subr.mxu0 0.0
    %4881 = vmatpush1.msra.mxu0 0.0
    %4882 = vmatprep.subr.mxu0 0.0
    %4883 = vmatpush1.msra.mxu0 0.0
    %4884 = vmatprep.subr.mxu0 0.0
    %4885 = vmatpush1.msra.mxu0 0.0
    %4886 = vmatprep.subr.mxu0 0.0
    %4887 = vmatpush1.msra.mxu0 0.0
    %4888 = vmatprep.subr.mxu0 0.0
    %4889 = vmatpush1.msra.mxu0 0.0
    %4890 = vmatprep.mubr.f32.mxu0 0.0
    %4891 = vmatmul.mubr.f32.gmra.mrb[0].mxu0 %v4824
    %v4892 = vpop.f32.mrb[0].mxu0
    %v4893 = vadd.f32 %v4820, %v4892
    %v4894 = vpop.f32.mrb[0].mxu0
    %4895 = vdwg.mxu0
    %v4896 = vsub.f32 0.0, %v4893
    %v4897 = vmul.f32 %v4896, 1.442695
    %v4898 = vpow.pop %v4897
    %v4899 = vadd.f32 %v4898, 1.0
    %v4900 = vrcp.pop %v4899
    %v4901 = vmul.f32 1.0, %v4900
    %4902 = vst [vmem:[#allocation3] sm:$0xff] %v4901
    // Predicated region
    $region30: #{tpu_custom_call.1} parent=1 // pred_check
      _
    $region31: #{tpu_custom_call.1} parent=1 // pred_check_branch
      %4904 = sbr.rel (0) target = $region33
    $region32: #{tpu_custom_call.1} parent=1 // pred_region
      %s4906 = ssub.s32 128, 128
      %4907 = vsyncadd [#allocation4], %s4906
      %s4909 = sshll.u32 [#allocation3], 4
      %s4910 = int_to_ptr.vmem [resolvable:$true] %s4909
      %4912 = dma.vmem_to_hbm [thread:$0]  %s4910, 128, %s7, [#allocation4]
    $region33: #{tpu_custom_call.1} parent=1 // pred_fallthru
      _
    // Predicated region
    $region34: #{tpu_custom_call.1} parent=1 // pred_check
      _
    $region35: #{tpu_custom_call.1} parent=1 // pred_check_branch
      %4914 = sbr.rel (0) target = $region37
    $region36: #{tpu_custom_call.1} parent=1 // pred_region
      %4915 = dma.done [#allocation4], 128
    $region37: #{tpu_custom_call.1} parent=1 // pred_fallthru
      _
    %4916 = vsyncpa [#allocation4], 1

</llo_original>
